<compile_context>
chip_gen: v5e
topology: v5e:2x2
jax: 0.10.0
libtpu: 0.0.40
codegen_flags: <defaults>
</compile_context>

<pallas_src>
import functools

import jax
import jax.numpy as jnp
from jax import lax
from jax.experimental import pallas as pl
from jax.experimental.pallas import tpu as pltpu


# ----------------------------------------------------------------------------
# Pallas kernels
# ----------------------------------------------------------------------------
def _conv1x1_kernel(w_ref, b_ref, x_ref, o_ref, *, act):
    # w: [Cout, Cin] bf16 (BN scale pre-folded)  b: [Cout, 1] f32
    # x: [Cin, TL]  o: [Cout, TL]
    x = x_ref[...].astype(jnp.bfloat16)
    y = jnp.dot(w_ref[...], x, preferred_element_type=jnp.float32)
    y = y + b_ref[...]
    if act == "relu":
        y = jnp.maximum(y, 0.0)
    elif act == "leaky":                       # LeakyReLU(0.1)
        y = jnp.where(y > 0, y, 0.1 * y)
    o_ref[...] = y.astype(o_ref.dtype)


def conv1x1(x, w, b, act="relu", tl=512):
    """x: [B, Cin, L] -> [B, Cout, L] bf16 ; 1x1 conv + folded BN + activation.

    Grid = (B, L-tiles); TL is a multiple of 128 (or the full L when small) so
    DMA/compute double-buffer and VMEM usage stays bounded at real PVCNN sizes."""
    B, Cin, L = x.shape
    Cout = w.shape[0]
    TL = L if L <= tl else tl
    nl = pl.cdiv(L, TL)
    return pl.pallas_call(
        functools.partial(_conv1x1_kernel, act=act),
        out_shape=jax.ShapeDtypeStruct((B, Cout, L), jnp.bfloat16),
        grid=(B, nl),
        in_specs=[
            pl.BlockSpec((Cout, Cin), lambda i, l: (0, 0)),
            pl.BlockSpec((Cout, 1), lambda i, l: (0, 0)),
            pl.BlockSpec((None, Cin, TL), lambda i, l: (i, 0, l)),
        ],
        out_specs=pl.BlockSpec((None, Cout, TL), lambda i, l: (i, 0, l)),
        compiler_params=pltpu.CompilerParams(
            dimension_semantics=("parallel", "parallel")),
    )(w, b, x)


def _voxconv_kernel(w_ref, b_ref, x_ref, o_ref, *, P, halo):
    # 3x3x3 conv (padding=1) + folded BN + LeakyReLU(0.1), computed on the padded grid.
    # w: [27, Cout, Cin] bf16   b: [Cout, 1] f32
    # x: [Cin, P^3 + 2*halo] bf16 (halo-padded flat volume)   o: [Cout, P^3]
    L = P * P * P
    acc = jnp.zeros(o_ref.shape, jnp.float32)
    tap = 0
    for kd in (-1, 0, 1):
        for kh in (-1, 0, 1):
            for kw in (-1, 0, 1):
                off = halo + kd * P * P + kh * P + kw
                win = x_ref[:, off:off + L]                       # shifted lane slice, no im2col
                acc = acc + jnp.dot(w_ref[tap], win,
                                    preferred_element_type=jnp.float32)
                tap += 1
    y = acc + b_ref[...]
    y = jnp.where(y > 0, y, 0.1 * y)
    o_ref[...] = y.astype(o_ref.dtype)


def voxconv(x, w, b, R):
    """x: [B, Cin, R^3] -> [B, Cout, R^3] bf16.  Conv3d(3x3x3, pad=1) + BN + LeakyReLU(0.1).

    Instead of a 27x im2col HBM blow-up, the padded voxel volume is flattened with a halo
    and the 27 taps are accumulated in-kernel from shifted lane windows."""
    B, Cin, _ = x.shape
    Cout = w.shape[1]
    P = R + 2
    halo = P * P + P + 1
    L = P ** 3
    xp = jnp.pad(x.reshape(B, Cin, R, R, R).astype(jnp.bfloat16),
                 ((0, 0), (0, 0), (1, 1), (1, 1), (1, 1))).reshape(B, Cin, L)
    xp = jnp.pad(xp, ((0, 0), (0, 0), (halo, halo)))
    Lp = L + 2 * halo
    yp = pl.pallas_call(
        functools.partial(_voxconv_kernel, P=P, halo=halo),
        out_shape=jax.ShapeDtypeStruct((B, Cout, L), jnp.bfloat16),
        grid=(B,),
        in_specs=[
            pl.BlockSpec((27, Cout, Cin), lambda i: (0, 0, 0)),
            pl.BlockSpec((Cout, 1), lambda i: (0, 0)),
            pl.BlockSpec((None, Cin, Lp), lambda i: (i, 0, 0)),
        ],
        out_specs=pl.BlockSpec((None, Cout, L), lambda i: (i, 0, 0)),
        compiler_params=pltpu.CompilerParams(dimension_semantics=("parallel",)),
    )(w, b, xp)
    # crop padded output positions back to the valid R^3 grid
    y = yp.reshape(B, Cout, P, P, P)[:, :, 1:R + 1, 1:R + 1, 1:R + 1]
    return y.reshape(B, Cout, R ** 3)


def _sa_mlp_max_kernel(*refs, n_layers, K, M):
    # refs: w0,b0, w1,b1, ..., x_ref, o_ref
    # x: [Cin, K*M] (M minor)  ->  chained matmuls in VMEM  ->  max over K  ->  o: [Cout, M]
    x_ref = refs[2 * n_layers]
    o_ref = refs[2 * n_layers + 1]
    h = x_ref[...].astype(jnp.bfloat16)
    y = None
    for i in range(n_layers):
        w = refs[2 * i][...]
        b = refs[2 * i + 1][...]
        y = jnp.dot(w, h, preferred_element_type=jnp.float32)
        y = jnp.maximum(y + b, 0.0)
        if i + 1 < n_layers:
            h = y.astype(jnp.bfloat16)
    acc = y[:, :M]
    for k in range(1, K):                       # VPU max over neighbor slices (M stays lanes)
        acc = jnp.maximum(acc, y[:, k * M:(k + 1) * M])
    o_ref[...] = acc.astype(o_ref.dtype)


def sa_mlp_max(x, mlp, K, M):
    """x: [B, Cin, K*M] (M minor) -> [B, Cout, M] bf16.
    Fused SharedMLP stack (all layers) + max over neighbors in one pallas_call."""
    B, Cin, KM = x.shape
    n_layers = len(mlp)
    Cout = mlp[-1][0].shape[0]
    args, in_specs = [], []
    for (w, b) in mlp:
        args += [w, b]
        in_specs += [pl.BlockSpec(w.shape, lambda i: (0, 0)),
                     pl.BlockSpec(b.shape, lambda i: (0, 0))]
    args.append(x)
    in_specs.append(pl.BlockSpec((None, Cin, KM), lambda i: (i, 0, 0)))
    return pl.pallas_call(
        functools.partial(_sa_mlp_max_kernel, n_layers=n_layers, K=K, M=M),
        out_shape=jax.ShapeDtypeStruct((B, Cout, M), jnp.bfloat16),
        grid=(B,),
        in_specs=in_specs,
        out_specs=pl.BlockSpec((None, Cout, M), lambda i: (i, 0, 0)),
        compiler_params=pltpu.CompilerParams(dimension_semantics=("parallel",)),
    )(*args)


# ----------------------------------------------------------------------------
# JAX glue: voxelization / devoxelization / FPS / ball query / grouping
# ----------------------------------------------------------------------------
def avg_voxelize(features, coords, R):
    """features [B,C,N], coords [B,3,N] -> voxel feats [B,C,R^3] f32, norm_coords [B,3,N]."""
    f = features.astype(jnp.float32)
    nc = coords - coords.mean(axis=2, keepdims=True)
    denom = jnp.linalg.norm(nc, axis=1, keepdims=True).max(axis=2, keepdims=True) * 2.0
    nc = nc / denom + 0.5
    nc = jnp.clip(nc * R, 0.0, R - 1)
    vox = jnp.round(nc).astype(jnp.int32)
    vidx = vox[:, 0] * R * R + vox[:, 1] * R + vox[:, 2]          # [B, N]

    def one(feat, vi):
        cnt = jnp.zeros((R ** 3,), jnp.float32).at[vi].add(1.0)
        acc = jnp.zeros((feat.shape[0], R ** 3), jnp.float32).at[:, vi].add(feat)
        return acc / jnp.maximum(cnt, 1.0)[None, :]

    return jax.vmap(one)(f, vidx), nc


def trilinear_devoxelize(voxf, nc, R):
    """voxf [B,C,R^3], nc [B,3,N] (floats in [0,R-1]) -> [B,C,N] f32."""
    B, C, _ = voxf.shape
    N = nc.shape[2]
    lo = jnp.floor(nc)
    d = nc - lo
    i0 = lo.astype(jnp.int32)
    i1 = jnp.minimum(i0 + 1, R - 1)
    out = jnp.zeros((B, C, N), jnp.float32)
    for dx in (0, 1):
        for dy in (0, 1):
            for dz in (0, 1):
                xi = i1[:, 0] if dx else i0[:, 0]
                yi = i1[:, 1] if dy else i0[:, 1]
                zi = i1[:, 2] if dz else i0[:, 2]
                w = ((d[:, 0] if dx else 1.0 - d[:, 0]) *
                     (d[:, 1] if dy else 1.0 - d[:, 1]) *
                     (d[:, 2] if dz else 1.0 - d[:, 2]))
                idx = xi * R * R + yi * R + zi
                g = jnp.take_along_axis(
                    voxf, jnp.broadcast_to(idx[:, None, :], (B, C, N)), axis=2)
                out = out + g.astype(jnp.float32) * w[:, None, :]
    return out


def furthest_point_sample(coords, M):
    """coords [B,3,N] -> center coords [B,3,M] (starts from index 0, like CUDA FPS)."""
    def one(c):
        N = c.shape[1]

        def body(i, carry):
            dists, idxs, last = carry
            lastc = lax.dynamic_slice(c, (jnp.int32(0), last), (3, 1))
            d = jnp.sum((c - lastc) ** 2, axis=0)
            dists = jnp.minimum(dists, d)
            nxt = jnp.argmax(dists).astype(jnp.int32)
            return dists, idxs.at[i].set(nxt), nxt

        dists0 = jnp.full((N,), 1e10, jnp.float32)
        idxs0 = jnp.zeros((M,), jnp.int32)
        _, idxs, _ = lax.fori_loop(1, M, body, (dists0, idxs0, jnp.int32(0)))
        return jnp.take(c, idxs, axis=1)

    return jax.vmap(one)(coords)


def ball_query(points, centers, radius, K):
    """points [B,3,N], centers [B,3,M] -> indices [B,M,K] (first K in-radius, padded)."""
    def one(p, c):
        N = p.shape[1]
        d2 = jnp.sum((c[:, :, None] - p[:, None, :]) ** 2, axis=0)  # [M,N]
        in_ball = d2 < radius * radius
        ar = jnp.arange(N, dtype=jnp.int32)
        masked = jnp.where(in_ball, ar[None, :], N)
        firstK = jnp.sort(masked, axis=1)[:, :K]
        first = firstK[:, :1]
        first = jnp.where(first >= N, 0, first)
        return jnp.where(firstK >= N, first, firstK).astype(jnp.int32)

    return jax.vmap(one)(points, centers)


def group(points, idx):
    """points [B,C,N], idx [B,K,M] -> [B,C,K,M]."""
    return jax.vmap(lambda p, i: p[:, i])(points, idx)


# ----------------------------------------------------------------------------
# Module forward (PVConv blocks + PointNet SA modules)
# ----------------------------------------------------------------------------
def pvconv_forward(p, features, coords):
    R = p["resolution"]
    voxf, nc = avg_voxelize(features, coords, R)                   # [B,C,R^3] f32
    # voxel branch: Conv3d+BN+LeakyReLU x2 (in-kernel 27-tap accumulation), then SE3d
    x = voxconv(voxf, p["vw1"], p["vb1"], R)                       # bf16
    x = voxconv(x, p["vw2"], p["vb2"], R)                          # bf16
    g = jnp.mean(x.astype(jnp.float32), axis=-1)                   # SE3d (tiny, plain JAX)
    h = jnp.maximum(g @ p["se_w1"].T + p["se_b1"], 0.0)
    gate = jax.nn.sigmoid(h @ p["se_w2"].T + p["se_b2"])
    x = x * gate[:, :, None].astype(x.dtype)
    vox_point = trilinear_devoxelize(x, nc, R)                     # [B,Cout,N] f32
    # point branch: SharedMLP (Conv1d+BN+ReLU) in Pallas
    point = conv1x1(features, p["pw"], p["pb"], act="relu")        # bf16
    return vox_point.astype(jnp.bfloat16) + point, coords


def sa_module_forward(p, features, coords):
    M, K = p["num_centers"], p["num_neighbors"]
    centers = furthest_point_sample(coords, M)                     # [B,3,M]
    idx = ball_query(coords, centers, p["radius"], K)              # [B,M,K]
    idxT = jnp.transpose(idx, (0, 2, 1))                           # [B,K,M]
    nbr_coords = group(coords, idxT) - centers[:, :, None, :]      # [B,3,K,M]
    nbr_feats = group(features, idxT)                              # [B,C,K,M]
    g = jnp.concatenate([nbr_coords.astype(jnp.bfloat16),
                         nbr_feats.astype(jnp.bfloat16)], axis=1)  # [B,3+C,K,M]
    B, C0 = g.shape[0], g.shape[1]
    x = g.reshape(B, C0, K * M)                                    # M is the minor/lane dim
    out = sa_mlp_max(x, p["mlp"], K=K, M=M)                        # fused MLP stack + max
    return out, centers


def pvcnn2_sa_forward(params, inputs):
    coords = inputs[:, :3, :]
    features = inputs
    coords_list, in_features_list = [], []
    for layer in params:
        in_features_list.append(features)
        coords_list.append(coords)
        for blk in layer["conv_blocks"]:
            features, coords = pvconv_forward(blk, features, coords)
        features, coords = sa_module_forward(layer["sa"], features, coords)
    in_features_list[0] = inputs[:, 3:, :]
    return coords_list, coords, features, in_features_list


# ----------------------------------------------------------------------------
# Deterministic parameter construction (mirrors create_pointnet2_sa_components)
# BatchNorm (eval mode) is folded: scale into the weight (bf16), bias kept in f32.
# ----------------------------------------------------------------------------
def _conv_bn(key, cout, cin, eps=1e-5):
    ks = jax.random.split(key, 6)
    w = 0.1 * jax.random.normal(ks[0], (cout, cin), jnp.float32)
    bconv = 0.01 * jax.random.normal(ks[1], (cout,), jnp.float32)
    gamma = 1.0 + 0.1 * jax.random.normal(ks[2], (cout,), jnp.float32)
    beta = 0.01 * jax.random.normal(ks[3], (cout,), jnp.float32)
    mean = 0.01 * jax.random.normal(ks[4], (cout,), jnp.float32)
    var = 1.0 + 0.1 * jnp.abs(jax.random.normal(ks[5], (cout,), jnp.float32))
    s = gamma / jnp.sqrt(var + eps)
    wf = (w * s[:, None]).astype(jnp.bfloat16)
    b = ((bconv - mean) * s + beta).reshape(cout, 1)
    return wf, b


def _conv3d_bn(key, cout, cin, eps=1e-4):
    ks = jax.random.split(key, 6)
    w = 0.1 * jax.random.normal(ks[0], (27, cout, cin), jnp.float32)   # per-tap [27,Cout,Cin]
    bconv = 0.01 * jax.random.normal(ks[1], (cout,), jnp.float32)
    gamma = 1.0 + 0.1 * jax.random.normal(ks[2], (cout,), jnp.float32)
    beta = 0.01 * jax.random.normal(ks[3], (cout,), jnp.float32)
    mean = 0.01 * jax.random.normal(ks[4], (cout,), jnp.float32)
    var = 1.0 + 0.1 * jnp.abs(jax.random.normal(ks[5], (cout,), jnp.float32))
    s = gamma / jnp.sqrt(var + eps)
    wf = (w * s[None, :, None]).astype(jnp.bfloat16)
    b = ((bconv - mean) * s + beta).reshape(cout, 1)
    return wf, b


def build_params(key, sa_blocks, extra_feature_channels):
    keys = iter(jax.random.split(key, 256))
    in_channels = extra_feature_channels + 3
    extra = extra_feature_channels
    layers = []
    for conv_configs, sa_configs in sa_blocks:
        conv_blocks = []
        if conv_configs is not None:
            out_c, num_blocks, vres = conv_configs
            for _ in range(num_blocks):
                blk = {"resolution": int(vres)}
                blk["vw1"], blk["vb1"] = _conv3d_bn(next(keys), out_c, in_channels)
                blk["vw2"], blk["vb2"] = _conv3d_bn(next(keys), out_c, out_c)
                hidden = max(out_c // 8, 1)                         # SE3d reduction=8
                blk["se_w1"] = 0.1 * jax.random.normal(next(keys), (hidden, out_c), jnp.float32)
                blk["se_b1"] = 0.01 * jax.random.normal(next(keys), (hidden,), jnp.float32)
                blk["se_w2"] = 0.1 * jax.random.normal(next(keys), (out_c, hidden), jnp.float32)
                blk["se_b2"] = 0.01 * jax.random.normal(next(keys), (out_c,), jnp.float32)
                blk["pw"], blk["pb"] = _conv_bn(next(keys), out_c, in_channels)
                conv_blocks.append(blk)
                in_channels = out_c
            extra = in_channels
        num_centers, radius, num_neighbors, out_channels = sa_configs
        mlp, c = [], extra + 3                                      # include_coordinates=True
        for oc in out_channels:
            mlp.append(_conv_bn(next(keys), oc, c))
            c = oc
        layers.append({
            "conv_blocks": conv_blocks,
            "sa": {"num_centers": int(num_centers), "radius": float(radius),
                   "num_neighbors": int(num_neighbors), "mlp": mlp},
        })
        in_channels = extra = out_channels[-1]
    return layers


# ----------------------------------------------------------------------------
if __name__ == "__main__":
    key = jax.random.PRNGKey(0)
    kp, kx = jax.random.split(key)

    # Small configuration, same structure as the default PVCNN2_SA sa_blocks.
    B, N, EXTRA = 2, 64, 6
    sa_blocks = [
        ((8, 1, 4), (16, 0.4, 8, (8, 16))),   # PVConv(9->8, res 4) + SA(16 centers, mlp 8,16)
        (None,      (4, 0.8, 8, (16, 32))),   # SA(4 centers, mlp 16,32)
    ]

    params = build_params(kp, sa_blocks, EXTRA)
    inputs = jax.random.uniform(kx, (B, 3 + EXTRA, N), jnp.float32)   # [B, 9, N]

    fwd = jax.jit(lambda x: pvcnn2_sa_forward(params, x))
    coords_list, coords, features, in_features_list = fwd(inputs)

    jax.block_until_ready(features)
    jax.block_until_ready(coords)
    assert features.shape == (B, 32, 4) and coords.shape == (B, 3, 4)
    assert in_features_list[0].shape == (B, EXTRA, N)
    assert bool(jnp.all(jnp.isfinite(features.astype(jnp.float32))))
    print("KERNEL_OK")
</pallas_src>

<mosaic_0001>
module attributes {stable_mosaic.version = 11 : i64} {
  func.func @_conv1x1_kernel(%arg0: i32, %arg1: i32, %arg2: memref<8x9xbf16, #tpu.memory_space<vmem>>, %arg3: memref<8x1xf32, #tpu.memory_space<vmem>>, %arg4: memref<1x9x64xf32, #tpu.memory_space<vmem>>, %arg5: memref<1x8x64xbf16, #tpu.memory_space<vmem>>) attributes {dimension_semantics = [#tpu.dimension_semantics<parallel>, #tpu.dimension_semantics<parallel>], iteration_bounds = array<i64: 2, 1>, scalar_prefetch = 0 : i64, scratch_operands = 0 : i64, tpu.core_type = #tpu.core_type<tc>, window_params = [{pipeline_mode = #tpu.pipeline_mode<synchronous>, transform_indices = @transform_0, window_bounds = array<i64: 8, 9>}, {pipeline_mode = #tpu.pipeline_mode<synchronous>, transform_indices = @transform_1, window_bounds = array<i64: 8, 1>}, {transform_indices = @transform_2, window_bounds = array<i64: 1, 9, 64>}, {transform_indices = @transform_3, window_bounds = array<i64: 1, 8, 64>}]} {
    %c0 = arith.constant 0 : index
    %c0_0 = arith.constant 0 : index
    %c0_1 = arith.constant 0 : index
    %0 = vector.load %arg4[%c0, %c0_0, %c0_1] : memref<1x9x64xf32, #tpu.memory_space<vmem>>, vector<1x9x64xf32>
    %1 = vector.shape_cast %0 : vector<1x9x64xf32> to vector<9x64xf32>
    %2 = arith.truncf %1 : vector<9x64xf32> to vector<9x64xbf16>
    %c0_2 = arith.constant 0 : index
    %c0_3 = arith.constant 0 : index
    %3 = vector.load %arg2[%c0_2, %c0_3] : memref<8x9xbf16, #tpu.memory_space<vmem>>, vector<8x9xbf16>
    %cst = arith.constant dense<0.000000e+00> : vector<8x64xf32>
    %4 = tpu.matmul %3, %2, %cst {dimension_numbers = #tpu.dot_dimension_numbers<[1], [0], [0], [1], [0, 0, 1, 1], [], []>} : vector<8x9xbf16>, vector<9x64xbf16>, vector<8x64xf32> -> vector<8x64xf32>
    %c0_4 = arith.constant 0 : index
    %c0_5 = arith.constant 0 : index
    %5 = vector.load %arg3[%c0_4, %c0_5] : memref<8x1xf32, #tpu.memory_space<vmem>>, vector<8x1xf32>
    %6 = vector.broadcast %5 : vector<8x1xf32> to vector<8x64xf32>
    %7 = arith.addf %4, %6 : vector<8x64xf32>
    %cst_6 = arith.constant 0.000000e+00 : f32
    %8 = vector.broadcast %cst_6 : f32 to vector<8x64xf32>
    %9 = arith.maximumf %7, %8 : vector<8x64xf32>
    %10 = arith.truncf %9 : vector<8x64xf32> to vector<8x64xbf16>
    %c0_7 = arith.constant 0 : index
    %c0_8 = arith.constant 0 : index
    %c0_9 = arith.constant 0 : index
    %11 = vector.load %arg5[%c0_7, %c0_8, %c0_9] : memref<1x8x64xbf16, #tpu.memory_space<vmem>>, vector<1x8x64xbf16>
    %12 = vector.shape_cast %11 : vector<1x8x64xbf16> to vector<8x64xbf16>
    %13 = vector.shape_cast %10 : vector<8x64xbf16> to vector<1x8x64xbf16>
    tpu.vector_store %arg5[%c0_7, %c0_8, %c0_9], %13 {strides = array<i32>} : memref<1x8x64xbf16, #tpu.memory_space<vmem>>, vector<1x8x64xbf16>,
    return
  }
  func.func @transform_0(%arg0: i32, %arg1: i32) -> (i32, i32) {
    %c0_i32 = arith.constant 0 : i32
    %c0_i32_0 = arith.constant 0 : i32
    %c0_i32_1 = arith.constant 0 : i32
    return %c0_i32, %c0_i32_0 : i32, i32
  }
  func.func @transform_1(%arg0: i32, %arg1: i32) -> (i32, i32) {
    %c0_i32 = arith.constant 0 : i32
    %c0_i32_0 = arith.constant 0 : i32
    %c0_i32_1 = arith.constant 0 : i32
    return %c0_i32, %c0_i32_0 : i32, i32
  }
  func.func @transform_2(%arg0: i32, %arg1: i32) -> (i32, i32, i32) {
    %c0_i32 = arith.constant 0 : i32
    %c0_i32_0 = arith.constant 0 : i32
    return %arg0, %c0_i32, %arg1 : i32, i32, i32
  }
  func.func @transform_3(%arg0: i32, %arg1: i32) -> (i32, i32, i32) {
    %c0_i32 = arith.constant 0 : i32
    %c0_i32_0 = arith.constant 0 : i32
    return %arg0, %c0_i32, %arg1 : i32, i32, i32
  }
}

module attributes {stable_mosaic.version = 11 : i64} {
  func.func @_voxconv_kernel(%arg0: i32, %arg1: memref<27x8x9xbf16, #tpu.memory_space<vmem>>, %arg2: memref<8x1xf32, #tpu.memory_space<vmem>>, %arg3: memref<1x9x302xbf16, #tpu.memory_space<vmem>>, %arg4: memref<1x8x216xbf16, #tpu.memory_space<vmem>>) attributes {dimension_semantics = [#tpu.dimension_semantics<parallel>], iteration_bounds = array<i64: 2>, scalar_prefetch = 0 : i64, scratch_operands = 0 : i64, tpu.core_type = #tpu.core_type<tc>, window_params = [{pipeline_mode = #tpu.pipeline_mode<synchronous>, transform_indices = @transform_0, window_bounds = array<i64: 27, 8, 9>}, {pipeline_mode = #tpu.pipeline_mode<synchronous>, transform_indices = @transform_1, window_bounds = array<i64: 8, 1>}, {transform_indices = @transform_2, window_bounds = array<i64: 1, 9, 302>}, {transform_indices = @transform_3, window_bounds = array<i64: 1, 8, 216>}]} {
    %cst = arith.constant 0.000000e+00 : f32
    %0 = vector.broadcast %cst : f32 to vector<8x216xf32>
    %c0 = arith.constant 0 : index
    %c0_0 = arith.constant 0 : index
    %c0_1 = arith.constant 0 : index
    %1 = vector.load %arg3[%c0, %c0_0, %c0_1] : memref<1x9x302xbf16, #tpu.memory_space<vmem>>, vector<1x9x216xbf16>
    %2 = vector.shape_cast %1 : vector<1x9x216xbf16> to vector<9x216xbf16>
    %c0_2 = arith.constant 0 : index
    %c0_3 = arith.constant 0 : index
    %c0_4 = arith.constant 0 : index
    %3 = vector.load %arg1[%c0_2, %c0_3, %c0_4] : memref<27x8x9xbf16, #tpu.memory_space<vmem>>, vector<1x8x9xbf16>
    %4 = vector.shape_cast %3 : vector<1x8x9xbf16> to vector<8x9xbf16>
    %cst_5 = arith.constant dense<0.000000e+00> : vector<8x216xf32>
    %5 = tpu.matmul %4, %2, %cst_5 {dimension_numbers = #tpu.dot_dimension_numbers<[1], [0], [0], [1], [0, 0, 1, 1], [], []>} : vector<8x9xbf16>, vector<9x216xbf16>, vector<8x216xf32> -> vector<8x216xf32>
    %6 = arith.addf %0, %5 : vector<8x216xf32>
    %c0_6 = arith.constant 0 : index
    %c0_7 = arith.constant 0 : index
    %c1 = arith.constant 1 : index
    %7 = vector.load %arg3[%c0_6, %c0_7, %c1] : memref<1x9x302xbf16, #tpu.memory_space<vmem>>, vector<1x9x216xbf16>
    %8 = vector.shape_cast %7 : vector<1x9x216xbf16> to vector<9x216xbf16>
    %c1_8 = arith.constant 1 : index
    %c0_9 = arith.constant 0 : index
    %c0_10 = arith.constant 0 : index
    %9 = vector.load %arg1[%c1_8, %c0_9, %c0_10] : memref<27x8x9xbf16, #tpu.memory_space<vmem>>, vector<1x8x9xbf16>
    %10 = vector.shape_cast %9 : vector<1x8x9xbf16> to vector<8x9xbf16>
    %cst_11 = arith.constant dense<0.000000e+00> : vector<8x216xf32>
    %11 = tpu.matmul %10, %8, %cst_11 {dimension_numbers = #tpu.dot_dimension_numbers<[1], [0], [0], [1], [0, 0, 1, 1], [], []>} : vector<8x9xbf16>, vector<9x216xbf16>, vector<8x216xf32> -> vector<8x216xf32>
    %12 = arith.addf %6, %11 : vector<8x216xf32>
    %c0_12 = arith.constant 0 : index
    %c0_13 = arith.constant 0 : index
    %c2 = arith.constant 2 : index
    %13 = vector.load %arg3[%c0_12, %c0_13, %c2] : memref<1x9x302xbf16, #tpu.memory_space<vmem>>, vector<1x9x216xbf16>
    %14 = vector.shape_cast %13 : vector<1x9x216xbf16> to vector<9x216xbf16>
    %c2_14 = arith.constant 2 : index
    %c0_15 = arith.constant 0 : index
    %c0_16 = arith.constant 0 : index
    %15 = vector.load %arg1[%c2_14, %c0_15, %c0_16] : memref<27x8x9xbf16, #tpu.memory_space<vmem>>, vector<1x8x9xbf16>
    %16 = vector.shape_cast %15 : vector<1x8x9xbf16> to vector<8x9xbf16>
    %cst_17 = arith.constant dense<0.000000e+00> : vector<8x216xf32>
    %17 = tpu.matmul %16, %14, %cst_17 {dimension_numbers = #tpu.dot_dimension_numbers<[1], [0], [0], [1], [0, 0, 1, 1], [], []>} : vector<8x9xbf16>, vector<9x216xbf16>, vector<8x216xf32> -> vector<8x216xf32>
    %18 = arith.addf %12, %17 : vector<8x216xf32>
    %c0_18 = arith.constant 0 : index
    %c0_19 = arith.constant 0 : index
    %c6 = arith.constant 6 : index
    %19 = vector.load %arg3[%c0_18, %c0_19, %c6] : memref<1x9x302xbf16, #tpu.memory_space<vmem>>, vector<1x9x216xbf16>
    %20 = vector.shape_cast %19 : vector<1x9x216xbf16> to vector<9x216xbf16>
    %c3 = arith.constant 3 : index
    %c0_20 = arith.constant 0 : index
    %c0_21 = arith.constant 0 : index
    %21 = vector.load %arg1[%c3, %c0_20, %c0_21] : memref<27x8x9xbf16, #tpu.memory_space<vmem>>, vector<1x8x9xbf16>
    %22 = vector.shape_cast %21 : vector<1x8x9xbf16> to vector<8x9xbf16>
    %cst_22 = arith.constant dense<0.000000e+00> : vector<8x216xf32>
    %23 = tpu.matmul %22, %20, %cst_22 {dimension_numbers = #tpu.dot_dimension_numbers<[1], [0], [0], [1], [0, 0, 1, 1], [], []>} : vector<8x9xbf16>, vector<9x216xbf16>, vector<8x216xf32> -> vector<8x216xf32>
    %24 = arith.addf %18, %23 : vector<8x216xf32>
    %c0_23 = arith.constant 0 : index
    %c0_24 = arith.constant 0 : index
    %c7 = arith.constant 7 : index
    %25 = vector.load %arg3[%c0_23, %c0_24, %c7] : memref<1x9x302xbf16, #tpu.memory_space<vmem>>, vector<1x9x216xbf16>
    %26 = vector.shape_cast %25 : vector<1x9x216xbf16> to vector<9x216xbf16>
    %c4 = arith.constant 4 : index
    %c0_25 = arith.constant 0 : index
    %c0_26 = arith.constant 0 : index
    %27 = vector.load %arg1[%c4, %c0_25, %c0_26] : memref<27x8x9xbf16, #tpu.memory_space<vmem>>, vector<1x8x9xbf16>
    %28 = vector.shape_cast %27 : vector<1x8x9xbf16> to vector<8x9xbf16>
    %cst_27 = arith.constant dense<0.000000e+00> : vector<8x216xf32>
    %29 = tpu.matmul %28, %26, %cst_27 {dimension_numbers = #tpu.dot_dimension_numbers<[1], [0], [0], [1], [0, 0, 1, 1], [], []>} : vector<8x9xbf16>, vector<9x216xbf16>, vector<8x216xf32> -> vector<8x216xf32>
    %30 = arith.addf %24, %29 : vector<8x216xf32>
    %c0_28 = arith.constant 0 : index
    %c0_29 = arith.constant 0 : index
    %c8 = arith.constant 8 : index
    %31 = vector.load %arg3[%c0_28, %c0_29, %c8] : memref<1x9x302xbf16, #tpu.memory_space<vmem>>, vector<1x9x216xbf16>
    %32 = vector.shape_cast %31 : vector<1x9x216xbf16> to vector<9x216xbf16>
    %c5 = arith.constant 5 : index
    %c0_30 = arith.constant 0 : index
    %c0_31 = arith.constant 0 : index
    %33 = vector.load %arg1[%c5, %c0_30, %c0_31] : memref<27x8x9xbf16, #tpu.memory_space<vmem>>, vector<1x8x9xbf16>
    %34 = vector.shape_cast %33 : vector<1x8x9xbf16> to vector<8x9xbf16>
    %cst_32 = arith.constant dense<0.000000e+00> : vector<8x216xf32>
    %35 = tpu.matmul %34, %32, %cst_32 {dimension_numbers = #tpu.dot_dimension_numbers<[1], [0], [0], [1], [0, 0, 1, 1], [], []>} : vector<8x9xbf16>, vector<9x216xbf16>, vector<8x216xf32> -> vector<8x216xf32>
    %36 = arith.addf %30, %35 : vector<8x216xf32>
    %c0_33 = arith.constant 0 : index
    %c0_34 = arith.constant 0 : index
    %c12 = arith.constant 12 : index
    %37 = vector.load %arg3[%c0_33, %c0_34, %c12] : memref<1x9x302xbf16, #tpu.memory_space<vmem>>, vector<1x9x216xbf16>
    %38 = vector.shape_cast %37 : vector<1x9x216xbf16> to vector<9x216xbf16>
    %c6_35 = arith.constant 6 : index
    %c0_36 = arith.constant 0 : index
    %c0_37 = arith.constant 0 : index
    %39 = vector.load %arg1[%c6_35, %c0_36, %c0_37] : memref<27x8x9xbf16, #tpu.memory_space<vmem>>, vector<1x8x9xbf16>
    %40 = vector.shape_cast %39 : vector<1x8x9xbf16> to vector<8x9xbf16>
    %cst_38 = arith.constant dense<0.000000e+00> : vector<8x216xf32>
    %41 = tpu.matmul %40, %38, %cst_38 {dimension_numbers = #tpu.dot_dimension_numbers<[1], [0], [0], [1], [0, 0, 1, 1], [], []>} : vector<8x9xbf16>, vector<9x216xbf16>, vector<8x216xf32> -> vector<8x216xf32>
    %42 = arith.addf %36, %41 : vector<8x216xf32>
    %c0_39 = arith.constant 0 : index
    %c0_40 = arith.constant 0 : index
    %c13 = arith.constant 13 : index
    %43 = vector.load %arg3[%c0_39, %c0_40, %c13] : memref<1x9x302xbf16, #tpu.memory_space<vmem>>, vector<1x9x216xbf16>
    %44 = vector.shape_cast %43 : vector<1x9x216xbf16> to vector<9x216xbf16>
    %c7_41 = arith.constant 7 : index
    %c0_42 = arith.constant 0 : index
    %c0_43 = arith.constant 0 : index
    %45 = vector.load %arg1[%c7_41, %c0_42, %c0_43] : memref<27x8x9xbf16, #tpu.memory_space<vmem>>, vector<1x8x9xbf16>
    %46 = vector.shape_cast %45 : vector<1x8x9xbf16> to vector<8x9xbf16>
    %cst_44 = arith.constant dense<0.000000e+00> : vector<8x216xf32>
    %47 = tpu.matmul %46, %44, %cst_44 {dimension_numbers = #tpu.dot_dimension_numbers<[1], [0], [0], [1], [0, 0, 1, 1], [], []>} : vector<8x9xbf16>, vector<9x216xbf16>, vector<8x216xf32> -> vector<8x216xf32>
    %48 = arith.addf %42, %47 : vector<8x216xf32>
    %c0_45 = arith.constant 0 : index
    %c0_46 = arith.constant 0 : index
    %c14 = arith.constant 14 : index
    %49 = vector.load %arg3[%c0_45, %c0_46, %c14] : memref<1x9x302xbf16, #tpu.memory_space<vmem>>, vector<1x9x216xbf16>
    %50 = vector.shape_cast %49 : vector<1x9x216xbf16> to vector<9x216xbf16>
    %c8_47 = arith.constant 8 : index
    %c0_48 = arith.constant 0 : index
    %c0_49 = arith.constant 0 : index
    %51 = vector.load %arg1[%c8_47, %c0_48, %c0_49] : memref<27x8x9xbf16, #tpu.memory_space<vmem>>, vector<1x8x9xbf16>
    %52 = vector.shape_cast %51 : vector<1x8x9xbf16> to vector<8x9xbf16>
    %cst_50 = arith.constant dense<0.000000e+00> : vector<8x216xf32>
    %53 = tpu.matmul %52, %50, %cst_50 {dimension_numbers = #tpu.dot_dimension_numbers<[1], [0], [0], [1], [0, 0, 1, 1], [], []>} : vector<8x9xbf16>, vector<9x216xbf16>, vector<8x216xf32> -> vector<8x216xf32>
    %54 = arith.addf %48, %53 : vector<8x216xf32>
    %c0_51 = arith.constant 0 : index
    %c0_52 = arith.constant 0 : index
    %c36 = arith.constant 36 : index
    %55 = vector.load %arg3[%c0_51, %c0_52, %c36] : memref<1x9x302xbf16, #tpu.memory_space<vmem>>, vector<1x9x216xbf16>
    %56 = vector.shape_cast %55 : vector<1x9x216xbf16> to vector<9x216xbf16>
    %c9 = arith.constant 9 : index
    %c0_53 = arith.constant 0 : index
    %c0_54 = arith.constant 0 : index
    %57 = vector.load %arg1[%c9, %c0_53, %c0_54] : memref<27x8x9xbf16, #tpu.memory_space<vmem>>, vector<1x8x9xbf16>
    %58 = vector.shape_cast %57 : vector<1x8x9xbf16> to vector<8x9xbf16>
    %cst_55 = arith.constant dense<0.000000e+00> : vector<8x216xf32>
    %59 = tpu.matmul %58, %56, %cst_55 {dimension_numbers = #tpu.dot_dimension_numbers<[1], [0], [0], [1], [0, 0, 1, 1], [], []>} : vector<8x9xbf16>, vector<9x216xbf16>, vector<8x216xf32> -> vector<8x216xf32>
    %60 = arith.addf %54, %59 : vector<8x216xf32>
    %c0_56 = arith.constant 0 : index
    %c0_57 = arith.constant 0 : index
    %c37 = arith.constant 37 : index
    %61 = vector.load %arg3[%c0_56, %c0_57, %c37] : memref<1x9x302xbf16, #tpu.memory_space<vmem>>, vector<1x9x216xbf16>
    %62 = vector.shape_cast %61 : vector<1x9x216xbf16> to vector<9x216xbf16>
    %c10 = arith.constant 10 : index
    %c0_58 = arith.constant 0 : index
    %c0_59 = arith.constant 0 : index
    %63 = vector.load %arg1[%c10, %c0_58, %c0_59] : memref<27x8x9xbf16, #tpu.memory_space<vmem>>, vector<1x8x9xbf16>
    %64 = vector.shape_cast %63 : vector<1x8x9xbf16> to vector<8x9xbf16>
    %cst_60 = arith.constant dense<0.000000e+00> : vector<8x216xf32>
    %65 = tpu.matmul %64, %62, %cst_60 {dimension_numbers = #tpu.dot_dimension_numbers<[1], [0], [0], [1], [0, 0, 1, 1], [], []>} : vector<8x9xbf16>, vector<9x216xbf16>, vector<8x216xf32> -> vector<8x216xf32>
    %66 = arith.addf %60, %65 : vector<8x216xf32>
    %c0_61 = arith.constant 0 : index
    %c0_62 = arith.constant 0 : index
    %c38 = arith.constant 38 : index
    %67 = vector.load %arg3[%c0_61, %c0_62, %c38] : memref<1x9x302xbf16, #tpu.memory_space<vmem>>, vector<1x9x216xbf16>
    %68 = vector.shape_cast %67 : vector<1x9x216xbf16> to vector<9x216xbf16>
    %c11 = arith.constant 11 : index
    %c0_63 = arith.constant 0 : index
    %c0_64 = arith.constant 0 : index
    %69 = vector.load %arg1[%c11, %c0_63, %c0_64] : memref<27x8x9xbf16, #tpu.memory_space<vmem>>, vector<1x8x9xbf16>
    %70 = vector.shape_cast %69 : vector<1x8x9xbf16> to vector<8x9xbf16>
    %cst_65 = arith.constant dense<0.000000e+00> : vector<8x216xf32>
    %71 = tpu.matmul %70, %68, %cst_65 {dimension_numbers = #tpu.dot_dimension_numbers<[1], [0], [0], [1], [0, 0, 1, 1], [], []>} : vector<8x9xbf16>, vector<9x216xbf16>, vector<8x216xf32> -> vector<8x216xf32>
    %72 = arith.addf %66, %71 : vector<8x216xf32>
    %c0_66 = arith.constant 0 : index
    %c0_67 = arith.constant 0 : index
    %c42 = arith.constant 42 : index
    %73 = vector.load %arg3[%c0_66, %c0_67, %c42] : memref<1x9x302xbf16, #tpu.memory_space<vmem>>, vector<1x9x216xbf16>
    %74 = vector.shape_cast %73 : vector<1x9x216xbf16> to vector<9x216xbf16>
    %c12_68 = arith.constant 12 : index
    %c0_69 = arith.constant 0 : index
    %c0_70 = arith.constant 0 : index
    %75 = vector.load %arg1[%c12_68, %c0_69, %c0_70] : memref<27x8x9xbf16, #tpu.memory_space<vmem>>, vector<1x8x9xbf16>
    %76 = vector.shape_cast %75 : vector<1x8x9xbf16> to vector<8x9xbf16>
    %cst_71 = arith.constant dense<0.000000e+00> : vector<8x216xf32>
    %77 = tpu.matmul %76, %74, %cst_71 {dimension_numbers = #tpu.dot_dimension_numbers<[1], [0], [0], [1], [0, 0, 1, 1], [], []>} : vector<8x9xbf16>, vector<9x216xbf16>, vector<8x216xf32> -> vector<8x216xf32>
    %78 = arith.addf %72, %77 : vector<8x216xf32>
    %c0_72 = arith.constant 0 : index
    %c0_73 = arith.constant 0 : index
    %c43 = arith.constant 43 : index
    %79 = vector.load %arg3[%c0_72, %c0_73, %c43] : memref<1x9x302xbf16, #tpu.memory_space<vmem>>, vector<1x9x216xbf16>
    %80 = vector.shape_cast %79 : vector<1x9x216xbf16> to vector<9x216xbf16>
    %c13_74 = arith.constant 13 : index
    %c0_75 = arith.constant 0 : index
    %c0_76 = arith.constant 0 : index
    %81 = vector.load %arg1[%c13_74, %c0_75, %c0_76] : memref<27x8x9xbf16, #tpu.memory_space<vmem>>, vector<1x8x9xbf16>
    %82 = vector.shape_cast %81 : vector<1x8x9xbf16> to vector<8x9xbf16>
    %cst_77 = arith.constant dense<0.000000e+00> : vector<8x216xf32>
    %83 = tpu.matmul %82, %80, %cst_77 {dimension_numbers = #tpu.dot_dimension_numbers<[1], [0], [0], [1], [0, 0, 1, 1], [], []>} : vector<8x9xbf16>, vector<9x216xbf16>, vector<8x216xf32> -> vector<8x216xf32>
    %84 = arith.addf %78, %83 : vector<8x216xf32>
    %c0_78 = arith.constant 0 : index
    %c0_79 = arith.constant 0 : index
    %c44 = arith.constant 44 : index
    %85 = vector.load %arg3[%c0_78, %c0_79, %c44] : memref<1x9x302xbf16, #tpu.memory_space<vmem>>, vector<1x9x216xbf16>
    %86 = vector.shape_cast %85 : vector<1x9x216xbf16> to vector<9x216xbf16>
    %c14_80 = arith.constant 14 : index
    %c0_81 = arith.constant 0 : index
    %c0_82 = arith.constant 0 : index
    %87 = vector.load %arg1[%c14_80, %c0_81, %c0_82] : memref<27x8x9xbf16, #tpu.memory_space<vmem>>, vector<1x8x9xbf16>
    %88 = vector.shape_cast %87 : vector<1x8x9xbf16> to vector<8x9xbf16>
    %cst_83 = arith.constant dense<0.000000e+00> : vector<8x216xf32>
    %89 = tpu.matmul %88, %86, %cst_83 {dimension_numbers = #tpu.dot_dimension_numbers<[1], [0], [0], [1], [0, 0, 1, 1], [], []>} : vector<8x9xbf16>, vector<9x216xbf16>, vector<8x216xf32> -> vector<8x216xf32>
    %90 = arith.addf %84, %89 : vector<8x216xf32>
    %c0_84 = arith.constant 0 : index
    %c0_85 = arith.constant 0 : index
    %c48 = arith.constant 48 : index
    %91 = vector.load %arg3[%c0_84, %c0_85, %c48] : memref<1x9x302xbf16, #tpu.memory_space<vmem>>, vector<1x9x216xbf16>
    %92 = vector.shape_cast %91 : vector<1x9x216xbf16> to vector<9x216xbf16>
    %c15 = arith.constant 15 : index
    %c0_86 = arith.constant 0 : index
    %c0_87 = arith.constant 0 : index
    %93 = vector.load %arg1[%c15, %c0_86, %c0_87] : memref<27x8x9xbf16, #tpu.memory_space<vmem>>, vector<1x8x9xbf16>
    %94 = vector.shape_cast %93 : vector<1x8x9xbf16> to vector<8x9xbf16>
    %cst_88 = arith.constant dense<0.000000e+00> : vector<8x216xf32>
    %95 = tpu.matmul %94, %92, %cst_88 {dimension_numbers = #tpu.dot_dimension_numbers<[1], [0], [0], [1], [0, 0, 1, 1], [], []>} : vector<8x9xbf16>, vector<9x216xbf16>, vector<8x216xf32> -> vector<8x216xf32>
    %96 = arith.addf %90, %95 : vector<8x216xf32>
    %c0_89 = arith.constant 0 : index
    %c0_90 = arith.constant 0 : index
    %c49 = arith.constant 49 : index
    %97 = vector.load %arg3[%c0_89, %c0_90, %c49] : memref<1x9x302xbf16, #tpu.memory_space<vmem>>, vector<1x9x216xbf16>
    %98 = vector.shape_cast %97 : vector<1x9x216xbf16> to vector<9x216xbf16>
    %c16 = arith.constant 16 : index
    %c0_91 = arith.constant 0 : index
    %c0_92 = arith.constant 0 : index
    %99 = vector.load %arg1[%c16, %c0_91, %c0_92] : memref<27x8x9xbf16, #tpu.memory_space<vmem>>, vector<1x8x9xbf16>
    %100 = vector.shape_cast %99 : vector<1x8x9xbf16> to vector<8x9xbf16>
    %cst_93 = arith.constant dense<0.000000e+00> : vector<8x216xf32>
    %101 = tpu.matmul %100, %98, %cst_93 {dimension_numbers = #tpu.dot_dimension_numbers<[1], [0], [0], [1], [0, 0, 1, 1], [], []>} : vector<8x9xbf16>, vector<9x216xbf16>, vector<8x216xf32> -> vector<8x216xf32>
    %102 = arith.addf %96, %101 : vector<8x216xf32>
    %c0_94 = arith.constant 0 : index
    %c0_95 = arith.constant 0 : index
    %c50 = arith.constant 50 : index
    %103 = vector.load %arg3[%c0_94, %c0_95, %c50] : memref<1x9x302xbf16, #tpu.memory_space<vmem>>, vector<1x9x216xbf16>
    %104 = vector.shape_cast %103 : vector<1x9x216xbf16> to vector<9x216xbf16>
    %c17 = arith.constant 17 : index
    %c0_96 = arith.constant 0 : index
    %c0_97 = arith.constant 0 : index
    %105 = vector.load %arg1[%c17, %c0_96, %c0_97] : memref<27x8x9xbf16, #tpu.memory_space<vmem>>, vector<1x8x9xbf16>
    %106 = vector.shape_cast %105 : vector<1x8x9xbf16> to vector<8x9xbf16>
    %cst_98 = arith.constant dense<0.000000e+00> : vector<8x216xf32>
    %107 = tpu.matmul %106, %104, %cst_98 {dimension_numbers = #tpu.dot_dimension_numbers<[1], [0], [0], [1], [0, 0, 1, 1], [], []>} : vector<8x9xbf16>, vector<9x216xbf16>, vector<8x216xf32> -> vector<8x216xf32>
    %108 = arith.addf %102, %107 : vector<8x216xf32>
    %c0_99 = arith.constant 0 : index
    %c0_100 = arith.constant 0 : index
    %c72 = arith.constant 72 : index
    %109 = vector.load %arg3[%c0_99, %c0_100, %c72] : memref<1x9x302xbf16, #tpu.memory_space<vmem>>, vector<1x9x216xbf16>
    %110 = vector.shape_cast %109 : vector<1x9x216xbf16> to vector<9x216xbf16>
    %c18 = arith.constant 18 : index
    %c0_101 = arith.constant 0 : index
    %c0_102 = arith.constant 0 : index
    %111 = vector.load %arg1[%c18, %c0_101, %c0_102] : memref<27x8x9xbf16, #tpu.memory_space<vmem>>, vector<1x8x9xbf16>
    %112 = vector.shape_cast %111 : vector<1x8x9xbf16> to vector<8x9xbf16>
    %cst_103 = arith.constant dense<0.000000e+00> : vector<8x216xf32>
    %113 = tpu.matmul %112, %110, %cst_103 {dimension_numbers = #tpu.dot_dimension_numbers<[1], [0], [0], [1], [0, 0, 1, 1], [], []>} : vector<8x9xbf16>, vector<9x216xbf16>, vector<8x216xf32> -> vector<8x216xf32>
    %114 = arith.addf %108, %113 : vector<8x216xf32>
    %c0_104 = arith.constant 0 : index
    %c0_105 = arith.constant 0 : index
    %c73 = arith.constant 73 : index
    %115 = vector.load %arg3[%c0_104, %c0_105, %c73] : memref<1x9x302xbf16, #tpu.memory_space<vmem>>, vector<1x9x216xbf16>
    %116 = vector.shape_cast %115 : vector<1x9x216xbf16> to vector<9x216xbf16>
    %c19 = arith.constant 19 : index
    %c0_106 = arith.constant 0 : index
    %c0_107 = arith.constant 0 : index
    %117 = vector.load %arg1[%c19, %c0_106, %c0_107] : memref<27x8x9xbf16, #tpu.memory_space<vmem>>, vector<1x8x9xbf16>
    %118 = vector.shape_cast %117 : vector<1x8x9xbf16> to vector<8x9xbf16>
    %cst_108 = arith.constant dense<0.000000e+00> : vector<8x216xf32>
    %119 = tpu.matmul %118, %116, %cst_108 {dimension_numbers = #tpu.dot_dimension_numbers<[1], [0], [0], [1], [0, 0, 1, 1], [], []>} : vector<8x9xbf16>, vector<9x216xbf16>, vector<8x216xf32> -> vector<8x216xf32>
    %120 = arith.addf %114, %119 : vector<8x216xf32>
    %c0_109 = arith.constant 0 : index
    %c0_110 = arith.constant 0 : index
    %c74 = arith.constant 74 : index
    %121 = vector.load %arg3[%c0_109, %c0_110, %c74] : memref<1x9x302xbf16, #tpu.memory_space<vmem>>, vector<1x9x216xbf16>
    %122 = vector.shape_cast %121 : vector<1x9x216xbf16> to vector<9x216xbf16>
    %c20 = arith.constant 20 : index
    %c0_111 = arith.constant 0 : index
    %c0_112 = arith.constant 0 : index
    %123 = vector.load %arg1[%c20, %c0_111, %c0_112] : memref<27x8x9xbf16, #tpu.memory_space<vmem>>, vector<1x8x9xbf16>
    %124 = vector.shape_cast %123 : vector<1x8x9xbf16> to vector<8x9xbf16>
    %cst_113 = arith.constant dense<0.000000e+00> : vector<8x216xf32>
    %125 = tpu.matmul %124, %122, %cst_113 {dimension_numbers = #tpu.dot_dimension_numbers<[1], [0], [0], [1], [0, 0, 1, 1], [], []>} : vector<8x9xbf16>, vector<9x216xbf16>, vector<8x216xf32> -> vector<8x216xf32>
    %126 = arith.addf %120, %125 : vector<8x216xf32>
    %c0_114 = arith.constant 0 : index
    %c0_115 = arith.constant 0 : index
    %c78 = arith.constant 78 : index
    %127 = vector.load %arg3[%c0_114, %c0_115, %c78] : memref<1x9x302xbf16, #tpu.memory_space<vmem>>, vector<1x9x216xbf16>
    %128 = vector.shape_cast %127 : vector<1x9x216xbf16> to vector<9x216xbf16>
    %c21 = arith.constant 21 : index
    %c0_116 = arith.constant 0 : index
    %c0_117 = arith.constant 0 : index
    %129 = vector.load %arg1[%c21, %c0_116, %c0_117] : memref<27x8x9xbf16, #tpu.memory_space<vmem>>, vector<1x8x9xbf16>
    %130 = vector.shape_cast %129 : vector<1x8x9xbf16> to vector<8x9xbf16>
    %cst_118 = arith.constant dense<0.000000e+00> : vector<8x216xf32>
    %131 = tpu.matmul %130, %128, %cst_118 {dimension_numbers = #tpu.dot_dimension_numbers<[1], [0], [0], [1], [0, 0, 1, 1], [], []>} : vector<8x9xbf16>, vector<9x216xbf16>, vector<8x216xf32> -> vector<8x216xf32>
    %132 = arith.addf %126, %131 : vector<8x216xf32>
    %c0_119 = arith.constant 0 : index
    %c0_120 = arith.constant 0 : index
    %c79 = arith.constant 79 : index
    %133 = vector.load %arg3[%c0_119, %c0_120, %c79] : memref<1x9x302xbf16, #tpu.memory_space<vmem>>, vector<1x9x216xbf16>
    %134 = vector.shape_cast %133 : vector<1x9x216xbf16> to vector<9x216xbf16>
    %c22 = arith.constant 22 : index
    %c0_121 = arith.constant 0 : index
    %c0_122 = arith.constant 0 : index
    %135 = vector.load %arg1[%c22, %c0_121, %c0_122] : memref<27x8x9xbf16, #tpu.memory_space<vmem>>, vector<1x8x9xbf16>
    %136 = vector.shape_cast %135 : vector<1x8x9xbf16> to vector<8x9xbf16>
    %cst_123 = arith.constant dense<0.000000e+00> : vector<8x216xf32>
    %137 = tpu.matmul %136, %134, %cst_123 {dimension_numbers = #tpu.dot_dimension_numbers<[1], [0], [0], [1], [0, 0, 1, 1], [], []>} : vector<8x9xbf16>, vector<9x216xbf16>, vector<8x216xf32> -> vector<8x216xf32>
    %138 = arith.addf %132, %137 : vector<8x216xf32>
    %c0_124 = arith.constant 0 : index
    %c0_125 = arith.constant 0 : index
    %c80 = arith.constant 80 : index
    %139 = vector.load %arg3[%c0_124, %c0_125, %c80] : memref<1x9x302xbf16, #tpu.memory_space<vmem>>, vector<1x9x216xbf16>
    %140 = vector.shape_cast %139 : vector<1x9x216xbf16> to vector<9x216xbf16>
    %c23 = arith.constant 23 : index
    %c0_126 = arith.constant 0 : index
    %c0_127 = arith.constant 0 : index
    %141 = vector.load %arg1[%c23, %c0_126, %c0_127] : memref<27x8x9xbf16, #tpu.memory_space<vmem>>, vector<1x8x9xbf16>
    %142 = vector.shape_cast %141 : vector<1x8x9xbf16> to vector<8x9xbf16>
    %cst_128 = arith.constant dense<0.000000e+00> : vector<8x216xf32>
    %143 = tpu.matmul %142, %140, %cst_128 {dimension_numbers = #tpu.dot_dimension_numbers<[1], [0], [0], [1], [0, 0, 1, 1], [], []>} : vector<8x9xbf16>, vector<9x216xbf16>, vector<8x216xf32> -> vector<8x216xf32>
    %144 = arith.addf %138, %143 : vector<8x216xf32>
    %c0_129 = arith.constant 0 : index
    %c0_130 = arith.constant 0 : index
    %c84 = arith.constant 84 : index
    %145 = vector.load %arg3[%c0_129, %c0_130, %c84] : memref<1x9x302xbf16, #tpu.memory_space<vmem>>, vector<1x9x216xbf16>
    %146 = vector.shape_cast %145 : vector<1x9x216xbf16> to vector<9x216xbf16>
    %c24 = arith.constant 24 : index
    %c0_131 = arith.constant 0 : index
    %c0_132 = arith.constant 0 : index
    %147 = vector.load %arg1[%c24, %c0_131, %c0_132] : memref<27x8x9xbf16, #tpu.memory_space<vmem>>, vector<1x8x9xbf16>
    %148 = vector.shape_cast %147 : vector<1x8x9xbf16> to vector<8x9xbf16>
    %cst_133 = arith.constant dense<0.000000e+00> : vector<8x216xf32>
    %149 = tpu.matmul %148, %146, %cst_133 {dimension_numbers = #tpu.dot_dimension_numbers<[1], [0], [0], [1], [0, 0, 1, 1], [], []>} : vector<8x9xbf16>, vector<9x216xbf16>, vector<8x216xf32> -> vector<8x216xf32>
    %150 = arith.addf %144, %149 : vector<8x216xf32>
    %c0_134 = arith.constant 0 : index
    %c0_135 = arith.constant 0 : index
    %c85 = arith.constant 85 : index
    %151 = vector.load %arg3[%c0_134, %c0_135, %c85] : memref<1x9x302xbf16, #tpu.memory_space<vmem>>, vector<1x9x216xbf16>
    %152 = vector.shape_cast %151 : vector<1x9x216xbf16> to vector<9x216xbf16>
    %c25 = arith.constant 25 : index
    %c0_136 = arith.constant 0 : index
    %c0_137 = arith.constant 0 : index
    %153 = vector.load %arg1[%c25, %c0_136, %c0_137] : memref<27x8x9xbf16, #tpu.memory_space<vmem>>, vector<1x8x9xbf16>
    %154 = vector.shape_cast %153 : vector<1x8x9xbf16> to vector<8x9xbf16>
    %cst_138 = arith.constant dense<0.000000e+00> : vector<8x216xf32>
    %155 = tpu.matmul %154, %152, %cst_138 {dimension_numbers = #tpu.dot_dimension_numbers<[1], [0], [0], [1], [0, 0, 1, 1], [], []>} : vector<8x9xbf16>, vector<9x216xbf16>, vector<8x216xf32> -> vector<8x216xf32>
    %156 = arith.addf %150, %155 : vector<8x216xf32>
    %c0_139 = arith.constant 0 : index
    %c0_140 = arith.constant 0 : index
    %c86 = arith.constant 86 : index
    %157 = vector.load %arg3[%c0_139, %c0_140, %c86] : memref<1x9x302xbf16, #tpu.memory_space<vmem>>, vector<1x9x216xbf16>
    %158 = vector.shape_cast %157 : vector<1x9x216xbf16> to vector<9x216xbf16>
    %c26 = arith.constant 26 : index
    %c0_141 = arith.constant 0 : index
    %c0_142 = arith.constant 0 : index
    %159 = vector.load %arg1[%c26, %c0_141, %c0_142] : memref<27x8x9xbf16, #tpu.memory_space<vmem>>, vector<1x8x9xbf16>
    %160 = vector.shape_cast %159 : vector<1x8x9xbf16> to vector<8x9xbf16>
    %cst_143 = arith.constant dense<0.000000e+00> : vector<8x216xf32>
    %161 = tpu.matmul %160, %158, %cst_143 {dimension_numbers = #tpu.dot_dimension_numbers<[1], [0], [0], [1], [0, 0, 1, 1], [], []>} : vector<8x9xbf16>, vector<9x216xbf16>, vector<8x216xf32> -> vector<8x216xf32>
    %162 = arith.addf %156, %161 : vector<8x216xf32>
    %c0_144 = arith.constant 0 : index
    %c0_145 = arith.constant 0 : index
    %163 = vector.load %arg2[%c0_144, %c0_145] : memref<8x1xf32, #tpu.memory_space<vmem>>, vector<8x1xf32>
    %164 = vector.broadcast %163 : vector<8x1xf32> to vector<8x216xf32>
    %165 = arith.addf %162, %164 : vector<8x216xf32>
    %cst_146 = arith.constant 0.000000e+00 : f32
    %166 = vector.broadcast %cst_146 : f32 to vector<8x216xf32>
    %167 = arith.cmpf ogt, %165, %166 : vector<8x216xf32>
    %cst_147 = arith.constant 1.000000e-01 : f32
    %168 = vector.broadcast %cst_147 : f32 to vector<8x216xf32>
    %169 = arith.mulf %168, %165 : vector<8x216xf32>
    %170 = arith.select %167, %165, %169 : vector<8x216xi1>, vector<8x216xf32>
    %171 = arith.truncf %170 : vector<8x216xf32> to vector<8x216xbf16>
    %c0_148 = arith.constant 0 : index
    %c0_149 = arith.constant 0 : index
    %c0_150 = arith.constant 0 : index
    %172 = vector.load %arg4[%c0_148, %c0_149, %c0_150] : memref<1x8x216xbf16, #tpu.memory_space<vmem>>, vector<1x8x216xbf16>
    %173 = vector.shape_cast %172 : vector<1x8x216xbf16> to vector<8x216xbf16>
    %174 = vector.shape_cast %171 : vector<8x216xbf16> to vector<1x8x216xbf16>
    tpu.vector_store %arg4[%c0_148, %c0_149, %c0_150], %174 {strides = array<i32>} : memref<1x8x216xbf16, #tpu.memory_space<vmem>>, vector<1x8x216xbf16>,
    return
  }
  func.func @transform_0(%arg0: i32) -> (i32, i32, i32) {
    %c0_i32 = arith.constant 0 : i32
    %c0_i32_0 = arith.constant 0 : i32
    %c0_i32_1 = arith.constant 0 : i32
    %c0_i32_2 = arith.constant 0 : i32
    return %c0_i32, %c0_i32_0, %c0_i32_1 : i32, i32, i32
  }
  func.func @transform_1(%arg0: i32) -> (i32, i32) {
    %c0_i32 = arith.constant 0 : i32
    %c0_i32_0 = arith.constant 0 : i32
    %c0_i32_1 = arith.constant 0 : i32
    return %c0_i32, %c0_i32_0 : i32, i32
  }
  func.func @transform_2(%arg0: i32) -> (i32, i32, i32) {
    %c0_i32 = arith.constant 0 : i32
    %c0_i32_0 = arith.constant 0 : i32
    %c0_i32_1 = arith.constant 0 : i32
    return %arg0, %c0_i32, %c0_i32_0 : i32, i32, i32
  }
  func.func @transform_3(%arg0: i32) -> (i32, i32, i32) {
    %c0_i32 = arith.constant 0 : i32
    %c0_i32_0 = arith.constant 0 : i32
    %c0_i32_1 = arith.constant 0 : i32
    return %arg0, %c0_i32, %c0_i32_0 : i32, i32, i32
  }
}

module attributes {stable_mosaic.version = 11 : i64} {
  func.func @_voxconv_kernel(%arg0: i32, %arg1: memref<27x8x8xbf16, #tpu.memory_space<vmem>>, %arg2: memref<8x1xf32, #tpu.memory_space<vmem>>, %arg3: memref<1x8x302xbf16, #tpu.memory_space<vmem>>, %arg4: memref<1x8x216xbf16, #tpu.memory_space<vmem>>) attributes {dimension_semantics = [#tpu.dimension_semantics<parallel>], iteration_bounds = array<i64: 2>, scalar_prefetch = 0 : i64, scratch_operands = 0 : i64, tpu.core_type = #tpu.core_type<tc>, window_params = [{pipeline_mode = #tpu.pipeline_mode<synchronous>, transform_indices = @transform_0, window_bounds = array<i64: 27, 8, 8>}, {pipeline_mode = #tpu.pipeline_mode<synchronous>, transform_indices = @transform_1, window_bounds = array<i64: 8, 1>}, {transform_indices = @transform_2, window_bounds = array<i64: 1, 8, 302>}, {transform_indices = @transform_3, window_bounds = array<i64: 1, 8, 216>}]} {
    %cst = arith.constant 0.000000e+00 : f32
    %0 = vector.broadcast %cst : f32 to vector<8x216xf32>
    %c0 = arith.constant 0 : index
    %c0_0 = arith.constant 0 : index
    %c0_1 = arith.constant 0 : index
    %1 = vector.load %arg3[%c0, %c0_0, %c0_1] : memref<1x8x302xbf16, #tpu.memory_space<vmem>>, vector<1x8x216xbf16>
    %2 = vector.shape_cast %1 : vector<1x8x216xbf16> to vector<8x216xbf16>
    %c0_2 = arith.constant 0 : index
    %c0_3 = arith.constant 0 : index
    %c0_4 = arith.constant 0 : index
    %3 = vector.load %arg1[%c0_2, %c0_3, %c0_4] : memref<27x8x8xbf16, #tpu.memory_space<vmem>>, vector<1x8x8xbf16>
    %4 = vector.shape_cast %3 : vector<1x8x8xbf16> to vector<8x8xbf16>
    %cst_5 = arith.constant dense<0.000000e+00> : vector<8x216xf32>
    %5 = tpu.matmul %4, %2, %cst_5 {dimension_numbers = #tpu.dot_dimension_numbers<[1], [0], [0], [1], [0, 0, 1, 1], [], []>} : vector<8x8xbf16>, vector<8x216xbf16>, vector<8x216xf32> -> vector<8x216xf32>
    %6 = arith.addf %0, %5 : vector<8x216xf32>
    %c0_6 = arith.constant 0 : index
    %c0_7 = arith.constant 0 : index
    %c1 = arith.constant 1 : index
    %7 = vector.load %arg3[%c0_6, %c0_7, %c1] : memref<1x8x302xbf16, #tpu.memory_space<vmem>>, vector<1x8x216xbf16>
    %8 = vector.shape_cast %7 : vector<1x8x216xbf16> to vector<8x216xbf16>
    %c1_8 = arith.constant 1 : index
    %c0_9 = arith.constant 0 : index
    %c0_10 = arith.constant 0 : index
    %9 = vector.load %arg1[%c1_8, %c0_9, %c0_10] : memref<27x8x8xbf16, #tpu.memory_space<vmem>>, vector<1x8x8xbf16>
    %10 = vector.shape_cast %9 : vector<1x8x8xbf16> to vector<8x8xbf16>
    %cst_11 = arith.constant dense<0.000000e+00> : vector<8x216xf32>
    %11 = tpu.matmul %10, %8, %cst_11 {dimension_numbers = #tpu.dot_dimension_numbers<[1], [0], [0], [1], [0, 0, 1, 1], [], []>} : vector<8x8xbf16>, vector<8x216xbf16>, vector<8x216xf32> -> vector<8x216xf32>
    %12 = arith.addf %6, %11 : vector<8x216xf32>
    %c0_12 = arith.constant 0 : index
    %c0_13 = arith.constant 0 : index
    %c2 = arith.constant 2 : index
    %13 = vector.load %arg3[%c0_12, %c0_13, %c2] : memref<1x8x302xbf16, #tpu.memory_space<vmem>>, vector<1x8x216xbf16>
    %14 = vector.shape_cast %13 : vector<1x8x216xbf16> to vector<8x216xbf16>
    %c2_14 = arith.constant 2 : index
    %c0_15 = arith.constant 0 : index
    %c0_16 = arith.constant 0 : index
    %15 = vector.load %arg1[%c2_14, %c0_15, %c0_16] : memref<27x8x8xbf16, #tpu.memory_space<vmem>>, vector<1x8x8xbf16>
    %16 = vector.shape_cast %15 : vector<1x8x8xbf16> to vector<8x8xbf16>
    %cst_17 = arith.constant dense<0.000000e+00> : vector<8x216xf32>
    %17 = tpu.matmul %16, %14, %cst_17 {dimension_numbers = #tpu.dot_dimension_numbers<[1], [0], [0], [1], [0, 0, 1, 1], [], []>} : vector<8x8xbf16>, vector<8x216xbf16>, vector<8x216xf32> -> vector<8x216xf32>
    %18 = arith.addf %12, %17 : vector<8x216xf32>
    %c0_18 = arith.constant 0 : index
    %c0_19 = arith.constant 0 : index
    %c6 = arith.constant 6 : index
    %19 = vector.load %arg3[%c0_18, %c0_19, %c6] : memref<1x8x302xbf16, #tpu.memory_space<vmem>>, vector<1x8x216xbf16>
    %20 = vector.shape_cast %19 : vector<1x8x216xbf16> to vector<8x216xbf16>
    %c3 = arith.constant 3 : index
    %c0_20 = arith.constant 0 : index
    %c0_21 = arith.constant 0 : index
    %21 = vector.load %arg1[%c3, %c0_20, %c0_21] : memref<27x8x8xbf16, #tpu.memory_space<vmem>>, vector<1x8x8xbf16>
    %22 = vector.shape_cast %21 : vector<1x8x8xbf16> to vector<8x8xbf16>
    %cst_22 = arith.constant dense<0.000000e+00> : vector<8x216xf32>
    %23 = tpu.matmul %22, %20, %cst_22 {dimension_numbers = #tpu.dot_dimension_numbers<[1], [0], [0], [1], [0, 0, 1, 1], [], []>} : vector<8x8xbf16>, vector<8x216xbf16>, vector<8x216xf32> -> vector<8x216xf32>
    %24 = arith.addf %18, %23 : vector<8x216xf32>
    %c0_23 = arith.constant 0 : index
    %c0_24 = arith.constant 0 : index
    %c7 = arith.constant 7 : index
    %25 = vector.load %arg3[%c0_23, %c0_24, %c7] : memref<1x8x302xbf16, #tpu.memory_space<vmem>>, vector<1x8x216xbf16>
    %26 = vector.shape_cast %25 : vector<1x8x216xbf16> to vector<8x216xbf16>
    %c4 = arith.constant 4 : index
    %c0_25 = arith.constant 0 : index
    %c0_26 = arith.constant 0 : index
    %27 = vector.load %arg1[%c4, %c0_25, %c0_26] : memref<27x8x8xbf16, #tpu.memory_space<vmem>>, vector<1x8x8xbf16>
    %28 = vector.shape_cast %27 : vector<1x8x8xbf16> to vector<8x8xbf16>
    %cst_27 = arith.constant dense<0.000000e+00> : vector<8x216xf32>
    %29 = tpu.matmul %28, %26, %cst_27 {dimension_numbers = #tpu.dot_dimension_numbers<[1], [0], [0], [1], [0, 0, 1, 1], [], []>} : vector<8x8xbf16>, vector<8x216xbf16>, vector<8x216xf32> -> vector<8x216xf32>
    %30 = arith.addf %24, %29 : vector<8x216xf32>
    %c0_28 = arith.constant 0 : index
    %c0_29 = arith.constant 0 : index
    %c8 = arith.constant 8 : index
    %31 = vector.load %arg3[%c0_28, %c0_29, %c8] : memref<1x8x302xbf16, #tpu.memory_space<vmem>>, vector<1x8x216xbf16>
    %32 = vector.shape_cast %31 : vector<1x8x216xbf16> to vector<8x216xbf16>
    %c5 = arith.constant 5 : index
    %c0_30 = arith.constant 0 : index
    %c0_31 = arith.constant 0 : index
    %33 = vector.load %arg1[%c5, %c0_30, %c0_31] : memref<27x8x8xbf16, #tpu.memory_space<vmem>>, vector<1x8x8xbf16>
    %34 = vector.shape_cast %33 : vector<1x8x8xbf16> to vector<8x8xbf16>
    %cst_32 = arith.constant dense<0.000000e+00> : vector<8x216xf32>
    %35 = tpu.matmul %34, %32, %cst_32 {dimension_numbers = #tpu.dot_dimension_numbers<[1], [0], [0], [1], [0, 0, 1, 1], [], []>} : vector<8x8xbf16>, vector<8x216xbf16>, vector<8x216xf32> -> vector<8x216xf32>
    %36 = arith.addf %30, %35 : vector<8x216xf32>
    %c0_33 = arith.constant 0 : index
    %c0_34 = arith.constant 0 : index
    %c12 = arith.constant 12 : index
    %37 = vector.load %arg3[%c0_33, %c0_34, %c12] : memref<1x8x302xbf16, #tpu.memory_space<vmem>>, vector<1x8x216xbf16>
    %38 = vector.shape_cast %37 : vector<1x8x216xbf16> to vector<8x216xbf16>
    %c6_35 = arith.constant 6 : index
    %c0_36 = arith.constant 0 : index
    %c0_37 = arith.constant 0 : index
    %39 = vector.load %arg1[%c6_35, %c0_36, %c0_37] : memref<27x8x8xbf16, #tpu.memory_space<vmem>>, vector<1x8x8xbf16>
    %40 = vector.shape_cast %39 : vector<1x8x8xbf16> to vector<8x8xbf16>
    %cst_38 = arith.constant dense<0.000000e+00> : vector<8x216xf32>
    %41 = tpu.matmul %40, %38, %cst_38 {dimension_numbers = #tpu.dot_dimension_numbers<[1], [0], [0], [1], [0, 0, 1, 1], [], []>} : vector<8x8xbf16>, vector<8x216xbf16>, vector<8x216xf32> -> vector<8x216xf32>
    %42 = arith.addf %36, %41 : vector<8x216xf32>
    %c0_39 = arith.constant 0 : index
    %c0_40 = arith.constant 0 : index
    %c13 = arith.constant 13 : index
    %43 = vector.load %arg3[%c0_39, %c0_40, %c13] : memref<1x8x302xbf16, #tpu.memory_space<vmem>>, vector<1x8x216xbf16>
    %44 = vector.shape_cast %43 : vector<1x8x216xbf16> to vector<8x216xbf16>
    %c7_41 = arith.constant 7 : index
    %c0_42 = arith.constant 0 : index
    %c0_43 = arith.constant 0 : index
    %45 = vector.load %arg1[%c7_41, %c0_42, %c0_43] : memref<27x8x8xbf16, #tpu.memory_space<vmem>>, vector<1x8x8xbf16>
    %46 = vector.shape_cast %45 : vector<1x8x8xbf16> to vector<8x8xbf16>
    %cst_44 = arith.constant dense<0.000000e+00> : vector<8x216xf32>
    %47 = tpu.matmul %46, %44, %cst_44 {dimension_numbers = #tpu.dot_dimension_numbers<[1], [0], [0], [1], [0, 0, 1, 1], [], []>} : vector<8x8xbf16>, vector<8x216xbf16>, vector<8x216xf32> -> vector<8x216xf32>
    %48 = arith.addf %42, %47 : vector<8x216xf32>
    %c0_45 = arith.constant 0 : index
    %c0_46 = arith.constant 0 : index
    %c14 = arith.constant 14 : index
    %49 = vector.load %arg3[%c0_45, %c0_46, %c14] : memref<1x8x302xbf16, #tpu.memory_space<vmem>>, vector<1x8x216xbf16>
    %50 = vector.shape_cast %49 : vector<1x8x216xbf16> to vector<8x216xbf16>
    %c8_47 = arith.constant 8 : index
    %c0_48 = arith.constant 0 : index
    %c0_49 = arith.constant 0 : index
    %51 = vector.load %arg1[%c8_47, %c0_48, %c0_49] : memref<27x8x8xbf16, #tpu.memory_space<vmem>>, vector<1x8x8xbf16>
    %52 = vector.shape_cast %51 : vector<1x8x8xbf16> to vector<8x8xbf16>
    %cst_50 = arith.constant dense<0.000000e+00> : vector<8x216xf32>
    %53 = tpu.matmul %52, %50, %cst_50 {dimension_numbers = #tpu.dot_dimension_numbers<[1], [0], [0], [1], [0, 0, 1, 1], [], []>} : vector<8x8xbf16>, vector<8x216xbf16>, vector<8x216xf32> -> vector<8x216xf32>
    %54 = arith.addf %48, %53 : vector<8x216xf32>
    %c0_51 = arith.constant 0 : index
    %c0_52 = arith.constant 0 : index
    %c36 = arith.constant 36 : index
    %55 = vector.load %arg3[%c0_51, %c0_52, %c36] : memref<1x8x302xbf16, #tpu.memory_space<vmem>>, vector<1x8x216xbf16>
    %56 = vector.shape_cast %55 : vector<1x8x216xbf16> to vector<8x216xbf16>
    %c9 = arith.constant 9 : index
    %c0_53 = arith.constant 0 : index
    %c0_54 = arith.constant 0 : index
    %57 = vector.load %arg1[%c9, %c0_53, %c0_54] : memref<27x8x8xbf16, #tpu.memory_space<vmem>>, vector<1x8x8xbf16>
    %58 = vector.shape_cast %57 : vector<1x8x8xbf16> to vector<8x8xbf16>
    %cst_55 = arith.constant dense<0.000000e+00> : vector<8x216xf32>
    %59 = tpu.matmul %58, %56, %cst_55 {dimension_numbers = #tpu.dot_dimension_numbers<[1], [0], [0], [1], [0, 0, 1, 1], [], []>} : vector<8x8xbf16>, vector<8x216xbf16>, vector<8x216xf32> -> vector<8x216xf32>
    %60 = arith.addf %54, %59 : vector<8x216xf32>
    %c0_56 = arith.constant 0 : index
    %c0_57 = arith.constant 0 : index
    %c37 = arith.constant 37 : index
    %61 = vector.load %arg3[%c0_56, %c0_57, %c37] : memref<1x8x302xbf16, #tpu.memory_space<vmem>>, vector<1x8x216xbf16>
    %62 = vector.shape_cast %61 : vector<1x8x216xbf16> to vector<8x216xbf16>
    %c10 = arith.constant 10 : index
    %c0_58 = arith.constant 0 : index
    %c0_59 = arith.constant 0 : index
    %63 = vector.load %arg1[%c10, %c0_58, %c0_59] : memref<27x8x8xbf16, #tpu.memory_space<vmem>>, vector<1x8x8xbf16>
    %64 = vector.shape_cast %63 : vector<1x8x8xbf16> to vector<8x8xbf16>
    %cst_60 = arith.constant dense<0.000000e+00> : vector<8x216xf32>
    %65 = tpu.matmul %64, %62, %cst_60 {dimension_numbers = #tpu.dot_dimension_numbers<[1], [0], [0], [1], [0, 0, 1, 1], [], []>} : vector<8x8xbf16>, vector<8x216xbf16>, vector<8x216xf32> -> vector<8x216xf32>
    %66 = arith.addf %60, %65 : vector<8x216xf32>
    %c0_61 = arith.constant 0 : index
    %c0_62 = arith.constant 0 : index
    %c38 = arith.constant 38 : index
    %67 = vector.load %arg3[%c0_61, %c0_62, %c38] : memref<1x8x302xbf16, #tpu.memory_space<vmem>>, vector<1x8x216xbf16>
    %68 = vector.shape_cast %67 : vector<1x8x216xbf16> to vector<8x216xbf16>
    %c11 = arith.constant 11 : index
    %c0_63 = arith.constant 0 : index
    %c0_64 = arith.constant 0 : index
    %69 = vector.load %arg1[%c11, %c0_63, %c0_64] : memref<27x8x8xbf16, #tpu.memory_space<vmem>>, vector<1x8x8xbf16>
    %70 = vector.shape_cast %69 : vector<1x8x8xbf16> to vector<8x8xbf16>
    %cst_65 = arith.constant dense<0.000000e+00> : vector<8x216xf32>
    %71 = tpu.matmul %70, %68, %cst_65 {dimension_numbers = #tpu.dot_dimension_numbers<[1], [0], [0], [1], [0, 0, 1, 1], [], []>} : vector<8x8xbf16>, vector<8x216xbf16>, vector<8x216xf32> -> vector<8x216xf32>
    %72 = arith.addf %66, %71 : vector<8x216xf32>
    %c0_66 = arith.constant 0 : index
    %c0_67 = arith.constant 0 : index
    %c42 = arith.constant 42 : index
    %73 = vector.load %arg3[%c0_66, %c0_67, %c42] : memref<1x8x302xbf16, #tpu.memory_space<vmem>>, vector<1x8x216xbf16>
    %74 = vector.shape_cast %73 : vector<1x8x216xbf16> to vector<8x216xbf16>
    %c12_68 = arith.constant 12 : index
    %c0_69 = arith.constant 0 : index
    %c0_70 = arith.constant 0 : index
    %75 = vector.load %arg1[%c12_68, %c0_69, %c0_70] : memref<27x8x8xbf16, #tpu.memory_space<vmem>>, vector<1x8x8xbf16>
    %76 = vector.shape_cast %75 : vector<1x8x8xbf16> to vector<8x8xbf16>
    %cst_71 = arith.constant dense<0.000000e+00> : vector<8x216xf32>
    %77 = tpu.matmul %76, %74, %cst_71 {dimension_numbers = #tpu.dot_dimension_numbers<[1], [0], [0], [1], [0, 0, 1, 1], [], []>} : vector<8x8xbf16>, vector<8x216xbf16>, vector<8x216xf32> -> vector<8x216xf32>
    %78 = arith.addf %72, %77 : vector<8x216xf32>
    %c0_72 = arith.constant 0 : index
    %c0_73 = arith.constant 0 : index
    %c43 = arith.constant 43 : index
    %79 = vector.load %arg3[%c0_72, %c0_73, %c43] : memref<1x8x302xbf16, #tpu.memory_space<vmem>>, vector<1x8x216xbf16>
    %80 = vector.shape_cast %79 : vector<1x8x216xbf16> to vector<8x216xbf16>
    %c13_74 = arith.constant 13 : index
    %c0_75 = arith.constant 0 : index
    %c0_76 = arith.constant 0 : index
    %81 = vector.load %arg1[%c13_74, %c0_75, %c0_76] : memref<27x8x8xbf16, #tpu.memory_space<vmem>>, vector<1x8x8xbf16>
    %82 = vector.shape_cast %81 : vector<1x8x8xbf16> to vector<8x8xbf16>
    %cst_77 = arith.constant dense<0.000000e+00> : vector<8x216xf32>
    %83 = tpu.matmul %82, %80, %cst_77 {dimension_numbers = #tpu.dot_dimension_numbers<[1], [0], [0], [1], [0, 0, 1, 1], [], []>} : vector<8x8xbf16>, vector<8x216xbf16>, vector<8x216xf32> -> vector<8x216xf32>
    %84 = arith.addf %78, %83 : vector<8x216xf32>
    %c0_78 = arith.constant 0 : index
    %c0_79 = arith.constant 0 : index
    %c44 = arith.constant 44 : index
    %85 = vector.load %arg3[%c0_78, %c0_79, %c44] : memref<1x8x302xbf16, #tpu.memory_space<vmem>>, vector<1x8x216xbf16>
    %86 = vector.shape_cast %85 : vector<1x8x216xbf16> to vector<8x216xbf16>
    %c14_80 = arith.constant 14 : index
    %c0_81 = arith.constant 0 : index
    %c0_82 = arith.constant 0 : index
    %87 = vector.load %arg1[%c14_80, %c0_81, %c0_82] : memref<27x8x8xbf16, #tpu.memory_space<vmem>>, vector<1x8x8xbf16>
    %88 = vector.shape_cast %87 : vector<1x8x8xbf16> to vector<8x8xbf16>
    %cst_83 = arith.constant dense<0.000000e+00> : vector<8x216xf32>
    %89 = tpu.matmul %88, %86, %cst_83 {dimension_numbers = #tpu.dot_dimension_numbers<[1], [0], [0], [1], [0, 0, 1, 1], [], []>} : vector<8x8xbf16>, vector<8x216xbf16>, vector<8x216xf32> -> vector<8x216xf32>
    %90 = arith.addf %84, %89 : vector<8x216xf32>
    %c0_84 = arith.constant 0 : index
    %c0_85 = arith.constant 0 : index
    %c48 = arith.constant 48 : index
    %91 = vector.load %arg3[%c0_84, %c0_85, %c48] : memref<1x8x302xbf16, #tpu.memory_space<vmem>>, vector<1x8x216xbf16>
    %92 = vector.shape_cast %91 : vector<1x8x216xbf16> to vector<8x216xbf16>
    %c15 = arith.constant 15 : index
    %c0_86 = arith.constant 0 : index
    %c0_87 = arith.constant 0 : index
    %93 = vector.load %arg1[%c15, %c0_86, %c0_87] : memref<27x8x8xbf16, #tpu.memory_space<vmem>>, vector<1x8x8xbf16>
    %94 = vector.shape_cast %93 : vector<1x8x8xbf16> to vector<8x8xbf16>
    %cst_88 = arith.constant dense<0.000000e+00> : vector<8x216xf32>
    %95 = tpu.matmul %94, %92, %cst_88 {dimension_numbers = #tpu.dot_dimension_numbers<[1], [0], [0], [1], [0, 0, 1, 1], [], []>} : vector<8x8xbf16>, vector<8x216xbf16>, vector<8x216xf32> -> vector<8x216xf32>
    %96 = arith.addf %90, %95 : vector<8x216xf32>
    %c0_89 = arith.constant 0 : index
    %c0_90 = arith.constant 0 : index
    %c49 = arith.constant 49 : index
    %97 = vector.load %arg3[%c0_89, %c0_90, %c49] : memref<1x8x302xbf16, #tpu.memory_space<vmem>>, vector<1x8x216xbf16>
    %98 = vector.shape_cast %97 : vector<1x8x216xbf16> to vector<8x216xbf16>
    %c16 = arith.constant 16 : index
    %c0_91 = arith.constant 0 : index
    %c0_92 = arith.constant 0 : index
    %99 = vector.load %arg1[%c16, %c0_91, %c0_92] : memref<27x8x8xbf16, #tpu.memory_space<vmem>>, vector<1x8x8xbf16>
    %100 = vector.shape_cast %99 : vector<1x8x8xbf16> to vector<8x8xbf16>
    %cst_93 = arith.constant dense<0.000000e+00> : vector<8x216xf32>
    %101 = tpu.matmul %100, %98, %cst_93 {dimension_numbers = #tpu.dot_dimension_numbers<[1], [0], [0], [1], [0, 0, 1, 1], [], []>} : vector<8x8xbf16>, vector<8x216xbf16>, vector<8x216xf32> -> vector<8x216xf32>
    %102 = arith.addf %96, %101 : vector<8x216xf32>
    %c0_94 = arith.constant 0 : index
    %c0_95 = arith.constant 0 : index
    %c50 = arith.constant 50 : index
    %103 = vector.load %arg3[%c0_94, %c0_95, %c50] : memref<1x8x302xbf16, #tpu.memory_space<vmem>>, vector<1x8x216xbf16>
    %104 = vector.shape_cast %103 : vector<1x8x216xbf16> to vector<8x216xbf16>
    %c17 = arith.constant 17 : index
    %c0_96 = arith.constant 0 : index
    %c0_97 = arith.constant 0 : index
    %105 = vector.load %arg1[%c17, %c0_96, %c0_97] : memref<27x8x8xbf16, #tpu.memory_space<vmem>>, vector<1x8x8xbf16>
    %106 = vector.shape_cast %105 : vector<1x8x8xbf16> to vector<8x8xbf16>
    %cst_98 = arith.constant dense<0.000000e+00> : vector<8x216xf32>
    %107 = tpu.matmul %106, %104, %cst_98 {dimension_numbers = #tpu.dot_dimension_numbers<[1], [0], [0], [1], [0, 0, 1, 1], [], []>} : vector<8x8xbf16>, vector<8x216xbf16>, vector<8x216xf32> -> vector<8x216xf32>
    %108 = arith.addf %102, %107 : vector<8x216xf32>
    %c0_99 = arith.constant 0 : index
    %c0_100 = arith.constant 0 : index
    %c72 = arith.constant 72 : index
    %109 = vector.load %arg3[%c0_99, %c0_100, %c72] : memref<1x8x302xbf16, #tpu.memory_space<vmem>>, vector<1x8x216xbf16>
    %110 = vector.shape_cast %109 : vector<1x8x216xbf16> to vector<8x216xbf16>
    %c18 = arith.constant 18 : index
    %c0_101 = arith.constant 0 : index
    %c0_102 = arith.constant 0 : index
    %111 = vector.load %arg1[%c18, %c0_101, %c0_102] : memref<27x8x8xbf16, #tpu.memory_space<vmem>>, vector<1x8x8xbf16>
    %112 = vector.shape_cast %111 : vector<1x8x8xbf16> to vector<8x8xbf16>
    %cst_103 = arith.constant dense<0.000000e+00> : vector<8x216xf32>
    %113 = tpu.matmul %112, %110, %cst_103 {dimension_numbers = #tpu.dot_dimension_numbers<[1], [0], [0], [1], [0, 0, 1, 1], [], []>} : vector<8x8xbf16>, vector<8x216xbf16>, vector<8x216xf32> -> vector<8x216xf32>
    %114 = arith.addf %108, %113 : vector<8x216xf32>
    %c0_104 = arith.constant 0 : index
    %c0_105 = arith.constant 0 : index
    %c73 = arith.constant 73 : index
    %115 = vector.load %arg3[%c0_104, %c0_105, %c73] : memref<1x8x302xbf16, #tpu.memory_space<vmem>>, vector<1x8x216xbf16>
    %116 = vector.shape_cast %115 : vector<1x8x216xbf16> to vector<8x216xbf16>
    %c19 = arith.constant 19 : index
    %c0_106 = arith.constant 0 : index
    %c0_107 = arith.constant 0 : index
    %117 = vector.load %arg1[%c19, %c0_106, %c0_107] : memref<27x8x8xbf16, #tpu.memory_space<vmem>>, vector<1x8x8xbf16>
    %118 = vector.shape_cast %117 : vector<1x8x8xbf16> to vector<8x8xbf16>
    %cst_108 = arith.constant dense<0.000000e+00> : vector<8x216xf32>
    %119 = tpu.matmul %118, %116, %cst_108 {dimension_numbers = #tpu.dot_dimension_numbers<[1], [0], [0], [1], [0, 0, 1, 1], [], []>} : vector<8x8xbf16>, vector<8x216xbf16>, vector<8x216xf32> -> vector<8x216xf32>
    %120 = arith.addf %114, %119 : vector<8x216xf32>
    %c0_109 = arith.constant 0 : index
    %c0_110 = arith.constant 0 : index
    %c74 = arith.constant 74 : index
    %121 = vector.load %arg3[%c0_109, %c0_110, %c74] : memref<1x8x302xbf16, #tpu.memory_space<vmem>>, vector<1x8x216xbf16>
    %122 = vector.shape_cast %121 : vector<1x8x216xbf16> to vector<8x216xbf16>
    %c20 = arith.constant 20 : index
    %c0_111 = arith.constant 0 : index
    %c0_112 = arith.constant 0 : index
    %123 = vector.load %arg1[%c20, %c0_111, %c0_112] : memref<27x8x8xbf16, #tpu.memory_space<vmem>>, vector<1x8x8xbf16>
    %124 = vector.shape_cast %123 : vector<1x8x8xbf16> to vector<8x8xbf16>
    %cst_113 = arith.constant dense<0.000000e+00> : vector<8x216xf32>
    %125 = tpu.matmul %124, %122, %cst_113 {dimension_numbers = #tpu.dot_dimension_numbers<[1], [0], [0], [1], [0, 0, 1, 1], [], []>} : vector<8x8xbf16>, vector<8x216xbf16>, vector<8x216xf32> -> vector<8x216xf32>
    %126 = arith.addf %120, %125 : vector<8x216xf32>
    %c0_114 = arith.constant 0 : index
    %c0_115 = arith.constant 0 : index
    %c78 = arith.constant 78 : index
    %127 = vector.load %arg3[%c0_114, %c0_115, %c78] : memref<1x8x302xbf16, #tpu.memory_space<vmem>>, vector<1x8x216xbf16>
    %128 = vector.shape_cast %127 : vector<1x8x216xbf16> to vector<8x216xbf16>
    %c21 = arith.constant 21 : index
    %c0_116 = arith.constant 0 : index
    %c0_117 = arith.constant 0 : index
    %129 = vector.load %arg1[%c21, %c0_116, %c0_117] : memref<27x8x8xbf16, #tpu.memory_space<vmem>>, vector<1x8x8xbf16>
    %130 = vector.shape_cast %129 : vector<1x8x8xbf16> to vector<8x8xbf16>
    %cst_118 = arith.constant dense<0.000000e+00> : vector<8x216xf32>
    %131 = tpu.matmul %130, %128, %cst_118 {dimension_numbers = #tpu.dot_dimension_numbers<[1], [0], [0], [1], [0, 0, 1, 1], [], []>} : vector<8x8xbf16>, vector<8x216xbf16>, vector<8x216xf32> -> vector<8x216xf32>
    %132 = arith.addf %126, %131 : vector<8x216xf32>
    %c0_119 = arith.constant 0 : index
    %c0_120 = arith.constant 0 : index
    %c79 = arith.constant 79 : index
    %133 = vector.load %arg3[%c0_119, %c0_120, %c79] : memref<1x8x302xbf16, #tpu.memory_space<vmem>>, vector<1x8x216xbf16>
    %134 = vector.shape_cast %133 : vector<1x8x216xbf16> to vector<8x216xbf16>
    %c22 = arith.constant 22 : index
    %c0_121 = arith.constant 0 : index
    %c0_122 = arith.constant 0 : index
    %135 = vector.load %arg1[%c22, %c0_121, %c0_122] : memref<27x8x8xbf16, #tpu.memory_space<vmem>>, vector<1x8x8xbf16>
    %136 = vector.shape_cast %135 : vector<1x8x8xbf16> to vector<8x8xbf16>
    %cst_123 = arith.constant dense<0.000000e+00> : vector<8x216xf32>
    %137 = tpu.matmul %136, %134, %cst_123 {dimension_numbers = #tpu.dot_dimension_numbers<[1], [0], [0], [1], [0, 0, 1, 1], [], []>} : vector<8x8xbf16>, vector<8x216xbf16>, vector<8x216xf32> -> vector<8x216xf32>
    %138 = arith.addf %132, %137 : vector<8x216xf32>
    %c0_124 = arith.constant 0 : index
    %c0_125 = arith.constant 0 : index
    %c80 = arith.constant 80 : index
    %139 = vector.load %arg3[%c0_124, %c0_125, %c80] : memref<1x8x302xbf16, #tpu.memory_space<vmem>>, vector<1x8x216xbf16>
    %140 = vector.shape_cast %139 : vector<1x8x216xbf16> to vector<8x216xbf16>
    %c23 = arith.constant 23 : index
    %c0_126 = arith.constant 0 : index
    %c0_127 = arith.constant 0 : index
    %141 = vector.load %arg1[%c23, %c0_126, %c0_127] : memref<27x8x8xbf16, #tpu.memory_space<vmem>>, vector<1x8x8xbf16>
    %142 = vector.shape_cast %141 : vector<1x8x8xbf16> to vector<8x8xbf16>
    %cst_128 = arith.constant dense<0.000000e+00> : vector<8x216xf32>
    %143 = tpu.matmul %142, %140, %cst_128 {dimension_numbers = #tpu.dot_dimension_numbers<[1], [0], [0], [1], [0, 0, 1, 1], [], []>} : vector<8x8xbf16>, vector<8x216xbf16>, vector<8x216xf32> -> vector<8x216xf32>
    %144 = arith.addf %138, %143 : vector<8x216xf32>
    %c0_129 = arith.constant 0 : index
    %c0_130 = arith.constant 0 : index
    %c84 = arith.constant 84 : index
    %145 = vector.load %arg3[%c0_129, %c0_130, %c84] : memref<1x8x302xbf16, #tpu.memory_space<vmem>>, vector<1x8x216xbf16>
    %146 = vector.shape_cast %145 : vector<1x8x216xbf16> to vector<8x216xbf16>
    %c24 = arith.constant 24 : index
    %c0_131 = arith.constant 0 : index
    %c0_132 = arith.constant 0 : index
    %147 = vector.load %arg1[%c24, %c0_131, %c0_132] : memref<27x8x8xbf16, #tpu.memory_space<vmem>>, vector<1x8x8xbf16>
    %148 = vector.shape_cast %147 : vector<1x8x8xbf16> to vector<8x8xbf16>
    %cst_133 = arith.constant dense<0.000000e+00> : vector<8x216xf32>
    %149 = tpu.matmul %148, %146, %cst_133 {dimension_numbers = #tpu.dot_dimension_numbers<[1], [0], [0], [1], [0, 0, 1, 1], [], []>} : vector<8x8xbf16>, vector<8x216xbf16>, vector<8x216xf32> -> vector<8x216xf32>
    %150 = arith.addf %144, %149 : vector<8x216xf32>
    %c0_134 = arith.constant 0 : index
    %c0_135 = arith.constant 0 : index
    %c85 = arith.constant 85 : index
    %151 = vector.load %arg3[%c0_134, %c0_135, %c85] : memref<1x8x302xbf16, #tpu.memory_space<vmem>>, vector<1x8x216xbf16>
    %152 = vector.shape_cast %151 : vector<1x8x216xbf16> to vector<8x216xbf16>
    %c25 = arith.constant 25 : index
    %c0_136 = arith.constant 0 : index
    %c0_137 = arith.constant 0 : index
    %153 = vector.load %arg1[%c25, %c0_136, %c0_137] : memref<27x8x8xbf16, #tpu.memory_space<vmem>>, vector<1x8x8xbf16>
    %154 = vector.shape_cast %153 : vector<1x8x8xbf16> to vector<8x8xbf16>
    %cst_138 = arith.constant dense<0.000000e+00> : vector<8x216xf32>
    %155 = tpu.matmul %154, %152, %cst_138 {dimension_numbers = #tpu.dot_dimension_numbers<[1], [0], [0], [1], [0, 0, 1, 1], [], []>} : vector<8x8xbf16>, vector<8x216xbf16>, vector<8x216xf32> -> vector<8x216xf32>
    %156 = arith.addf %150, %155 : vector<8x216xf32>
    %c0_139 = arith.constant 0 : index
    %c0_140 = arith.constant 0 : index
    %c86 = arith.constant 86 : index
    %157 = vector.load %arg3[%c0_139, %c0_140, %c86] : memref<1x8x302xbf16, #tpu.memory_space<vmem>>, vector<1x8x216xbf16>
    %158 = vector.shape_cast %157 : vector<1x8x216xbf16> to vector<8x216xbf16>
    %c26 = arith.constant 26 : index
    %c0_141 = arith.constant 0 : index
    %c0_142 = arith.constant 0 : index
    %159 = vector.load %arg1[%c26, %c0_141, %c0_142] : memref<27x8x8xbf16, #tpu.memory_space<vmem>>, vector<1x8x8xbf16>
    %160 = vector.shape_cast %159 : vector<1x8x8xbf16> to vector<8x8xbf16>
    %cst_143 = arith.constant dense<0.000000e+00> : vector<8x216xf32>
    %161 = tpu.matmul %160, %158, %cst_143 {dimension_numbers = #tpu.dot_dimension_numbers<[1], [0], [0], [1], [0, 0, 1, 1], [], []>} : vector<8x8xbf16>, vector<8x216xbf16>, vector<8x216xf32> -> vector<8x216xf32>
    %162 = arith.addf %156, %161 : vector<8x216xf32>
    %c0_144 = arith.constant 0 : index
    %c0_145 = arith.constant 0 : index
    %163 = vector.load %arg2[%c0_144, %c0_145] : memref<8x1xf32, #tpu.memory_space<vmem>>, vector<8x1xf32>
    %164 = vector.broadcast %163 : vector<8x1xf32> to vector<8x216xf32>
    %165 = arith.addf %162, %164 : vector<8x216xf32>
    %cst_146 = arith.constant 0.000000e+00 : f32
    %166 = vector.broadcast %cst_146 : f32 to vector<8x216xf32>
    %167 = arith.cmpf ogt, %165, %166 : vector<8x216xf32>
    %cst_147 = arith.constant 1.000000e-01 : f32
    %168 = vector.broadcast %cst_147 : f32 to vector<8x216xf32>
    %169 = arith.mulf %168, %165 : vector<8x216xf32>
    %170 = arith.select %167, %165, %169 : vector<8x216xi1>, vector<8x216xf32>
    %171 = arith.truncf %170 : vector<8x216xf32> to vector<8x216xbf16>
    %c0_148 = arith.constant 0 : index
    %c0_149 = arith.constant 0 : index
    %c0_150 = arith.constant 0 : index
    %172 = vector.load %arg4[%c0_148, %c0_149, %c0_150] : memref<1x8x216xbf16, #tpu.memory_space<vmem>>, vector<1x8x216xbf16>
    %173 = vector.shape_cast %172 : vector<1x8x216xbf16> to vector<8x216xbf16>
    %174 = vector.shape_cast %171 : vector<8x216xbf16> to vector<1x8x216xbf16>
    tpu.vector_store %arg4[%c0_148, %c0_149, %c0_150], %174 {strides = array<i32>} : memref<1x8x216xbf16, #tpu.memory_space<vmem>>, vector<1x8x216xbf16>,
    return
  }
  func.func @transform_0(%arg0: i32) -> (i32, i32, i32) {
    %c0_i32 = arith.constant 0 : i32
    %c0_i32_0 = arith.constant 0 : i32
    %c0_i32_1 = arith.constant 0 : i32
    %c0_i32_2 = arith.constant 0 : i32
    return %c0_i32, %c0_i32_0, %c0_i32_1 : i32, i32, i32
  }
  func.func @transform_1(%arg0: i32) -> (i32, i32) {
    %c0_i32 = arith.constant 0 : i32
    %c0_i32_0 = arith.constant 0 : i32
    %c0_i32_1 = arith.constant 0 : i32
    return %c0_i32, %c0_i32_0 : i32, i32
  }
  func.func @transform_2(%arg0: i32) -> (i32, i32, i32) {
    %c0_i32 = arith.constant 0 : i32
    %c0_i32_0 = arith.constant 0 : i32
    %c0_i32_1 = arith.constant 0 : i32
    return %arg0, %c0_i32, %c0_i32_0 : i32, i32, i32
  }
  func.func @transform_3(%arg0: i32) -> (i32, i32, i32) {
    %c0_i32 = arith.constant 0 : i32
    %c0_i32_0 = arith.constant 0 : i32
    %c0_i32_1 = arith.constant 0 : i32
    return %arg0, %c0_i32, %c0_i32_0 : i32, i32, i32
  }
}

module attributes {stable_mosaic.version = 11 : i64} {
  func.func @_sa_mlp_max_kernel(%arg0: i32, %arg1: memref<8x11xbf16, #tpu.memory_space<vmem>>, %arg2: memref<8x1xf32, #tpu.memory_space<vmem>>, %arg3: memref<16x8xbf16, #tpu.memory_space<vmem>>, %arg4: memref<16x1xf32, #tpu.memory_space<vmem>>, %arg5: memref<1x11x128xbf16, #tpu.memory_space<vmem>>, %arg6: memref<1x16x16xbf16, #tpu.memory_space<vmem>>) attributes {dimension_semantics = [#tpu.dimension_semantics<parallel>], iteration_bounds = array<i64: 2>, scalar_prefetch = 0 : i64, scratch_operands = 0 : i64, tpu.core_type = #tpu.core_type<tc>, window_params = [{pipeline_mode = #tpu.pipeline_mode<synchronous>, transform_indices = @transform_0, window_bounds = array<i64: 8, 11>}, {pipeline_mode = #tpu.pipeline_mode<synchronous>, transform_indices = @transform_1, window_bounds = array<i64: 8, 1>}, {pipeline_mode = #tpu.pipeline_mode<synchronous>, transform_indices = @transform_2, window_bounds = array<i64: 16, 8>}, {pipeline_mode = #tpu.pipeline_mode<synchronous>, transform_indices = @transform_3, window_bounds = array<i64: 16, 1>}, {transform_indices = @transform_4, window_bounds = array<i64: 1, 11, 128>}, {transform_indices = @transform_5, window_bounds = array<i64: 1, 16, 16>}]} {
    %c0 = arith.constant 0 : index
    %c0_0 = arith.constant 0 : index
    %c0_1 = arith.constant 0 : index
    %0 = vector.load %arg5[%c0, %c0_0, %c0_1] : memref<1x11x128xbf16, #tpu.memory_space<vmem>>, vector<1x11x128xbf16>
    %1 = vector.shape_cast %0 : vector<1x11x128xbf16> to vector<11x128xbf16>
    %c0_2 = arith.constant 0 : index
    %c0_3 = arith.constant 0 : index
    %2 = vector.load %arg1[%c0_2, %c0_3] : memref<8x11xbf16, #tpu.memory_space<vmem>>, vector<8x11xbf16>
    %c0_4 = arith.constant 0 : index
    %c0_5 = arith.constant 0 : index
    %3 = vector.load %arg2[%c0_4, %c0_5] : memref<8x1xf32, #tpu.memory_space<vmem>>, vector<8x1xf32>
    %cst = arith.constant dense<0.000000e+00> : vector<8x128xf32>
    %4 = tpu.matmul %2, %1, %cst {dimension_numbers = #tpu.dot_dimension_numbers<[1], [0], [0], [1], [0, 0, 1, 1], [], []>} : vector<8x11xbf16>, vector<11x128xbf16>, vector<8x128xf32> -> vector<8x128xf32>
    %5 = vector.broadcast %3 : vector<8x1xf32> to vector<8x128xf32>
    %6 = arith.addf %4, %5 : vector<8x128xf32>
    %cst_6 = arith.constant 0.000000e+00 : f32
    %7 = vector.broadcast %cst_6 : f32 to vector<8x128xf32>
    %8 = arith.maximumf %6, %7 : vector<8x128xf32>
    %9 = arith.truncf %8 : vector<8x128xf32> to vector<8x128xbf16>
    %c0_7 = arith.constant 0 : index
    %c0_8 = arith.constant 0 : index
    %10 = vector.load %arg3[%c0_7, %c0_8] : memref<16x8xbf16, #tpu.memory_space<vmem>>, vector<16x8xbf16>
    %c0_9 = arith.constant 0 : index
    %c0_10 = arith.constant 0 : index
    %11 = vector.load %arg4[%c0_9, %c0_10] : memref<16x1xf32, #tpu.memory_space<vmem>>, vector<16x1xf32>
    %cst_11 = arith.constant dense<0.000000e+00> : vector<16x128xf32>
    %12 = tpu.matmul %10, %9, %cst_11 {dimension_numbers = #tpu.dot_dimension_numbers<[1], [0], [0], [1], [0, 0, 1, 1], [], []>} : vector<16x8xbf16>, vector<8x128xbf16>, vector<16x128xf32> -> vector<16x128xf32>
    %13 = vector.broadcast %11 : vector<16x1xf32> to vector<16x128xf32>
    %14 = arith.addf %12, %13 : vector<16x128xf32>
    %cst_12 = arith.constant 0.000000e+00 : f32
    %15 = vector.broadcast %cst_12 : f32 to vector<16x128xf32>
    %16 = arith.maximumf %14, %15 : vector<16x128xf32>
    %17 = vector.extract_strided_slice %16 {offsets = [0, 0], sizes = [16, 16], strides = [1, 1]} : vector<16x128xf32> to vector<16x16xf32>
    %18 = vector.extract_strided_slice %16 {offsets = [0, 16], sizes = [16, 16], strides = [1, 1]} : vector<16x128xf32> to vector<16x16xf32>
    %19 = arith.maximumf %17, %18 : vector<16x16xf32>
    %20 = vector.extract_strided_slice %16 {offsets = [0, 32], sizes = [16, 16], strides = [1, 1]} : vector<16x128xf32> to vector<16x16xf32>
    %21 = arith.maximumf %19, %20 : vector<16x16xf32>
    %22 = vector.extract_strided_slice %16 {offsets = [0, 48], sizes = [16, 16], strides = [1, 1]} : vector<16x128xf32> to vector<16x16xf32>
    %23 = arith.maximumf %21, %22 : vector<16x16xf32>
    %24 = vector.extract_strided_slice %16 {offsets = [0, 64], sizes = [16, 16], strides = [1, 1]} : vector<16x128xf32> to vector<16x16xf32>
    %25 = arith.maximumf %23, %24 : vector<16x16xf32>
    %26 = vector.extract_strided_slice %16 {offsets = [0, 80], sizes = [16, 16], strides = [1, 1]} : vector<16x128xf32> to vector<16x16xf32>
    %27 = arith.maximumf %25, %26 : vector<16x16xf32>
    %28 = vector.extract_strided_slice %16 {offsets = [0, 96], sizes = [16, 16], strides = [1, 1]} : vector<16x128xf32> to vector<16x16xf32>
    %29 = arith.maximumf %27, %28 : vector<16x16xf32>
    %30 = vector.extract_strided_slice %16 {offsets = [0, 112], sizes = [16, 16], strides = [1, 1]} : vector<16x128xf32> to vector<16x16xf32>
    %31 = arith.maximumf %29, %30 : vector<16x16xf32>
    %32 = arith.truncf %31 : vector<16x16xf32> to vector<16x16xbf16>
    %c0_13 = arith.constant 0 : index
    %c0_14 = arith.constant 0 : index
    %c0_15 = arith.constant 0 : index
    %33 = vector.load %arg6[%c0_13, %c0_14, %c0_15] : memref<1x16x16xbf16, #tpu.memory_space<vmem>>, vector<1x16x16xbf16>
    %34 = vector.shape_cast %33 : vector<1x16x16xbf16> to vector<16x16xbf16>
    %35 = vector.shape_cast %32 : vector<16x16xbf16> to vector<1x16x16xbf16>
    tpu.vector_store %arg6[%c0_13, %c0_14, %c0_15], %35 {strides = array<i32>} : memref<1x16x16xbf16, #tpu.memory_space<vmem>>, vector<1x16x16xbf16>,
    return
  }
  func.func @transform_0(%arg0: i32) -> (i32, i32) {
    %c0_i32 = arith.constant 0 : i32
    %c0_i32_0 = arith.constant 0 : i32
    %c0_i32_1 = arith.constant 0 : i32
    return %c0_i32, %c0_i32_0 : i32, i32
  }
  func.func @transform_1(%arg0: i32) -> (i32, i32) {
    %c0_i32 = arith.constant 0 : i32
    %c0_i32_0 = arith.constant 0 : i32
    %c0_i32_1 = arith.constant 0 : i32
    return %c0_i32, %c0_i32_0 : i32, i32
  }
  func.func @transform_2(%arg0: i32) -> (i32, i32) {
    %c0_i32 = arith.constant 0 : i32
    %c0_i32_0 = arith.constant 0 : i32
    %c0_i32_1 = arith.constant 0 : i32
    return %c0_i32, %c0_i32_0 : i32, i32
  }
  func.func @transform_3(%arg0: i32) -> (i32, i32) {
    %c0_i32 = arith.constant 0 : i32
    %c0_i32_0 = arith.constant 0 : i32
    %c0_i32_1 = arith.constant 0 : i32
    return %c0_i32, %c0_i32_0 : i32, i32
  }
  func.func @transform_4(%arg0: i32) -> (i32, i32, i32) {
    %c0_i32 = arith.constant 0 : i32
    %c0_i32_0 = arith.constant 0 : i32
    %c0_i32_1 = arith.constant 0 : i32
    return %arg0, %c0_i32, %c0_i32_0 : i32, i32, i32
  }
  func.func @transform_5(%arg0: i32) -> (i32, i32, i32) {
    %c0_i32 = arith.constant 0 : i32
    %c0_i32_0 = arith.constant 0 : i32
    %c0_i32_1 = arith.constant 0 : i32
    return %arg0, %c0_i32, %c0_i32_0 : i32, i32, i32
  }
}

module attributes {stable_mosaic.version = 11 : i64} {
  func.func @_sa_mlp_max_kernel(%arg0: i32, %arg1: memref<16x19xbf16, #tpu.memory_space<vmem>>, %arg2: memref<16x1xf32, #tpu.memory_space<vmem>>, %arg3: memref<32x16xbf16, #tpu.memory_space<vmem>>, %arg4: memref<32x1xf32, #tpu.memory_space<vmem>>, %arg5: memref<1x19x32xbf16, #tpu.memory_space<vmem>>, %arg6: memref<1x32x4xbf16, #tpu.memory_space<vmem>>) attributes {dimension_semantics = [#tpu.dimension_semantics<parallel>], iteration_bounds = array<i64: 2>, scalar_prefetch = 0 : i64, scratch_operands = 0 : i64, tpu.core_type = #tpu.core_type<tc>, window_params = [{pipeline_mode = #tpu.pipeline_mode<synchronous>, transform_indices = @transform_0, window_bounds = array<i64: 16, 19>}, {pipeline_mode = #tpu.pipeline_mode<synchronous>, transform_indices = @transform_1, window_bounds = array<i64: 16, 1>}, {pipeline_mode = #tpu.pipeline_mode<synchronous>, transform_indices = @transform_2, window_bounds = array<i64: 32, 16>}, {pipeline_mode = #tpu.pipeline_mode<synchronous>, transform_indices = @transform_3, window_bounds = array<i64: 32, 1>}, {transform_indices = @transform_4, window_bounds = array<i64: 1, 19, 32>}, {transform_indices = @transform_5, window_bounds = array<i64: 1, 32, 4>}]} {
    %c0 = arith.constant 0 : index
    %c0_0 = arith.constant 0 : index
    %c0_1 = arith.constant 0 : index
    %0 = vector.load %arg5[%c0, %c0_0, %c0_1] : memref<1x19x32xbf16, #tpu.memory_space<vmem>>, vector<1x19x32xbf16>
    %1 = vector.shape_cast %0 : vector<1x19x32xbf16> to vector<19x32xbf16>
    %c0_2 = arith.constant 0 : index
    %c0_3 = arith.constant 0 : index
    %2 = vector.load %arg1[%c0_2, %c0_3] : memref<16x19xbf16, #tpu.memory_space<vmem>>, vector<16x19xbf16>
    %c0_4 = arith.constant 0 : index
    %c0_5 = arith.constant 0 : index
    %3 = vector.load %arg2[%c0_4, %c0_5] : memref<16x1xf32, #tpu.memory_space<vmem>>, vector<16x1xf32>
    %cst = arith.constant dense<0.000000e+00> : vector<16x32xf32>
    %4 = tpu.matmul %2, %1, %cst {dimension_numbers = #tpu.dot_dimension_numbers<[1], [0], [0], [1], [0, 0, 1, 1], [], []>} : vector<16x19xbf16>, vector<19x32xbf16>, vector<16x32xf32> -> vector<16x32xf32>
    %5 = vector.broadcast %3 : vector<16x1xf32> to vector<16x32xf32>
    %6 = arith.addf %4, %5 : vector<16x32xf32>
    %cst_6 = arith.constant 0.000000e+00 : f32
    %7 = vector.broadcast %cst_6 : f32 to vector<16x32xf32>
    %8 = arith.maximumf %6, %7 : vector<16x32xf32>
    %9 = arith.truncf %8 : vector<16x32xf32> to vector<16x32xbf16>
    %c0_7 = arith.constant 0 : index
    %c0_8 = arith.constant 0 : index
    %10 = vector.load %arg3[%c0_7, %c0_8] : memref<32x16xbf16, #tpu.memory_space<vmem>>, vector<32x16xbf16>
    %c0_9 = arith.constant 0 : index
    %c0_10 = arith.constant 0 : index
    %11 = vector.load %arg4[%c0_9, %c0_10] : memref<32x1xf32, #tpu.memory_space<vmem>>, vector<32x1xf32>
    %cst_11 = arith.constant dense<0.000000e+00> : vector<32x32xf32>
    %12 = tpu.matmul %10, %9, %cst_11 {dimension_numbers = #tpu.dot_dimension_numbers<[1], [0], [0], [1], [0, 0, 1, 1], [], []>} : vector<32x16xbf16>, vector<16x32xbf16>, vector<32x32xf32> -> vector<32x32xf32>
    %13 = vector.broadcast %11 : vector<32x1xf32> to vector<32x32xf32>
    %14 = arith.addf %12, %13 : vector<32x32xf32>
    %cst_12 = arith.constant 0.000000e+00 : f32
    %15 = vector.broadcast %cst_12 : f32 to vector<32x32xf32>
    %16 = arith.maximumf %14, %15 : vector<32x32xf32>
    %17 = vector.extract_strided_slice %16 {offsets = [0, 0], sizes = [32, 4], strides = [1, 1]} : vector<32x32xf32> to vector<32x4xf32>
    %18 = vector.extract_strided_slice %16 {offsets = [0, 4], sizes = [32, 4], strides = [1, 1]} : vector<32x32xf32> to vector<32x4xf32>
    %19 = arith.maximumf %17, %18 : vector<32x4xf32>
    %20 = vector.extract_strided_slice %16 {offsets = [0, 8], sizes = [32, 4], strides = [1, 1]} : vector<32x32xf32> to vector<32x4xf32>
    %21 = arith.maximumf %19, %20 : vector<32x4xf32>
    %22 = vector.extract_strided_slice %16 {offsets = [0, 12], sizes = [32, 4], strides = [1, 1]} : vector<32x32xf32> to vector<32x4xf32>
    %23 = arith.maximumf %21, %22 : vector<32x4xf32>
    %24 = vector.extract_strided_slice %16 {offsets = [0, 16], sizes = [32, 4], strides = [1, 1]} : vector<32x32xf32> to vector<32x4xf32>
    %25 = arith.maximumf %23, %24 : vector<32x4xf32>
    %26 = vector.extract_strided_slice %16 {offsets = [0, 20], sizes = [32, 4], strides = [1, 1]} : vector<32x32xf32> to vector<32x4xf32>
    %27 = arith.maximumf %25, %26 : vector<32x4xf32>
    %28 = vector.extract_strided_slice %16 {offsets = [0, 24], sizes = [32, 4], strides = [1, 1]} : vector<32x32xf32> to vector<32x4xf32>
    %29 = arith.maximumf %27, %28 : vector<32x4xf32>
    %30 = vector.extract_strided_slice %16 {offsets = [0, 28], sizes = [32, 4], strides = [1, 1]} : vector<32x32xf32> to vector<32x4xf32>
    %31 = arith.maximumf %29, %30 : vector<32x4xf32>
    %32 = arith.truncf %31 : vector<32x4xf32> to vector<32x4xbf16>
    %c0_13 = arith.constant 0 : index
    %c0_14 = arith.constant 0 : index
    %c0_15 = arith.constant 0 : index
    %33 = vector.load %arg6[%c0_13, %c0_14, %c0_15] : memref<1x32x4xbf16, #tpu.memory_space<vmem>>, vector<1x32x4xbf16>
    %34 = vector.shape_cast %33 : vector<1x32x4xbf16> to vector<32x4xbf16>
    %35 = vector.shape_cast %32 : vector<32x4xbf16> to vector<1x32x4xbf16>
    tpu.vector_store %arg6[%c0_13, %c0_14, %c0_15], %35 {strides = array<i32>} : memref<1x32x4xbf16, #tpu.memory_space<vmem>>, vector<1x32x4xbf16>,
    return
  }
  func.func @transform_0(%arg0: i32) -> (i32, i32) {
    %c0_i32 = arith.constant 0 : i32
    %c0_i32_0 = arith.constant 0 : i32
    %c0_i32_1 = arith.constant 0 : i32
    return %c0_i32, %c0_i32_0 : i32, i32
  }
  func.func @transform_1(%arg0: i32) -> (i32, i32) {
    %c0_i32 = arith.constant 0 : i32
    %c0_i32_0 = arith.constant 0 : i32
    %c0_i32_1 = arith.constant 0 : i32
    return %c0_i32, %c0_i32_0 : i32, i32
  }
  func.func @transform_2(%arg0: i32) -> (i32, i32) {
    %c0_i32 = arith.constant 0 : i32
    %c0_i32_0 = arith.constant 0 : i32
    %c0_i32_1 = arith.constant 0 : i32
    return %c0_i32, %c0_i32_0 : i32, i32
  }
  func.func @transform_3(%arg0: i32) -> (i32, i32) {
    %c0_i32 = arith.constant 0 : i32
    %c0_i32_0 = arith.constant 0 : i32
    %c0_i32_1 = arith.constant 0 : i32
    return %c0_i32, %c0_i32_0 : i32, i32
  }
  func.func @transform_4(%arg0: i32) -> (i32, i32, i32) {
    %c0_i32 = arith.constant 0 : i32
    %c0_i32_0 = arith.constant 0 : i32
    %c0_i32_1 = arith.constant 0 : i32
    return %arg0, %c0_i32, %c0_i32_0 : i32, i32, i32
  }
  func.func @transform_5(%arg0: i32) -> (i32, i32, i32) {
    %c0_i32 = arith.constant 0 : i32
    %c0_i32_0 = arith.constant 0 : i32
    %c0_i32_1 = arith.constant 0 : i32
    return %arg0, %c0_i32, %c0_i32_0 : i32, i32, i32
  }
}

</mosaic_0001>

<llo_original>
// kernel: custom-call.37
$region0: #{custom-call.37}
  %s0 = inlined_call_operand.vmem [shape: f32[2,16], index: 0, kind: output, shape index: {}]

// kernel: custom-call.36
$region0: #{custom-call.36}
  %s0 = inlined_call_operand.vmem [shape: f32[2,64], index: 0, kind: output, shape index: {}]

// kernel: _lambda_.7
$region0: #{_lambda_.7}
  #allocation0 [shape = 'u32[]', space=smem, size = 0x4, offset = 0x4, fixed_abs, tag = 'smem constant byte address 0x4 - core index']
  #allocation1 [shape = 'u32[72,128]{1,0:T(1,128)}', space=vmem, size = 0x9000, scoped, tag = 'internal scratch']
  %s0 = inlined_call_operand.vmem [shape: bf16[8,9], index: 0, kind: input, shape index: {}]
  %s1 = inlined_call_operand.vmem [shape: f32[8,1], index: 1, kind: input, shape index: {}]
  %s2 = inlined_call_operand.vmem [shape: f32[2,9,64], index: 2, kind: input, shape index: {}]
  %s3 = inlined_call_operand.vmem [shape: bf16[2,8,64], index: 3, kind: output, shape index: {}]
  %s4 = sld [smem:[#allocation0]]
  $region45: #{_lambda_.7} parent=0
    _
  %s6 = ssub.s32 1, %s4
  %s7 = scalar_select 0, %s6, %s4
  loop: start=0, step=1, limit=4
  $region2: #{_lambda_.7} parent=0 // loop_pre_header
    _
  $region3: #{_lambda_.7} parent=0 // loop_header
    %s9 = sphi 0, %s13
    %p10 = scmp.ge.s32.totalorder %s9, 4
    %s16 = sphi 0, %s28
    %s17 = sphi 0, %s24
    %s18 = sphi 0, %s16
    %s19 = sphi 0, %s17
    %s20 = sphi 0, %s18
    %s21 = sphi 0, %s19
    %s29 = sphi 0, %s29
    %s31 = sphi 0, %s29
    %s32 = sphi 0, %s31
    %s46 = sphi 0, %s32
    %s50 = sphi 0, %s50
    %s52 = sphi 0, %s50
    %s53 = sphi 0, %s52
    %s67 = sphi 0, %s53
    %s75 = sphi 0, %s77
    %s78 = sphi 0, %s75
    %s79 = sphi 0, %s78
    %s95 = sphi 0, %s79
    %s103 = sphi 0, %s105
    %s106 = sphi 0, %s103
    %s107 = sphi 0, %s106
    %s123 = sphi 0, %s107
  $region4: #{_lambda_.7} parent=0 // loop_header_branch
    %12 = sbr.rel (%p10) target = $region8
  $region5: #{_lambda_.7} parent=0 // loop_body
    %s14 = ssub.s32 %s9, 1
    %s15 = ssub.s32 %s9, 2
    %s22 = sadd.s32 1, %s17
    %p23 = scmp.ge.s32.totalorder %s22, 1
    %s24 = scalar_select %p23, 0, %s22
    %s25 = sadd.s32 1, %s16
    %s26 = scalar_select %p23, %s25, %s16
    %p27 = scmp.ge.s32.totalorder %s26, 2
    %s28 = scalar_select %p27, 0, %s26
    %s30 = sadd.s32 %s29, 1
    %p33 = scmp.eq.s32.totalorder %s9, 1
    %p34 = scmp.ne.s32.totalorder %s29, %s31
    %p35 = scmp.eq.s32.totalorder %s9, 0
    %p36 = por %p34, %p35
    %p37 = scmp.ne.s32.totalorder %s29, %s31
    %p38 = scmp.eq.s32.totalorder %s14, 1
    %p39 = por %p37, %p38
    %p40 = scmp.ne.s32.totalorder %s31, %s32
    %p41 = scmp.eq.s32.totalorder %s14, 0
    %p42 = por %p40, %p41
    %p43 = scmp.ne.s32.totalorder %s31, %s32
    %p44 = scmp.eq.s32.totalorder %s15, 1
    %p45 = por %p43, %p44
    %p47 = scmp.ne.s32.totalorder %s32, %s46
    %p48 = scmp.eq.s32.totalorder %s15, 0
    %p49 = por %p47, %p48
    %s51 = sadd.s32 %s50, 1
    %p54 = scmp.eq.s32.totalorder %s9, 1
    %p55 = scmp.ne.s32.totalorder %s50, %s52
    %p56 = scmp.eq.s32.totalorder %s9, 0
    %p57 = por %p55, %p56
    %p58 = scmp.ne.s32.totalorder %s50, %s52
    %p59 = scmp.eq.s32.totalorder %s14, 1
    %p60 = por %p58, %p59
    %p61 = scmp.ne.s32.totalorder %s52, %s53
    %p62 = scmp.eq.s32.totalorder %s14, 0
    %p63 = por %p61, %p62
    %p64 = scmp.ne.s32.totalorder %s52, %s53
    %p65 = scmp.eq.s32.totalorder %s15, 1
    %p66 = por %p64, %p65
    %p68 = scmp.ne.s32.totalorder %s53, %s67
    %p69 = scmp.eq.s32.totalorder %s15, 0
    %p70 = por %p68, %p69
    %s71 = ssub.s32 %s16, %s28
    %s72 = ssub.s32 %s17, %s24
    %s73 = sor.u32 %s71, %s72
    %p74 = scmp.eq.s32.totalorder %s73, 0
    %s76 = sadd.s32 %s75, 1
    %s77 = scalar_select %p74, %s75, %s76
    %p80 = pneg %p74
    %p81 = scmp.eq.s32.totalorder %s9, 1
    %p82 = por %p80, %p81
    %p83 = scmp.ne.s32.totalorder %s75, %s78
    %p84 = scmp.eq.s32.totalorder %s9, 0
    %p85 = por %p83, %p84
    %p86 = scmp.ne.s32.totalorder %s75, %s78
    %p87 = scmp.eq.s32.totalorder %s14, 1
    %p88 = por %p86, %p87
    %p89 = scmp.ne.s32.totalorder %s78, %s79
    %p90 = scmp.eq.s32.totalorder %s14, 0
    %p91 = por %p89, %p90
    %p92 = scmp.ne.s32.totalorder %s78, %s79
    %p93 = scmp.eq.s32.totalorder %s15, 1
    %p94 = por %p92, %p93
    %p96 = scmp.ne.s32.totalorder %s79, %s95
    %p97 = scmp.eq.s32.totalorder %s15, 0
    %p98 = por %p96, %p97
    %s99 = ssub.s32 %s16, %s28
    %s100 = ssub.s32 %s17, %s24
    %s101 = sor.u32 %s99, %s100
    %p102 = scmp.eq.s32.totalorder %s101, 0
    %s104 = sadd.s32 %s103, 1
    %s105 = scalar_select %p102, %s103, %s104
    %p108 = pneg %p102
    %p109 = scmp.eq.s32.totalorder %s9, 1
    %p110 = por %p108, %p109
    %p111 = scmp.ne.s32.totalorder %s103, %s106
    %p112 = scmp.eq.s32.totalorder %s9, 0
    %p113 = por %p111, %p112
    %p114 = scmp.ne.s32.totalorder %s103, %s106
    %p115 = scmp.eq.s32.totalorder %s14, 1
    %p116 = por %p114, %p115
    %p117 = scmp.ne.s32.totalorder %s106, %s107
    %p118 = scmp.eq.s32.totalorder %s14, 0
    %p119 = por %p117, %p118
    %p120 = scmp.ne.s32.totalorder %s106, %s107
    %p121 = scmp.eq.s32.totalorder %s15, 1
    %p122 = por %p120, %p121
    %p124 = scmp.ne.s32.totalorder %s107, %s123
    %p125 = scmp.eq.s32.totalorder %s15, 0
    %p126 = por %p124, %p125
    %p127 = scmp.le.s32.totalorder 1, %s9
    %p128 = scmp.lt.s32.totalorder %s9, 3
    %p129 = pnand %p127, %p128
    %p130 = pneg %p129
    // Predicated region
    $region9: #{_lambda_.7} parent=5 // pred_check
      _
    $region10: #{_lambda_.7} parent=5 // pred_check_branch
      %132 = sbr.rel (%p129) target = $region12
    $region11: #{_lambda_.7} parent=5 // pred_region
      %s133 = ssub.s32 %s9, 1
      // Predicated region
      $region13: #{_lambda_.7} parent=11 // pred_check
        %p134 = pneg %p42
      $region14: #{_lambda_.7} parent=11 // pred_check_branch
        %136 = sbr.rel (%p134) target = $region16
      $region15: #{_lambda_.7} parent=11 // pred_region
        _
      $region16: #{_lambda_.7} parent=11 // pred_fallthru
        _
      // Predicated region
      $region17: #{_lambda_.7} parent=11 // pred_check
        %p137 = pneg %p63
      $region18: #{_lambda_.7} parent=11 // pred_check_branch
        %139 = sbr.rel (%p137) target = $region20
      $region19: #{_lambda_.7} parent=11 // pred_region
        _
      $region20: #{_lambda_.7} parent=11 // pred_fallthru
        _
    $region12: #{_lambda_.7} parent=5 // pred_fallthru
      _
    %p140 = scmp.lt.s32.totalorder %s9, 2
    // Predicated region
    $region21: #{_lambda_.7} parent=5 // pred_check
      %p141 = pneg %p140
    $region22: #{_lambda_.7} parent=5 // pred_check_branch
      %143 = sbr.rel (%p141) target = $region24
    $region23: #{_lambda_.7} parent=5 // pred_region
      // Predicated region
      $region25: #{_lambda_.7} parent=23 // pred_check
        %p144 = pneg %p85
      $region26: #{_lambda_.7} parent=23 // pred_check_branch
        %146 = sbr.rel (%p144) target = $region28
      $region27: #{_lambda_.7} parent=23 // pred_region
        %p147 = scmp.lt.s32.totalorder %s16, 1
        %s148 = scalar_select %p147, %s16, 1
        %p149 = scmp.lt.s32.totalorder %s17, 0
        %s150 = scalar_select %p149, %s17, 0
        %s151 = smul.addr %s148, 2
        %s152 = sadd.s32 %s150, %s151
        %s153 = smul.addr %s152, 8
        %s154 = scalar_lea.vmem %s2, %s153
      $region28: #{_lambda_.7} parent=23 // pred_fallthru
        _
    $region24: #{_lambda_.7} parent=5 // pred_fallthru
      _
    %p155 = scmp.le.s32.totalorder 1, %s9
    %p156 = scmp.lt.s32.totalorder %s9, 3
    %p157 = pnand %p155, %p156
    %p158 = pneg %p157
    // Predicated region
    $region29: #{_lambda_.7} parent=5 // pred_check
      _
    $region30: #{_lambda_.7} parent=5 // pred_check_branch
      %160 = sbr.rel (%p157) target = $region32
    $region31: #{_lambda_.7} parent=5 // pred_region
      %s161 = ssub.s32 %s9, 1
      %p162 = pneg %p42
      %p163 = pneg %p39
      %p164 = pneg %p63
      %p165 = pneg %p60
      %p166 = scmp.lt.s32.totalorder %s18, 1
      %s167 = scalar_select %p166, %s18, 1
      %p168 = scmp.lt.s32.totalorder %s19, 0
      %s169 = scalar_select %p168, %s19, 0
      %s170 = smul.addr %s167, 2
      %s171 = sadd.s32 %s169, %s170
      %s172 = smul.addr %s171, 8
      %s173 = scalar_lea.vmem %s2, %s172
      %p174 = pneg %p91
      %p175 = pneg %p88
      %p176 = pneg %p119
      %p177 = pneg %p116
      %p178 = scmp.lt.s32.totalorder %s18, 1
      %s179 = scalar_select %p178, %s18, 1
      %p180 = scmp.lt.s32.totalorder %s19, 0
      %s181 = scalar_select %p180, %s19, 0
      %s182 = sadd.s32 %s181, %s179
      %s183 = smul.addr %s182, 4
      %s184 = scalar_lea.vmem %s3, %s183
      %p185 = scmp.lt.s32.totalorder %s18, 1
      %s186 = scalar_select %p185, %s18, 1
      %p187 = scmp.lt.s32.totalorder %s19, 0
      %s188 = scalar_select %p187, %s19, 0
      %s189 = smul.addr %s186, 2
      %s190 = sadd.s32 %s188, %s189
      %s191 = smul.addr %s190, 8
      %s192 = scalar_lea.vmem %s2, %s191
      %p193 = scmp.lt.s32.totalorder %s18, 1
      %s194 = scalar_select %p193, %s18, 1
      %p195 = scmp.lt.s32.totalorder %s19, 0
      %s196 = scalar_select %p195, %s19, 0
      %s197 = sadd.s32 %s196, %s194
      %s198 = smul.addr %s197, 4
      %s199 = scalar_lea.vmem %s3, %s198
      %v201 = vld [vmem:[%s192] sm:$0xff]
      %v202 = vld [vmem:[%s192 + $0x8] sm:$0x1]
      %v203 = vpack.c.bf16 %v202, %v201
      %v204 = vld [vmem:[%s0] sm:$0xf]
      %v205 = vld [vmem:[%s1] sm:$0xff]
      %207 = vset.pattern.permute.xlu0 0
      %208 = vperm.xlu0 %207, %v205
      %v209 = vpop.permute.xlu0 %208
      %vm211 = vcmask 72704
      %v213 = vsel %vm211, %v204, 0
      %vm215 = vcmask 1043456
      %vm216 = vcmask 1044480
      %v217 = vsel %vm215, 4294967295, 65535
      %v218 = vsel %vm216, %v217, 0
      %v220 = vand.u32 %v203, %v218
      %222 = vmatpush.bf16.msra.mxu0 0
      %223 = vmatpush.bf16.msra.mxu0 0
      %224 = vmatpush.bf16.msra.mxu0 0
      %225 = vmatpush.bf16.msra.mxu0 0
      %226 = vmatpush.bf16.msra.mxu0 0
      %227 = vmatpush.bf16.msra.mxu0 0
      %228 = vmatpush.bf16.msra.mxu0 0
      %229 = vmatpush.bf16.msra.mxu0 %v220
      %230 = vmatmul.bf16.gmra.mxu0 %v213
      %v231 = vpop.f32.mrf.mxu0
      %v232 = vadd.f32 %v209, %v231
      %v233 = vpop.f32.mrf.mxu0
      %234 = vdwg.mxu0
      %v235 = vmax.f32 %v232, 0.0
      %v236 = vpack.c.bf16 %v235, %v235
      %vm237 = vcmask 519168
      %238 = vst.msk [vmem:[%s199] sm:$0xf] %vm237, %v236
      %p239 = scmp.lt.s32.totalorder %s18, 1
      %s240 = scalar_select %p239, %s18, 1
      %p241 = scmp.lt.s32.totalorder %s19, 0
      %s242 = scalar_select %p241, %s19, 0
      %s243 = sadd.s32 %s242, %s240
      %s244 = smul.addr %s243, 4
      %s245 = scalar_lea.vmem %s3, %s244
      // Predicated region
      $region33: #{_lambda_.7} parent=31 // pred_check
        %p246 = pneg %p116
      $region34: #{_lambda_.7} parent=31 // pred_check_branch
        %248 = sbr.rel (%p246) target = $region36
      $region35: #{_lambda_.7} parent=31 // pred_region
        _
      $region36: #{_lambda_.7} parent=31 // pred_fallthru
        _
    $region32: #{_lambda_.7} parent=5 // pred_fallthru
      _
    %p249 = scmp.le.s32.totalorder 2, %s9
    // Predicated region
    $region37: #{_lambda_.7} parent=5 // pred_check
      %p250 = pneg %p249
    $region38: #{_lambda_.7} parent=5 // pred_check_branch
      %252 = sbr.rel (%p250) target = $region40
    $region39: #{_lambda_.7} parent=5 // pred_region
      %s253 = ssub.s32 %s9, 2
      // Predicated region
      $region41: #{_lambda_.7} parent=39 // pred_check
        %p254 = pneg %p122
      $region42: #{_lambda_.7} parent=39 // pred_check_branch
        %256 = sbr.rel (%p254) target = $region44
      $region43: #{_lambda_.7} parent=39 // pred_region
        %p257 = scmp.lt.s32.totalorder %s20, 1
        %s258 = scalar_select %p257, %s20, 1
        %p259 = scmp.lt.s32.totalorder %s21, 0
        %s260 = scalar_select %p259, %s21, 0
        %s261 = sadd.s32 %s260, %s258
        %s262 = smul.addr %s261, 4
        %s263 = scalar_lea.vmem %s3, %s262
      $region44: #{_lambda_.7} parent=39 // pred_fallthru
        _
    $region40: #{_lambda_.7} parent=5 // pred_fallthru
      _
  $region6: #{_lambda_.7} parent=0 // loop_footer
    %s13 = sadd.s32 1, %s9
  $region7: #{_lambda_.7} parent=0 // loop_footer_branch
    %8 = sbr.rel target = $region3
  $region8: #{_lambda_.7} parent=0 // loop_exit
    _

// kernel: _lambda_.5
$region0: #{_lambda_.5}
  #allocation0 [shape = 'u32[]', space=smem, size = 0x4, offset = 0x4, fixed_abs, tag = 'smem constant byte address 0x4 - core index']
  #allocation1 [shape = 'u32[72,128]{1,0:T(1,128)}', space=vmem, size = 0x9000, scoped, tag = 'internal scratch']
  %s0 = inlined_call_operand.vmem [shape: bf16[27,8,9], index: 0, kind: input, shape index: {}]
  %s1 = inlined_call_operand.vmem [shape: f32[8,1], index: 1, kind: input, shape index: {}]
  %s2 = inlined_call_operand.vmem [shape: bf16[2,9,302], index: 2, kind: input, shape index: {}]
  %s3 = inlined_call_operand.vmem [shape: bf16[2,8,216], index: 3, kind: output, shape index: {}]
  %s4 = sld [smem:[#allocation0]]
  $region45: #{_lambda_.5} parent=0
    _
  %s6 = ssub.s32 1, %s4
  %s7 = scalar_select 0, %s6, %s4
  loop: start=0, step=1, limit=4
  $region2: #{_lambda_.5} parent=0 // loop_pre_header
    _
  $region3: #{_lambda_.5} parent=0 // loop_header
    %s9 = sphi 0, %s13
    %p10 = scmp.ge.s32.totalorder %s9, 4
    %s17 = sphi 0, %s17
    %s19 = sphi 0, %s17
    %s20 = sphi 0, %s19
    %s34 = sphi 0, %s20
    %s38 = sphi 0, %s38
    %s40 = sphi 0, %s38
    %s41 = sphi 0, %s40
    %s55 = sphi 0, %s41
    %s61 = sphi 0, %s63
    %s64 = sphi 0, %s61
    %s65 = sphi 0, %s64
    %s81 = sphi 0, %s65
    %s87 = sphi 0, %s89
    %s90 = sphi 0, %s87
    %s91 = sphi 0, %s90
    %s107 = sphi 0, %s91
  $region4: #{_lambda_.5} parent=0 // loop_header_branch
    %12 = sbr.rel (%p10) target = $region8
  $region5: #{_lambda_.5} parent=0 // loop_body
    %s14 = ssub.s32 %s9, 1
    %s15 = ssub.s32 %s9, 2
    %s16 = sadd.s32 %s9, 1
    %s18 = sadd.s32 %s17, 1
    %p21 = scmp.eq.s32.totalorder %s9, 1
    %p22 = scmp.ne.s32.totalorder %s17, %s19
    %p23 = scmp.eq.s32.totalorder %s9, 0
    %p24 = por %p22, %p23
    %p25 = scmp.ne.s32.totalorder %s17, %s19
    %p26 = scmp.eq.s32.totalorder %s14, 1
    %p27 = por %p25, %p26
    %p28 = scmp.ne.s32.totalorder %s19, %s20
    %p29 = scmp.eq.s32.totalorder %s14, 0
    %p30 = por %p28, %p29
    %p31 = scmp.ne.s32.totalorder %s19, %s20
    %p32 = scmp.eq.s32.totalorder %s15, 1
    %p33 = por %p31, %p32
    %p35 = scmp.ne.s32.totalorder %s20, %s34
    %p36 = scmp.eq.s32.totalorder %s15, 0
    %p37 = por %p35, %p36
    %s39 = sadd.s32 %s38, 1
    %p42 = scmp.eq.s32.totalorder %s9, 1
    %p43 = scmp.ne.s32.totalorder %s38, %s40
    %p44 = scmp.eq.s32.totalorder %s9, 0
    %p45 = por %p43, %p44
    %p46 = scmp.ne.s32.totalorder %s38, %s40
    %p47 = scmp.eq.s32.totalorder %s14, 1
    %p48 = por %p46, %p47
    %p49 = scmp.ne.s32.totalorder %s40, %s41
    %p50 = scmp.eq.s32.totalorder %s14, 0
    %p51 = por %p49, %p50
    %p52 = scmp.ne.s32.totalorder %s40, %s41
    %p53 = scmp.eq.s32.totalorder %s15, 1
    %p54 = por %p52, %p53
    %p56 = scmp.ne.s32.totalorder %s41, %s55
    %p57 = scmp.eq.s32.totalorder %s15, 0
    %p58 = por %p56, %p57
    %s59 = ssub.s32 %s9, %s16
    %p60 = scmp.eq.s32.totalorder %s59, 0
    %s62 = sadd.s32 %s61, 1
    %s63 = scalar_select %p60, %s61, %s62
    %p66 = pneg %p60
    %p67 = scmp.eq.s32.totalorder %s9, 1
    %p68 = por %p66, %p67
    %p69 = scmp.ne.s32.totalorder %s61, %s64
    %p70 = scmp.eq.s32.totalorder %s9, 0
    %p71 = por %p69, %p70
    %p72 = scmp.ne.s32.totalorder %s61, %s64
    %p73 = scmp.eq.s32.totalorder %s14, 1
    %p74 = por %p72, %p73
    %p75 = scmp.ne.s32.totalorder %s64, %s65
    %p76 = scmp.eq.s32.totalorder %s14, 0
    %p77 = por %p75, %p76
    %p78 = scmp.ne.s32.totalorder %s64, %s65
    %p79 = scmp.eq.s32.totalorder %s15, 1
    %p80 = por %p78, %p79
    %p82 = scmp.ne.s32.totalorder %s65, %s81
    %p83 = scmp.eq.s32.totalorder %s15, 0
    %p84 = por %p82, %p83
    %s85 = ssub.s32 %s9, %s16
    %p86 = scmp.eq.s32.totalorder %s85, 0
    %s88 = sadd.s32 %s87, 1
    %s89 = scalar_select %p86, %s87, %s88
    %p92 = pneg %p86
    %p93 = scmp.eq.s32.totalorder %s9, 1
    %p94 = por %p92, %p93
    %p95 = scmp.ne.s32.totalorder %s87, %s90
    %p96 = scmp.eq.s32.totalorder %s9, 0
    %p97 = por %p95, %p96
    %p98 = scmp.ne.s32.totalorder %s87, %s90
    %p99 = scmp.eq.s32.totalorder %s14, 1
    %p100 = por %p98, %p99
    %p101 = scmp.ne.s32.totalorder %s90, %s91
    %p102 = scmp.eq.s32.totalorder %s14, 0
    %p103 = por %p101, %p102
    %p104 = scmp.ne.s32.totalorder %s90, %s91
    %p105 = scmp.eq.s32.totalorder %s15, 1
    %p106 = por %p104, %p105
    %p108 = scmp.ne.s32.totalorder %s91, %s107
    %p109 = scmp.eq.s32.totalorder %s15, 0
    %p110 = por %p108, %p109
    %p111 = scmp.le.s32.totalorder 1, %s9
    %p112 = scmp.lt.s32.totalorder %s9, 3
    %p113 = pnand %p111, %p112
    %p114 = pneg %p113
    // Predicated region
    $region9: #{_lambda_.5} parent=5 // pred_check
      _
    $region10: #{_lambda_.5} parent=5 // pred_check_branch
      %116 = sbr.rel (%p113) target = $region12
    $region11: #{_lambda_.5} parent=5 // pred_region
      %s117 = ssub.s32 %s9, 1
      // Predicated region
      $region13: #{_lambda_.5} parent=11 // pred_check
        %p118 = pneg %p30
      $region14: #{_lambda_.5} parent=11 // pred_check_branch
        %120 = sbr.rel (%p118) target = $region16
      $region15: #{_lambda_.5} parent=11 // pred_region
        _
      $region16: #{_lambda_.5} parent=11 // pred_fallthru
        _
      // Predicated region
      $region17: #{_lambda_.5} parent=11 // pred_check
        %p121 = pneg %p51
      $region18: #{_lambda_.5} parent=11 // pred_check_branch
        %123 = sbr.rel (%p121) target = $region20
      $region19: #{_lambda_.5} parent=11 // pred_region
        _
      $region20: #{_lambda_.5} parent=11 // pred_fallthru
        _
    $region12: #{_lambda_.5} parent=5 // pred_fallthru
      _
    %p124 = scmp.lt.s32.totalorder %s9, 2
    // Predicated region
    $region21: #{_lambda_.5} parent=5 // pred_check
      %p125 = pneg %p124
    $region22: #{_lambda_.5} parent=5 // pred_check_branch
      %127 = sbr.rel (%p125) target = $region24
    $region23: #{_lambda_.5} parent=5 // pred_region
      // Predicated region
      $region25: #{_lambda_.5} parent=23 // pred_check
        %p128 = pneg %p71
      $region26: #{_lambda_.5} parent=23 // pred_check_branch
        %130 = sbr.rel (%p128) target = $region28
      $region27: #{_lambda_.5} parent=23 // pred_region
        %p131 = scmp.lt.s32.totalorder %s9, 1
        %s132 = scalar_select %p131, %s9, 1
        %s133 = smul.addr %s132, 6
        %s134 = smul.addr %s133, 4
        %s135 = scalar_lea.vmem %s2, %s134
      $region28: #{_lambda_.5} parent=23 // pred_fallthru
        _
    $region24: #{_lambda_.5} parent=5 // pred_fallthru
      _
    %p136 = scmp.le.s32.totalorder 1, %s9
    %p137 = scmp.lt.s32.totalorder %s9, 3
    %p138 = pnand %p136, %p137
    %p139 = pneg %p138
    // Predicated region
    $region29: #{_lambda_.5} parent=5 // pred_check
      _
    $region30: #{_lambda_.5} parent=5 // pred_check_branch
      %141 = sbr.rel (%p138) target = $region32
    $region31: #{_lambda_.5} parent=5 // pred_region
      %s142 = ssub.s32 %s9, 1
      %p143 = pneg %p30
      %p144 = pneg %p27
      %p145 = pneg %p51
      %p146 = pneg %p48
      %p147 = scmp.lt.s32.totalorder %s14, 1
      %s148 = scalar_select %p147, %s14, 1
      %s149 = smul.addr %s148, 6
      %s150 = smul.addr %s149, 4
      %s151 = scalar_lea.vmem %s2, %s150
      %p152 = pneg %p77
      %p153 = pneg %p74
      %p154 = pneg %p103
      %p155 = pneg %p100
      %p156 = scmp.lt.s32.totalorder %s14, 1
      %s157 = scalar_select %p156, %s14, 1
      %s158 = smul.addr %s157, 2
      %s159 = smul.addr %s158, 4
      %s160 = scalar_lea.vmem %s3, %s159
      %p161 = scmp.lt.s32.totalorder %s14, 1
      %s162 = scalar_select %p161, %s14, 1
      %s163 = smul.addr %s162, 6
      %s164 = smul.addr %s163, 4
      %s165 = scalar_lea.vmem %s2, %s164
      %p166 = scmp.lt.s32.totalorder %s14, 1
      %s167 = scalar_select %p166, %s14, 1
      %s168 = smul.addr %s167, 2
      %s169 = smul.addr %s168, 4
      %s170 = scalar_lea.vmem %s3, %s169
      %v172 = vld [vmem:[%s165] sm:$0xff]
      %v173 = vld [vmem:[%s165 + $0xc] sm:$0x11]
      %v174 = vld [vmem:[%s0] sm:$0xf]
      %s175 = scalar_lea.vmem %s0, 4
      %v176 = vld [vmem:[%s175] sm:$0xf]
      %v179 = vunpack.c.l.b16 %v172
      %v180 = vunpack.c.h.b16 %v172
      %v181 = vunpack.c.l.b16 %v173
      %v182 = vunpack.c.h.b16 %v173
      %v183 = vpack.c.b16 %v181, %v179
      %v184 = vpack.c.b16 %v182, %v180
      %185 = vrot.lane.b32.xlu0 %v183, 127
      %v186 = vpop.permute.xlu0 %185
      %187 = vrot.lane.b32.xlu0 %v184, 127
      %v188 = vpop.permute.xlu0 %187
      %vm189 = vcmask 1039360
      %v190 = vsel %vm189, %v186, %v188
      %vm191 = vcmask 72704
      %v193 = vsel %vm191, %v176, 0
      %vm195 = vcmask 1043456
      %vm196 = vcmask 1044480
      %v197 = vsel %vm195, 4294967295, 65535
      %v198 = vsel %vm196, %v197, 0
      %v200 = vand.u32 %v190, %v198
      %v203 = vand.u32 %v188, %v198
      %205 = vmatpush.bf16.msra.mxu0 0
      %206 = vmatpush.bf16.msra.mxu0 0
      %207 = vmatpush.bf16.msra.mxu0 0
      %208 = vmatpush.bf16.msra.mxu0 0
      %209 = vmatpush.bf16.msra.mxu0 0
      %210 = vmatpush.bf16.msra.mxu0 0
      %211 = vmatpush.bf16.msra.mxu0 0
      %212 = vmatpush.bf16.msra.mxu0 %v200
      %213 = vmatmul.bf16.gmra.mxu0 %v193
      %v214 = vpop.f32.mrf.mxu0
      %v215 = vadd.f32 0.0, %v214
      %v216 = vpop.f32.mrf.mxu0
      %217 = vdwg.mxu0
      %218 = vmatpush.bf16.msra.mxu0 0
      %219 = vmatpush.bf16.msra.mxu0 0
      %220 = vmatpush.bf16.msra.mxu0 0
      %221 = vmatpush.bf16.msra.mxu0 0
      %222 = vmatpush.bf16.msra.mxu0 0
      %223 = vmatpush.bf16.msra.mxu0 0
      %224 = vmatpush.bf16.msra.mxu0 0
      %225 = vmatpush.bf16.msra.mxu0 %v203
      %226 = vmatmul.bf16.gmra.mxu0 %v193
      %v227 = vpop.f32.mrf.mxu0
      %v228 = vadd.f32 0.0, %v227
      %v229 = vpop.f32.mrf.mxu0
      %230 = vdwg.mxu0
      %v232 = vsel %vm191, %v174, 0
      %v235 = vand.u32 %v183, %v198
      %v238 = vand.u32 %v184, %v198
      %240 = vmatpush.bf16.msra.mxu0 0
      %241 = vmatpush.bf16.msra.mxu0 0
      %242 = vmatpush.bf16.msra.mxu0 0
      %243 = vmatpush.bf16.msra.mxu0 0
      %244 = vmatpush.bf16.msra.mxu0 0
      %245 = vmatpush.bf16.msra.mxu0 0
      %246 = vmatpush.bf16.msra.mxu0 0
      %247 = vmatpush.bf16.msra.mxu0 %v235
      %248 = vmatmul.bf16.gmra.mxu0 %v232
      %v249 = vpop.f32.mrf.mxu0
      %v250 = vadd.f32 %v215, %v249
      %v251 = vpop.f32.mrf.mxu0
      %252 = vdwg.mxu0
      %253 = vmatpush.bf16.msra.mxu0 0
      %254 = vmatpush.bf16.msra.mxu0 0
      %255 = vmatpush.bf16.msra.mxu0 0
      %256 = vmatpush.bf16.msra.mxu0 0
      %257 = vmatpush.bf16.msra.mxu0 0
      %258 = vmatpush.bf16.msra.mxu0 0
      %259 = vmatpush.bf16.msra.mxu0 0
      %260 = vmatpush.bf16.msra.mxu0 %v238
      %261 = vmatmul.bf16.gmra.mxu0 %v232
      %v262 = vpop.f32.mrf.mxu0
      %v263 = vadd.f32 %v228, %v262
      %v264 = vpop.f32.mrf.mxu0
      %265 = vdwg.mxu0
      %s266 = scalar_lea.vmem %s0, 8
      %v267 = vld [vmem:[%s266] sm:$0xf]
      %268 = vrot.lane.b32.xlu0 %v183, 126
      %v269 = vpop.permute.xlu0 %268
      %270 = vrot.lane.b32.xlu0 %v184, 126
      %v271 = vpop.permute.xlu0 %270
      %vm272 = vcmask 1031168
      %v273 = vsel %vm272, %v269, %v271
      %v275 = vsel %vm191, %v267, 0
      %v278 = vand.u32 %v273, %v198
      %v281 = vand.u32 %v271, %v198
      %283 = vmatpush.bf16.msra.mxu0 0
      %284 = vmatpush.bf16.msra.mxu0 0
      %285 = vmatpush.bf16.msra.mxu0 0
      %286 = vmatpush.bf16.msra.mxu0 0
      %287 = vmatpush.bf16.msra.mxu0 0
      %288 = vmatpush.bf16.msra.mxu0 0
      %289 = vmatpush.bf16.msra.mxu0 0
      %290 = vmatpush.bf16.msra.mxu0 %v278
      %291 = vmatmul.bf16.gmra.mxu0 %v275
      %v292 = vpop.f32.mrf.mxu0
      %v293 = vadd.f32 0.0, %v292
      %v294 = vpop.f32.mrf.mxu0
      %295 = vdwg.mxu0
      %296 = vmatpush.bf16.msra.mxu0 0
      %297 = vmatpush.bf16.msra.mxu0 0
      %298 = vmatpush.bf16.msra.mxu0 0
      %299 = vmatpush.bf16.msra.mxu0 0
      %300 = vmatpush.bf16.msra.mxu0 0
      %301 = vmatpush.bf16.msra.mxu0 0
      %302 = vmatpush.bf16.msra.mxu0 0
      %303 = vmatpush.bf16.msra.mxu0 %v281
      %304 = vmatmul.bf16.gmra.mxu0 %v275
      %v305 = vpop.f32.mrf.mxu0
      %v306 = vadd.f32 0.0, %v305
      %v307 = vpop.f32.mrf.mxu0
      %308 = vdwg.mxu0
      %v309 = vadd.f32 %v250, %v293
      %v310 = vadd.f32 %v263, %v306
      %s311 = scalar_lea.vmem %s0, 12
      %v312 = vld [vmem:[%s311] sm:$0xf]
      %313 = vrot.lane.b32.xlu0 %v183, 122
      %v314 = vpop.permute.xlu0 %313
      %315 = vrot.lane.b32.xlu0 %v184, 122
      %v316 = vpop.permute.xlu0 %315
      %vm317 = vcmask 998400
      %v318 = vsel %vm317, %v314, %v316
      %v320 = vsel %vm191, %v312, 0
      %v323 = vand.u32 %v318, %v198
      %v326 = vand.u32 %v316, %v198
      %328 = vmatpush.bf16.msra.mxu0 0
      %329 = vmatpush.bf16.msra.mxu0 0
      %330 = vmatpush.bf16.msra.mxu0 0
      %331 = vmatpush.bf16.msra.mxu0 0
      %332 = vmatpush.bf16.msra.mxu0 0
      %333 = vmatpush.bf16.msra.mxu0 0
      %334 = vmatpush.bf16.msra.mxu0 0
      %335 = vmatpush.bf16.msra.mxu0 %v323
      %336 = vmatmul.bf16.gmra.mxu0 %v320
      %v337 = vpop.f32.mrf.mxu0
      %v338 = vadd.f32 0.0, %v337
      %v339 = vpop.f32.mrf.mxu0
      %340 = vdwg.mxu0
      %341 = vmatpush.bf16.msra.mxu0 0
      %342 = vmatpush.bf16.msra.mxu0 0
      %343 = vmatpush.bf16.msra.mxu0 0
      %344 = vmatpush.bf16.msra.mxu0 0
      %345 = vmatpush.bf16.msra.mxu0 0
      %346 = vmatpush.bf16.msra.mxu0 0
      %347 = vmatpush.bf16.msra.mxu0 0
      %348 = vmatpush.bf16.msra.mxu0 %v326
      %349 = vmatmul.bf16.gmra.mxu0 %v320
      %v350 = vpop.f32.mrf.mxu0
      %v351 = vadd.f32 0.0, %v350
      %v352 = vpop.f32.mrf.mxu0
      %353 = vdwg.mxu0
      %v354 = vadd.f32 %v309, %v338
      %v355 = vadd.f32 %v310, %v351
      %s356 = scalar_lea.vmem %s0, 16
      %v357 = vld [vmem:[%s356] sm:$0xf]
      %358 = vrot.lane.b32.xlu0 %v183, 121
      %v359 = vpop.permute.xlu0 %358
      %360 = vrot.lane.b32.xlu0 %v184, 121
      %v361 = vpop.permute.xlu0 %360
      %vm362 = vcmask 990208
      %v363 = vsel %vm362, %v359, %v361
      %v365 = vsel %vm191, %v357, 0
      %v368 = vand.u32 %v363, %v198
      %v371 = vand.u32 %v361, %v198
      %373 = vmatpush.bf16.msra.mxu0 0
      %374 = vmatpush.bf16.msra.mxu0 0
      %375 = vmatpush.bf16.msra.mxu0 0
      %376 = vmatpush.bf16.msra.mxu0 0
      %377 = vmatpush.bf16.msra.mxu0 0
      %378 = vmatpush.bf16.msra.mxu0 0
      %379 = vmatpush.bf16.msra.mxu0 0
      %380 = vmatpush.bf16.msra.mxu0 %v368
      %381 = vmatmul.bf16.gmra.mxu0 %v365
      %v382 = vpop.f32.mrf.mxu0
      %v383 = vadd.f32 0.0, %v382
      %v384 = vpop.f32.mrf.mxu0
      %385 = vdwg.mxu0
      %386 = vmatpush.bf16.msra.mxu0 0
      %387 = vmatpush.bf16.msra.mxu0 0
      %388 = vmatpush.bf16.msra.mxu0 0
      %389 = vmatpush.bf16.msra.mxu0 0
      %390 = vmatpush.bf16.msra.mxu0 0
      %391 = vmatpush.bf16.msra.mxu0 0
      %392 = vmatpush.bf16.msra.mxu0 0
      %393 = vmatpush.bf16.msra.mxu0 %v371
      %394 = vmatmul.bf16.gmra.mxu0 %v365
      %v395 = vpop.f32.mrf.mxu0
      %v396 = vadd.f32 0.0, %v395
      %v397 = vpop.f32.mrf.mxu0
      %398 = vdwg.mxu0
      %v399 = vadd.f32 %v354, %v383
      %v400 = vadd.f32 %v355, %v396
      %s401 = scalar_lea.vmem %s0, 20
      %v402 = vld [vmem:[%s401] sm:$0xf]
      %403 = vrot.lane.b32.xlu0 %v183, 120
      %v404 = vpop.permute.xlu0 %403
      %405 = vrot.lane.b32.xlu0 %v184, 120
      %v406 = vpop.permute.xlu0 %405
      %vm407 = vcmask 982016
      %v408 = vsel %vm407, %v404, %v406
      %v410 = vsel %vm191, %v402, 0
      %v413 = vand.u32 %v408, %v198
      %v416 = vand.u32 %v406, %v198
      %418 = vmatpush.bf16.msra.mxu0 0
      %419 = vmatpush.bf16.msra.mxu0 0
      %420 = vmatpush.bf16.msra.mxu0 0
      %421 = vmatpush.bf16.msra.mxu0 0
      %422 = vmatpush.bf16.msra.mxu0 0
      %423 = vmatpush.bf16.msra.mxu0 0
      %424 = vmatpush.bf16.msra.mxu0 0
      %425 = vmatpush.bf16.msra.mxu0 %v413
      %426 = vmatmul.bf16.gmra.mxu0 %v410
      %v427 = vpop.f32.mrf.mxu0
      %v428 = vadd.f32 0.0, %v427
      %v429 = vpop.f32.mrf.mxu0
      %430 = vdwg.mxu0
      %431 = vmatpush.bf16.msra.mxu0 0
      %432 = vmatpush.bf16.msra.mxu0 0
      %433 = vmatpush.bf16.msra.mxu0 0
      %434 = vmatpush.bf16.msra.mxu0 0
      %435 = vmatpush.bf16.msra.mxu0 0
      %436 = vmatpush.bf16.msra.mxu0 0
      %437 = vmatpush.bf16.msra.mxu0 0
      %438 = vmatpush.bf16.msra.mxu0 %v416
      %439 = vmatmul.bf16.gmra.mxu0 %v410
      %v440 = vpop.f32.mrf.mxu0
      %v441 = vadd.f32 0.0, %v440
      %v442 = vpop.f32.mrf.mxu0
      %443 = vdwg.mxu0
      %v444 = vadd.f32 %v399, %v428
      %v445 = vadd.f32 %v400, %v441
      %s446 = scalar_lea.vmem %s0, 24
      %v447 = vld [vmem:[%s446] sm:$0xf]
      %448 = vrot.lane.b32.xlu0 %v183, 116
      %v449 = vpop.permute.xlu0 %448
      %450 = vrot.lane.b32.xlu0 %v184, 116
      %v451 = vpop.permute.xlu0 %450
      %vm452 = vcmask 949248
      %v453 = vsel %vm452, %v449, %v451
      %v455 = vsel %vm191, %v447, 0
      %v458 = vand.u32 %v453, %v198
      %v461 = vand.u32 %v451, %v198
      %463 = vmatpush.bf16.msra.mxu0 0
      %464 = vmatpush.bf16.msra.mxu0 0
      %465 = vmatpush.bf16.msra.mxu0 0
      %466 = vmatpush.bf16.msra.mxu0 0
      %467 = vmatpush.bf16.msra.mxu0 0
      %468 = vmatpush.bf16.msra.mxu0 0
      %469 = vmatpush.bf16.msra.mxu0 0
      %470 = vmatpush.bf16.msra.mxu0 %v458
      %471 = vmatmul.bf16.gmra.mxu0 %v455
      %v472 = vpop.f32.mrf.mxu0
      %v473 = vadd.f32 0.0, %v472
      %v474 = vpop.f32.mrf.mxu0
      %475 = vdwg.mxu0
      %476 = vmatpush.bf16.msra.mxu0 0
      %477 = vmatpush.bf16.msra.mxu0 0
      %478 = vmatpush.bf16.msra.mxu0 0
      %479 = vmatpush.bf16.msra.mxu0 0
      %480 = vmatpush.bf16.msra.mxu0 0
      %481 = vmatpush.bf16.msra.mxu0 0
      %482 = vmatpush.bf16.msra.mxu0 0
      %483 = vmatpush.bf16.msra.mxu0 %v461
      %484 = vmatmul.bf16.gmra.mxu0 %v455
      %v485 = vpop.f32.mrf.mxu0
      %v486 = vadd.f32 0.0, %v485
      %v487 = vpop.f32.mrf.mxu0
      %488 = vdwg.mxu0
      %v489 = vadd.f32 %v444, %v473
      %v490 = vadd.f32 %v445, %v486
      %s491 = scalar_lea.vmem %s0, 28
      %v492 = vld [vmem:[%s491] sm:$0xf]
      %493 = vrot.lane.b32.xlu0 %v183, 115
      %v494 = vpop.permute.xlu0 %493
      %495 = vrot.lane.b32.xlu0 %v184, 115
      %v496 = vpop.permute.xlu0 %495
      %vm497 = vcmask 941056
      %v498 = vsel %vm497, %v494, %v496
      %v500 = vsel %vm191, %v492, 0
      %v503 = vand.u32 %v498, %v198
      %v506 = vand.u32 %v496, %v198
      %508 = vmatpush.bf16.msra.mxu0 0
      %509 = vmatpush.bf16.msra.mxu0 0
      %510 = vmatpush.bf16.msra.mxu0 0
      %511 = vmatpush.bf16.msra.mxu0 0
      %512 = vmatpush.bf16.msra.mxu0 0
      %513 = vmatpush.bf16.msra.mxu0 0
      %514 = vmatpush.bf16.msra.mxu0 0
      %515 = vmatpush.bf16.msra.mxu0 %v503
      %516 = vmatmul.bf16.gmra.mxu0 %v500
      %v517 = vpop.f32.mrf.mxu0
      %v518 = vadd.f32 0.0, %v517
      %v519 = vpop.f32.mrf.mxu0
      %520 = vdwg.mxu0
      %521 = vmatpush.bf16.msra.mxu0 0
      %522 = vmatpush.bf16.msra.mxu0 0
      %523 = vmatpush.bf16.msra.mxu0 0
      %524 = vmatpush.bf16.msra.mxu0 0
      %525 = vmatpush.bf16.msra.mxu0 0
      %526 = vmatpush.bf16.msra.mxu0 0
      %527 = vmatpush.bf16.msra.mxu0 0
      %528 = vmatpush.bf16.msra.mxu0 %v506
      %529 = vmatmul.bf16.gmra.mxu0 %v500
      %v530 = vpop.f32.mrf.mxu0
      %v531 = vadd.f32 0.0, %v530
      %v532 = vpop.f32.mrf.mxu0
      %533 = vdwg.mxu0
      %v534 = vadd.f32 %v489, %v518
      %v535 = vadd.f32 %v490, %v531
      %s536 = scalar_lea.vmem %s0, 32
      %v537 = vld [vmem:[%s536] sm:$0xf]
      %538 = vrot.lane.b32.xlu0 %v183, 114
      %v539 = vpop.permute.xlu0 %538
      %540 = vrot.lane.b32.xlu0 %v184, 114
      %v541 = vpop.permute.xlu0 %540
      %vm542 = vcmask 932864
      %v543 = vsel %vm542, %v539, %v541
      %v545 = vsel %vm191, %v537, 0
      %v548 = vand.u32 %v543, %v198
      %v551 = vand.u32 %v541, %v198
      %553 = vmatpush.bf16.msra.mxu0 0
      %554 = vmatpush.bf16.msra.mxu0 0
      %555 = vmatpush.bf16.msra.mxu0 0
      %556 = vmatpush.bf16.msra.mxu0 0
      %557 = vmatpush.bf16.msra.mxu0 0
      %558 = vmatpush.bf16.msra.mxu0 0
      %559 = vmatpush.bf16.msra.mxu0 0
      %560 = vmatpush.bf16.msra.mxu0 %v548
      %561 = vmatmul.bf16.gmra.mxu0 %v545
      %v562 = vpop.f32.mrf.mxu0
      %v563 = vadd.f32 0.0, %v562
      %v564 = vpop.f32.mrf.mxu0
      %565 = vdwg.mxu0
      %566 = vmatpush.bf16.msra.mxu0 0
      %567 = vmatpush.bf16.msra.mxu0 0
      %568 = vmatpush.bf16.msra.mxu0 0
      %569 = vmatpush.bf16.msra.mxu0 0
      %570 = vmatpush.bf16.msra.mxu0 0
      %571 = vmatpush.bf16.msra.mxu0 0
      %572 = vmatpush.bf16.msra.mxu0 0
      %573 = vmatpush.bf16.msra.mxu0 %v551
      %574 = vmatmul.bf16.gmra.mxu0 %v545
      %v575 = vpop.f32.mrf.mxu0
      %v576 = vadd.f32 0.0, %v575
      %v577 = vpop.f32.mrf.mxu0
      %578 = vdwg.mxu0
      %v579 = vadd.f32 %v534, %v563
      %v580 = vadd.f32 %v535, %v576
      %s581 = scalar_lea.vmem %s0, 36
      %v582 = vld [vmem:[%s581] sm:$0xf]
      %583 = vrot.lane.b32.xlu0 %v183, 92
      %v584 = vpop.permute.xlu0 %583
      %585 = vrot.lane.b32.xlu0 %v184, 92
      %v586 = vpop.permute.xlu0 %585
      %vm587 = vcmask 752640
      %v588 = vsel %vm587, %v584, %v586
      %v590 = vsel %vm191, %v582, 0
      %v593 = vand.u32 %v588, %v198
      %v596 = vand.u32 %v586, %v198
      %598 = vmatpush.bf16.msra.mxu0 0
      %599 = vmatpush.bf16.msra.mxu0 0
      %600 = vmatpush.bf16.msra.mxu0 0
      %601 = vmatpush.bf16.msra.mxu0 0
      %602 = vmatpush.bf16.msra.mxu0 0
      %603 = vmatpush.bf16.msra.mxu0 0
      %604 = vmatpush.bf16.msra.mxu0 0
      %605 = vmatpush.bf16.msra.mxu0 %v593
      %606 = vmatmul.bf16.gmra.mxu0 %v590
      %v607 = vpop.f32.mrf.mxu0
      %v608 = vadd.f32 0.0, %v607
      %v609 = vpop.f32.mrf.mxu0
      %610 = vdwg.mxu0
      %611 = vmatpush.bf16.msra.mxu0 0
      %612 = vmatpush.bf16.msra.mxu0 0
      %613 = vmatpush.bf16.msra.mxu0 0
      %614 = vmatpush.bf16.msra.mxu0 0
      %615 = vmatpush.bf16.msra.mxu0 0
      %616 = vmatpush.bf16.msra.mxu0 0
      %617 = vmatpush.bf16.msra.mxu0 0
      %618 = vmatpush.bf16.msra.mxu0 %v596
      %619 = vmatmul.bf16.gmra.mxu0 %v590
      %v620 = vpop.f32.mrf.mxu0
      %v621 = vadd.f32 0.0, %v620
      %v622 = vpop.f32.mrf.mxu0
      %623 = vdwg.mxu0
      %v624 = vadd.f32 %v579, %v608
      %v625 = vadd.f32 %v580, %v621
      %s626 = scalar_lea.vmem %s0, 40
      %v627 = vld [vmem:[%s626] sm:$0xf]
      %628 = vrot.lane.b32.xlu0 %v183, 91
      %v629 = vpop.permute.xlu0 %628
      %630 = vrot.lane.b32.xlu0 %v184, 91
      %v631 = vpop.permute.xlu0 %630
      %vm632 = vcmask 744448
      %v633 = vsel %vm632, %v629, %v631
      %v635 = vsel %vm191, %v627, 0
      %v638 = vand.u32 %v633, %v198
      %v641 = vand.u32 %v631, %v198
      %643 = vmatpush.bf16.msra.mxu0 0
      %644 = vmatpush.bf16.msra.mxu0 0
      %645 = vmatpush.bf16.msra.mxu0 0
      %646 = vmatpush.bf16.msra.mxu0 0
      %647 = vmatpush.bf16.msra.mxu0 0
      %648 = vmatpush.bf16.msra.mxu0 0
      %649 = vmatpush.bf16.msra.mxu0 0
      %650 = vmatpush.bf16.msra.mxu0 %v638
      %651 = vmatmul.bf16.gmra.mxu0 %v635
      %v652 = vpop.f32.mrf.mxu0
      %v653 = vadd.f32 0.0, %v652
      %v654 = vpop.f32.mrf.mxu0
      %655 = vdwg.mxu0
      %656 = vmatpush.bf16.msra.mxu0 0
      %657 = vmatpush.bf16.msra.mxu0 0
      %658 = vmatpush.bf16.msra.mxu0 0
      %659 = vmatpush.bf16.msra.mxu0 0
      %660 = vmatpush.bf16.msra.mxu0 0
      %661 = vmatpush.bf16.msra.mxu0 0
      %662 = vmatpush.bf16.msra.mxu0 0
      %663 = vmatpush.bf16.msra.mxu0 %v641
      %664 = vmatmul.bf16.gmra.mxu0 %v635
      %v665 = vpop.f32.mrf.mxu0
      %v666 = vadd.f32 0.0, %v665
      %v667 = vpop.f32.mrf.mxu0
      %668 = vdwg.mxu0
      %v669 = vadd.f32 %v624, %v653
      %v670 = vadd.f32 %v625, %v666
      %s671 = scalar_lea.vmem %s0, 44
      %v672 = vld [vmem:[%s671] sm:$0xf]
      %673 = vrot.lane.b32.xlu0 %v183, 90
      %v674 = vpop.permute.xlu0 %673
      %675 = vrot.lane.b32.xlu0 %v184, 90
      %v676 = vpop.permute.xlu0 %675
      %vm677 = vcmask 736256
      %v678 = vsel %vm677, %v674, %v676
      %v680 = vsel %vm191, %v672, 0
      %v683 = vand.u32 %v678, %v198
      %v686 = vand.u32 %v676, %v198
      %688 = vmatpush.bf16.msra.mxu0 0
      %689 = vmatpush.bf16.msra.mxu0 0
      %690 = vmatpush.bf16.msra.mxu0 0
      %691 = vmatpush.bf16.msra.mxu0 0
      %692 = vmatpush.bf16.msra.mxu0 0
      %693 = vmatpush.bf16.msra.mxu0 0
      %694 = vmatpush.bf16.msra.mxu0 0
      %695 = vmatpush.bf16.msra.mxu0 %v683
      %696 = vmatmul.bf16.gmra.mxu0 %v680
      %v697 = vpop.f32.mrf.mxu0
      %v698 = vadd.f32 0.0, %v697
      %v699 = vpop.f32.mrf.mxu0
      %700 = vdwg.mxu0
      %701 = vmatpush.bf16.msra.mxu0 0
      %702 = vmatpush.bf16.msra.mxu0 0
      %703 = vmatpush.bf16.msra.mxu0 0
      %704 = vmatpush.bf16.msra.mxu0 0
      %705 = vmatpush.bf16.msra.mxu0 0
      %706 = vmatpush.bf16.msra.mxu0 0
      %707 = vmatpush.bf16.msra.mxu0 0
      %708 = vmatpush.bf16.msra.mxu0 %v686
      %709 = vmatmul.bf16.gmra.mxu0 %v680
      %v710 = vpop.f32.mrf.mxu0
      %v711 = vadd.f32 0.0, %v710
      %v712 = vpop.f32.mrf.mxu0
      %713 = vdwg.mxu0
      %v714 = vadd.f32 %v669, %v698
      %v715 = vadd.f32 %v670, %v711
      %v716 = vld [vmem:[%s165] sm:$0xff]
      %v717 = vld [vmem:[%s165 + $0x8] sm:$0xf]
      %v718 = vld [vmem:[%s165 + $0xc] sm:$0x11]
      %v719 = vld [vmem:[%s165 + $0x14] sm:$0x1]
      %s720 = scalar_lea.vmem %s0, 48
      %v721 = vld [vmem:[%s720] sm:$0xf]
      %v726 = vunpack.c.l.b16 %v716
      %v727 = vunpack.c.h.b16 %v716
      %v728 = vunpack.c.l.b16 %v717
      %v729 = vunpack.c.l.b16 %v718
      %v730 = vunpack.c.h.b16 %v718
      %v731 = vunpack.c.l.b16 %v719
      %v732 = vpack.c.b16 %v729, %v726
      %v733 = vpack.c.b16 %v730, %v727
      %v734 = vpack.c.b16 %v731, %v728
      %735 = vrot.lane.b32.xlu0 %v732, 86
      %v736 = vpop.permute.xlu0 %735
      %737 = vrot.lane.b32.xlu0 %v733, 86
      %v738 = vpop.permute.xlu0 %737
      %739 = vrot.lane.b32.xlu0 %v734, 86
      %v740 = vpop.permute.xlu0 %739
      %vm741 = vcmask 703488
      %v742 = vsel %vm741, %v736, %v738
      %v743 = vsel %vm741, %v738, %v740
      %v745 = vsel %vm191, %v721, 0
      %v748 = vand.u32 %v742, %v198
      %v751 = vand.u32 %v743, %v198
      %753 = vmatpush.bf16.msra.mxu0 0
      %754 = vmatpush.bf16.msra.mxu0 0
      %755 = vmatpush.bf16.msra.mxu0 0
      %756 = vmatpush.bf16.msra.mxu0 0
      %757 = vmatpush.bf16.msra.mxu0 0
      %758 = vmatpush.bf16.msra.mxu0 0
      %759 = vmatpush.bf16.msra.mxu0 0
      %760 = vmatpush.bf16.msra.mxu0 %v748
      %761 = vmatmul.bf16.gmra.mxu0 %v745
      %v762 = vpop.f32.mrf.mxu0
      %v763 = vadd.f32 0.0, %v762
      %v764 = vpop.f32.mrf.mxu0
      %765 = vdwg.mxu0
      %766 = vmatpush.bf16.msra.mxu0 0
      %767 = vmatpush.bf16.msra.mxu0 0
      %768 = vmatpush.bf16.msra.mxu0 0
      %769 = vmatpush.bf16.msra.mxu0 0
      %770 = vmatpush.bf16.msra.mxu0 0
      %771 = vmatpush.bf16.msra.mxu0 0
      %772 = vmatpush.bf16.msra.mxu0 0
      %773 = vmatpush.bf16.msra.mxu0 %v751
      %774 = vmatmul.bf16.gmra.mxu0 %v745
      %v775 = vpop.f32.mrf.mxu0
      %v776 = vadd.f32 0.0, %v775
      %v777 = vpop.f32.mrf.mxu0
      %778 = vdwg.mxu0
      %v779 = vadd.f32 %v714, %v763
      %v780 = vadd.f32 %v715, %v776
      %s781 = scalar_lea.vmem %s0, 52
      %v782 = vld [vmem:[%s781] sm:$0xf]
      %783 = vrot.lane.b32.xlu0 %v732, 85
      %v784 = vpop.permute.xlu0 %783
      %785 = vrot.lane.b32.xlu0 %v733, 85
      %v786 = vpop.permute.xlu0 %785
      %787 = vrot.lane.b32.xlu0 %v734, 85
      %v788 = vpop.permute.xlu0 %787
      %vm789 = vcmask 695296
      %v790 = vsel %vm789, %v784, %v786
      %v791 = vsel %vm789, %v786, %v788
      %v793 = vsel %vm191, %v782, 0
      %v796 = vand.u32 %v790, %v198
      %v799 = vand.u32 %v791, %v198
      %801 = vmatpush.bf16.msra.mxu0 0
      %802 = vmatpush.bf16.msra.mxu0 0
      %803 = vmatpush.bf16.msra.mxu0 0
      %804 = vmatpush.bf16.msra.mxu0 0
      %805 = vmatpush.bf16.msra.mxu0 0
      %806 = vmatpush.bf16.msra.mxu0 0
      %807 = vmatpush.bf16.msra.mxu0 0
      %808 = vmatpush.bf16.msra.mxu0 %v796
      %809 = vmatmul.bf16.gmra.mxu0 %v793
      %v810 = vpop.f32.mrf.mxu0
      %v811 = vadd.f32 0.0, %v810
      %v812 = vpop.f32.mrf.mxu0
      %813 = vdwg.mxu0
      %814 = vmatpush.bf16.msra.mxu0 0
      %815 = vmatpush.bf16.msra.mxu0 0
      %816 = vmatpush.bf16.msra.mxu0 0
      %817 = vmatpush.bf16.msra.mxu0 0
      %818 = vmatpush.bf16.msra.mxu0 0
      %819 = vmatpush.bf16.msra.mxu0 0
      %820 = vmatpush.bf16.msra.mxu0 0
      %821 = vmatpush.bf16.msra.mxu0 %v799
      %822 = vmatmul.bf16.gmra.mxu0 %v793
      %v823 = vpop.f32.mrf.mxu0
      %v824 = vadd.f32 0.0, %v823
      %v825 = vpop.f32.mrf.mxu0
      %826 = vdwg.mxu0
      %v827 = vadd.f32 %v779, %v811
      %v828 = vadd.f32 %v780, %v824
      %s829 = scalar_lea.vmem %s0, 56
      %v830 = vld [vmem:[%s829] sm:$0xf]
      %831 = vrot.lane.b32.xlu0 %v732, 84
      %v832 = vpop.permute.xlu0 %831
      %833 = vrot.lane.b32.xlu0 %v733, 84
      %v834 = vpop.permute.xlu0 %833
      %835 = vrot.lane.b32.xlu0 %v734, 84
      %v836 = vpop.permute.xlu0 %835
      %vm837 = vcmask 687104
      %v838 = vsel %vm837, %v832, %v834
      %v839 = vsel %vm837, %v834, %v836
      %v841 = vsel %vm191, %v830, 0
      %v844 = vand.u32 %v838, %v198
      %v847 = vand.u32 %v839, %v198
      %849 = vmatpush.bf16.msra.mxu0 0
      %850 = vmatpush.bf16.msra.mxu0 0
      %851 = vmatpush.bf16.msra.mxu0 0
      %852 = vmatpush.bf16.msra.mxu0 0
      %853 = vmatpush.bf16.msra.mxu0 0
      %854 = vmatpush.bf16.msra.mxu0 0
      %855 = vmatpush.bf16.msra.mxu0 0
      %856 = vmatpush.bf16.msra.mxu0 %v844
      %857 = vmatmul.bf16.gmra.mxu0 %v841
      %v858 = vpop.f32.mrf.mxu0
      %v859 = vadd.f32 0.0, %v858
      %v860 = vpop.f32.mrf.mxu0
      %861 = vdwg.mxu0
      %862 = vmatpush.bf16.msra.mxu0 0
      %863 = vmatpush.bf16.msra.mxu0 0
      %864 = vmatpush.bf16.msra.mxu0 0
      %865 = vmatpush.bf16.msra.mxu0 0
      %866 = vmatpush.bf16.msra.mxu0 0
      %867 = vmatpush.bf16.msra.mxu0 0
      %868 = vmatpush.bf16.msra.mxu0 0
      %869 = vmatpush.bf16.msra.mxu0 %v847
      %870 = vmatmul.bf16.gmra.mxu0 %v841
      %v871 = vpop.f32.mrf.mxu0
      %v872 = vadd.f32 0.0, %v871
      %v873 = vpop.f32.mrf.mxu0
      %874 = vdwg.mxu0
      %v875 = vadd.f32 %v827, %v859
      %v876 = vadd.f32 %v828, %v872
      %s877 = scalar_lea.vmem %s0, 60
      %v878 = vld [vmem:[%s877] sm:$0xf]
      %879 = vrot.lane.b32.xlu0 %v732, 80
      %v880 = vpop.permute.xlu0 %879
      %881 = vrot.lane.b32.xlu0 %v733, 80
      %v882 = vpop.permute.xlu0 %881
      %883 = vrot.lane.b32.xlu0 %v734, 80
      %v884 = vpop.permute.xlu0 %883
      %vm885 = vcmask 654336
      %v886 = vsel %vm885, %v880, %v882
      %v887 = vsel %vm885, %v882, %v884
      %v889 = vsel %vm191, %v878, 0
      %v892 = vand.u32 %v886, %v198
      %v895 = vand.u32 %v887, %v198
      %897 = vmatpush.bf16.msra.mxu0 0
      %898 = vmatpush.bf16.msra.mxu0 0
      %899 = vmatpush.bf16.msra.mxu0 0
      %900 = vmatpush.bf16.msra.mxu0 0
      %901 = vmatpush.bf16.msra.mxu0 0
      %902 = vmatpush.bf16.msra.mxu0 0
      %903 = vmatpush.bf16.msra.mxu0 0
      %904 = vmatpush.bf16.msra.mxu0 %v892
      %905 = vmatmul.bf16.gmra.mxu0 %v889
      %v906 = vpop.f32.mrf.mxu0
      %v907 = vadd.f32 0.0, %v906
      %v908 = vpop.f32.mrf.mxu0
      %909 = vdwg.mxu0
      %910 = vmatpush.bf16.msra.mxu0 0
      %911 = vmatpush.bf16.msra.mxu0 0
      %912 = vmatpush.bf16.msra.mxu0 0
      %913 = vmatpush.bf16.msra.mxu0 0
      %914 = vmatpush.bf16.msra.mxu0 0
      %915 = vmatpush.bf16.msra.mxu0 0
      %916 = vmatpush.bf16.msra.mxu0 0
      %917 = vmatpush.bf16.msra.mxu0 %v895
      %918 = vmatmul.bf16.gmra.mxu0 %v889
      %v919 = vpop.f32.mrf.mxu0
      %v920 = vadd.f32 0.0, %v919
      %v921 = vpop.f32.mrf.mxu0
      %922 = vdwg.mxu0
      %v923 = vadd.f32 %v875, %v907
      %v924 = vadd.f32 %v876, %v920
      %s925 = scalar_lea.vmem %s0, 64
      %v926 = vld [vmem:[%s925] sm:$0xf]
      %927 = vrot.lane.b32.xlu0 %v732, 79
      %v928 = vpop.permute.xlu0 %927
      %929 = vrot.lane.b32.xlu0 %v733, 79
      %v930 = vpop.permute.xlu0 %929
      %931 = vrot.lane.b32.xlu0 %v734, 79
      %v932 = vpop.permute.xlu0 %931
      %vm933 = vcmask 646144
      %v934 = vsel %vm933, %v928, %v930
      %v935 = vsel %vm933, %v930, %v932
      %v937 = vsel %vm191, %v926, 0
      %v940 = vand.u32 %v934, %v198
      %v943 = vand.u32 %v935, %v198
      %945 = vmatpush.bf16.msra.mxu0 0
      %946 = vmatpush.bf16.msra.mxu0 0
      %947 = vmatpush.bf16.msra.mxu0 0
      %948 = vmatpush.bf16.msra.mxu0 0
      %949 = vmatpush.bf16.msra.mxu0 0
      %950 = vmatpush.bf16.msra.mxu0 0
      %951 = vmatpush.bf16.msra.mxu0 0
      %952 = vmatpush.bf16.msra.mxu0 %v940
      %953 = vmatmul.bf16.gmra.mxu0 %v937
      %v954 = vpop.f32.mrf.mxu0
      %v955 = vadd.f32 0.0, %v954
      %v956 = vpop.f32.mrf.mxu0
      %957 = vdwg.mxu0
      %958 = vmatpush.bf16.msra.mxu0 0
      %959 = vmatpush.bf16.msra.mxu0 0
      %960 = vmatpush.bf16.msra.mxu0 0
      %961 = vmatpush.bf16.msra.mxu0 0
      %962 = vmatpush.bf16.msra.mxu0 0
      %963 = vmatpush.bf16.msra.mxu0 0
      %964 = vmatpush.bf16.msra.mxu0 0
      %965 = vmatpush.bf16.msra.mxu0 %v943
      %966 = vmatmul.bf16.gmra.mxu0 %v937
      %v967 = vpop.f32.mrf.mxu0
      %v968 = vadd.f32 0.0, %v967
      %v969 = vpop.f32.mrf.mxu0
      %970 = vdwg.mxu0
      %v971 = vadd.f32 %v923, %v955
      %v972 = vadd.f32 %v924, %v968
      %s973 = scalar_lea.vmem %s0, 68
      %v974 = vld [vmem:[%s973] sm:$0xf]
      %975 = vrot.lane.b32.xlu0 %v732, 78
      %v976 = vpop.permute.xlu0 %975
      %977 = vrot.lane.b32.xlu0 %v733, 78
      %v978 = vpop.permute.xlu0 %977
      %979 = vrot.lane.b32.xlu0 %v734, 78
      %v980 = vpop.permute.xlu0 %979
      %vm981 = vcmask 637952
      %v982 = vsel %vm981, %v976, %v978
      %v983 = vsel %vm981, %v978, %v980
      %v985 = vsel %vm191, %v974, 0
      %v988 = vand.u32 %v982, %v198
      %v991 = vand.u32 %v983, %v198
      %993 = vmatpush.bf16.msra.mxu0 0
      %994 = vmatpush.bf16.msra.mxu0 0
      %995 = vmatpush.bf16.msra.mxu0 0
      %996 = vmatpush.bf16.msra.mxu0 0
      %997 = vmatpush.bf16.msra.mxu0 0
      %998 = vmatpush.bf16.msra.mxu0 0
      %999 = vmatpush.bf16.msra.mxu0 0
      %1000 = vmatpush.bf16.msra.mxu0 %v988
      %1001 = vmatmul.bf16.gmra.mxu0 %v985
      %v1002 = vpop.f32.mrf.mxu0
      %v1003 = vadd.f32 0.0, %v1002
      %v1004 = vpop.f32.mrf.mxu0
      %1005 = vdwg.mxu0
      %1006 = vmatpush.bf16.msra.mxu0 0
      %1007 = vmatpush.bf16.msra.mxu0 0
      %1008 = vmatpush.bf16.msra.mxu0 0
      %1009 = vmatpush.bf16.msra.mxu0 0
      %1010 = vmatpush.bf16.msra.mxu0 0
      %1011 = vmatpush.bf16.msra.mxu0 0
      %1012 = vmatpush.bf16.msra.mxu0 0
      %1013 = vmatpush.bf16.msra.mxu0 %v991
      %1014 = vmatmul.bf16.gmra.mxu0 %v985
      %v1015 = vpop.f32.mrf.mxu0
      %v1016 = vadd.f32 0.0, %v1015
      %v1017 = vpop.f32.mrf.mxu0
      %1018 = vdwg.mxu0
      %v1019 = vadd.f32 %v971, %v1003
      %v1020 = vadd.f32 %v972, %v1016
      %s1021 = scalar_lea.vmem %s0, 72
      %v1022 = vld [vmem:[%s1021] sm:$0xf]
      %1023 = vrot.lane.b32.xlu0 %v732, 56
      %v1024 = vpop.permute.xlu0 %1023
      %1025 = vrot.lane.b32.xlu0 %v733, 56
      %v1026 = vpop.permute.xlu0 %1025
      %1027 = vrot.lane.b32.xlu0 %v734, 56
      %v1028 = vpop.permute.xlu0 %1027
      %vm1029 = vcmask 457728
      %v1030 = vsel %vm1029, %v1024, %v1026
      %v1031 = vsel %vm1029, %v1026, %v1028
      %v1033 = vsel %vm191, %v1022, 0
      %v1036 = vand.u32 %v1030, %v198
      %v1039 = vand.u32 %v1031, %v198
      %1041 = vmatpush.bf16.msra.mxu0 0
      %1042 = vmatpush.bf16.msra.mxu0 0
      %1043 = vmatpush.bf16.msra.mxu0 0
      %1044 = vmatpush.bf16.msra.mxu0 0
      %1045 = vmatpush.bf16.msra.mxu0 0
      %1046 = vmatpush.bf16.msra.mxu0 0
      %1047 = vmatpush.bf16.msra.mxu0 0
      %1048 = vmatpush.bf16.msra.mxu0 %v1036
      %1049 = vmatmul.bf16.gmra.mxu0 %v1033
      %v1050 = vpop.f32.mrf.mxu0
      %v1051 = vadd.f32 0.0, %v1050
      %v1052 = vpop.f32.mrf.mxu0
      %1053 = vdwg.mxu0
      %1054 = vmatpush.bf16.msra.mxu0 0
      %1055 = vmatpush.bf16.msra.mxu0 0
      %1056 = vmatpush.bf16.msra.mxu0 0
      %1057 = vmatpush.bf16.msra.mxu0 0
      %1058 = vmatpush.bf16.msra.mxu0 0
      %1059 = vmatpush.bf16.msra.mxu0 0
      %1060 = vmatpush.bf16.msra.mxu0 0
      %1061 = vmatpush.bf16.msra.mxu0 %v1039
      %1062 = vmatmul.bf16.gmra.mxu0 %v1033
      %v1063 = vpop.f32.mrf.mxu0
      %v1064 = vadd.f32 0.0, %v1063
      %v1065 = vpop.f32.mrf.mxu0
      %1066 = vdwg.mxu0
      %v1067 = vadd.f32 %v1019, %v1051
      %v1068 = vadd.f32 %v1020, %v1064
      %s1069 = scalar_lea.vmem %s0, 76
      %v1070 = vld [vmem:[%s1069] sm:$0xf]
      %1071 = vrot.lane.b32.xlu0 %v732, 55
      %v1072 = vpop.permute.xlu0 %1071
      %1073 = vrot.lane.b32.xlu0 %v733, 55
      %v1074 = vpop.permute.xlu0 %1073
      %1075 = vrot.lane.b32.xlu0 %v734, 55
      %v1076 = vpop.permute.xlu0 %1075
      %vm1077 = vcmask 449536
      %v1078 = vsel %vm1077, %v1072, %v1074
      %v1079 = vsel %vm1077, %v1074, %v1076
      %v1081 = vsel %vm191, %v1070, 0
      %v1084 = vand.u32 %v1078, %v198
      %v1087 = vand.u32 %v1079, %v198
      %1089 = vmatpush.bf16.msra.mxu0 0
      %1090 = vmatpush.bf16.msra.mxu0 0
      %1091 = vmatpush.bf16.msra.mxu0 0
      %1092 = vmatpush.bf16.msra.mxu0 0
      %1093 = vmatpush.bf16.msra.mxu0 0
      %1094 = vmatpush.bf16.msra.mxu0 0
      %1095 = vmatpush.bf16.msra.mxu0 0
      %1096 = vmatpush.bf16.msra.mxu0 %v1084
      %1097 = vmatmul.bf16.gmra.mxu0 %v1081
      %v1098 = vpop.f32.mrf.mxu0
      %v1099 = vadd.f32 0.0, %v1098
      %v1100 = vpop.f32.mrf.mxu0
      %1101 = vdwg.mxu0
      %1102 = vmatpush.bf16.msra.mxu0 0
      %1103 = vmatpush.bf16.msra.mxu0 0
      %1104 = vmatpush.bf16.msra.mxu0 0
      %1105 = vmatpush.bf16.msra.mxu0 0
      %1106 = vmatpush.bf16.msra.mxu0 0
      %1107 = vmatpush.bf16.msra.mxu0 0
      %1108 = vmatpush.bf16.msra.mxu0 0
      %1109 = vmatpush.bf16.msra.mxu0 %v1087
      %1110 = vmatmul.bf16.gmra.mxu0 %v1081
      %v1111 = vpop.f32.mrf.mxu0
      %v1112 = vadd.f32 0.0, %v1111
      %v1113 = vpop.f32.mrf.mxu0
      %1114 = vdwg.mxu0
      %v1115 = vadd.f32 %v1067, %v1099
      %v1116 = vadd.f32 %v1068, %v1112
      %s1117 = scalar_lea.vmem %s0, 80
      %v1118 = vld [vmem:[%s1117] sm:$0xf]
      %1119 = vrot.lane.b32.xlu0 %v732, 54
      %v1120 = vpop.permute.xlu0 %1119
      %1121 = vrot.lane.b32.xlu0 %v733, 54
      %v1122 = vpop.permute.xlu0 %1121
      %1123 = vrot.lane.b32.xlu0 %v734, 54
      %v1124 = vpop.permute.xlu0 %1123
      %vm1125 = vcmask 441344
      %v1126 = vsel %vm1125, %v1120, %v1122
      %v1127 = vsel %vm1125, %v1122, %v1124
      %v1129 = vsel %vm191, %v1118, 0
      %v1132 = vand.u32 %v1126, %v198
      %v1135 = vand.u32 %v1127, %v198
      %1137 = vmatpush.bf16.msra.mxu0 0
      %1138 = vmatpush.bf16.msra.mxu0 0
      %1139 = vmatpush.bf16.msra.mxu0 0
      %1140 = vmatpush.bf16.msra.mxu0 0
      %1141 = vmatpush.bf16.msra.mxu0 0
      %1142 = vmatpush.bf16.msra.mxu0 0
      %1143 = vmatpush.bf16.msra.mxu0 0
      %1144 = vmatpush.bf16.msra.mxu0 %v1132
      %1145 = vmatmul.bf16.gmra.mxu0 %v1129
      %v1146 = vpop.f32.mrf.mxu0
      %v1147 = vadd.f32 0.0, %v1146
      %v1148 = vpop.f32.mrf.mxu0
      %1149 = vdwg.mxu0
      %1150 = vmatpush.bf16.msra.mxu0 0
      %1151 = vmatpush.bf16.msra.mxu0 0
      %1152 = vmatpush.bf16.msra.mxu0 0
      %1153 = vmatpush.bf16.msra.mxu0 0
      %1154 = vmatpush.bf16.msra.mxu0 0
      %1155 = vmatpush.bf16.msra.mxu0 0
      %1156 = vmatpush.bf16.msra.mxu0 0
      %1157 = vmatpush.bf16.msra.mxu0 %v1135
      %1158 = vmatmul.bf16.gmra.mxu0 %v1129
      %v1159 = vpop.f32.mrf.mxu0
      %v1160 = vadd.f32 0.0, %v1159
      %v1161 = vpop.f32.mrf.mxu0
      %1162 = vdwg.mxu0
      %v1163 = vadd.f32 %v1115, %v1147
      %v1164 = vadd.f32 %v1116, %v1160
      %s1165 = scalar_lea.vmem %s0, 84
      %v1166 = vld [vmem:[%s1165] sm:$0xf]
      %1167 = vrot.lane.b32.xlu0 %v732, 50
      %v1168 = vpop.permute.xlu0 %1167
      %1169 = vrot.lane.b32.xlu0 %v733, 50
      %v1170 = vpop.permute.xlu0 %1169
      %1171 = vrot.lane.b32.xlu0 %v734, 50
      %v1172 = vpop.permute.xlu0 %1171
      %vm1173 = vcmask 408576
      %v1174 = vsel %vm1173, %v1168, %v1170
      %v1175 = vsel %vm1173, %v1170, %v1172
      %v1177 = vsel %vm191, %v1166, 0
      %v1180 = vand.u32 %v1174, %v198
      %v1183 = vand.u32 %v1175, %v198
      %1185 = vmatpush.bf16.msra.mxu0 0
      %1186 = vmatpush.bf16.msra.mxu0 0
      %1187 = vmatpush.bf16.msra.mxu0 0
      %1188 = vmatpush.bf16.msra.mxu0 0
      %1189 = vmatpush.bf16.msra.mxu0 0
      %1190 = vmatpush.bf16.msra.mxu0 0
      %1191 = vmatpush.bf16.msra.mxu0 0
      %1192 = vmatpush.bf16.msra.mxu0 %v1180
      %1193 = vmatmul.bf16.gmra.mxu0 %v1177
      %v1194 = vpop.f32.mrf.mxu0
      %v1195 = vadd.f32 0.0, %v1194
      %v1196 = vpop.f32.mrf.mxu0
      %1197 = vdwg.mxu0
      %1198 = vmatpush.bf16.msra.mxu0 0
      %1199 = vmatpush.bf16.msra.mxu0 0
      %1200 = vmatpush.bf16.msra.mxu0 0
      %1201 = vmatpush.bf16.msra.mxu0 0
      %1202 = vmatpush.bf16.msra.mxu0 0
      %1203 = vmatpush.bf16.msra.mxu0 0
      %1204 = vmatpush.bf16.msra.mxu0 0
      %1205 = vmatpush.bf16.msra.mxu0 %v1183
      %1206 = vmatmul.bf16.gmra.mxu0 %v1177
      %v1207 = vpop.f32.mrf.mxu0
      %v1208 = vadd.f32 0.0, %v1207
      %v1209 = vpop.f32.mrf.mxu0
      %1210 = vdwg.mxu0
      %v1211 = vadd.f32 %v1163, %v1195
      %v1212 = vadd.f32 %v1164, %v1208
      %s1213 = scalar_lea.vmem %s0, 88
      %v1214 = vld [vmem:[%s1213] sm:$0xf]
      %1215 = vrot.lane.b32.xlu0 %v732, 49
      %v1216 = vpop.permute.xlu0 %1215
      %1217 = vrot.lane.b32.xlu0 %v733, 49
      %v1218 = vpop.permute.xlu0 %1217
      %1219 = vrot.lane.b32.xlu0 %v734, 49
      %v1220 = vpop.permute.xlu0 %1219
      %vm1221 = vcmask 400384
      %v1222 = vsel %vm1221, %v1216, %v1218
      %v1223 = vsel %vm1221, %v1218, %v1220
      %v1225 = vsel %vm191, %v1214, 0
      %v1228 = vand.u32 %v1222, %v198
      %v1231 = vand.u32 %v1223, %v198
      %1233 = vmatpush.bf16.msra.mxu0 0
      %1234 = vmatpush.bf16.msra.mxu0 0
      %1235 = vmatpush.bf16.msra.mxu0 0
      %1236 = vmatpush.bf16.msra.mxu0 0
      %1237 = vmatpush.bf16.msra.mxu0 0
      %1238 = vmatpush.bf16.msra.mxu0 0
      %1239 = vmatpush.bf16.msra.mxu0 0
      %1240 = vmatpush.bf16.msra.mxu0 %v1228
      %1241 = vmatmul.bf16.gmra.mxu0 %v1225
      %v1242 = vpop.f32.mrf.mxu0
      %v1243 = vadd.f32 0.0, %v1242
      %v1244 = vpop.f32.mrf.mxu0
      %1245 = vdwg.mxu0
      %1246 = vmatpush.bf16.msra.mxu0 0
      %1247 = vmatpush.bf16.msra.mxu0 0
      %1248 = vmatpush.bf16.msra.mxu0 0
      %1249 = vmatpush.bf16.msra.mxu0 0
      %1250 = vmatpush.bf16.msra.mxu0 0
      %1251 = vmatpush.bf16.msra.mxu0 0
      %1252 = vmatpush.bf16.msra.mxu0 0
      %1253 = vmatpush.bf16.msra.mxu0 %v1231
      %1254 = vmatmul.bf16.gmra.mxu0 %v1225
      %v1255 = vpop.f32.mrf.mxu0
      %v1256 = vadd.f32 0.0, %v1255
      %v1257 = vpop.f32.mrf.mxu0
      %1258 = vdwg.mxu0
      %v1259 = vadd.f32 %v1211, %v1243
      %v1260 = vadd.f32 %v1212, %v1256
      %s1261 = scalar_lea.vmem %s0, 92
      %v1262 = vld [vmem:[%s1261] sm:$0xf]
      %1263 = vrot.lane.b32.xlu0 %v732, 48
      %v1264 = vpop.permute.xlu0 %1263
      %1265 = vrot.lane.b32.xlu0 %v733, 48
      %v1266 = vpop.permute.xlu0 %1265
      %1267 = vrot.lane.b32.xlu0 %v734, 48
      %v1268 = vpop.permute.xlu0 %1267
      %vm1269 = vcmask 392192
      %v1270 = vsel %vm1269, %v1264, %v1266
      %v1271 = vsel %vm1269, %v1266, %v1268
      %v1273 = vsel %vm191, %v1262, 0
      %v1276 = vand.u32 %v1270, %v198
      %v1279 = vand.u32 %v1271, %v198
      %1281 = vmatpush.bf16.msra.mxu0 0
      %1282 = vmatpush.bf16.msra.mxu0 0
      %1283 = vmatpush.bf16.msra.mxu0 0
      %1284 = vmatpush.bf16.msra.mxu0 0
      %1285 = vmatpush.bf16.msra.mxu0 0
      %1286 = vmatpush.bf16.msra.mxu0 0
      %1287 = vmatpush.bf16.msra.mxu0 0
      %1288 = vmatpush.bf16.msra.mxu0 %v1276
      %1289 = vmatmul.bf16.gmra.mxu0 %v1273
      %v1290 = vpop.f32.mrf.mxu0
      %v1291 = vadd.f32 0.0, %v1290
      %v1292 = vpop.f32.mrf.mxu0
      %1293 = vdwg.mxu0
      %1294 = vmatpush.bf16.msra.mxu0 0
      %1295 = vmatpush.bf16.msra.mxu0 0
      %1296 = vmatpush.bf16.msra.mxu0 0
      %1297 = vmatpush.bf16.msra.mxu0 0
      %1298 = vmatpush.bf16.msra.mxu0 0
      %1299 = vmatpush.bf16.msra.mxu0 0
      %1300 = vmatpush.bf16.msra.mxu0 0
      %1301 = vmatpush.bf16.msra.mxu0 %v1279
      %1302 = vmatmul.bf16.gmra.mxu0 %v1273
      %v1303 = vpop.f32.mrf.mxu0
      %v1304 = vadd.f32 0.0, %v1303
      %v1305 = vpop.f32.mrf.mxu0
      %1306 = vdwg.mxu0
      %v1307 = vadd.f32 %v1259, %v1291
      %v1308 = vadd.f32 %v1260, %v1304
      %s1309 = scalar_lea.vmem %s0, 96
      %v1310 = vld [vmem:[%s1309] sm:$0xf]
      %1311 = vrot.lane.b32.xlu0 %v732, 44
      %v1312 = vpop.permute.xlu0 %1311
      %1313 = vrot.lane.b32.xlu0 %v733, 44
      %v1314 = vpop.permute.xlu0 %1313
      %1315 = vrot.lane.b32.xlu0 %v734, 44
      %v1316 = vpop.permute.xlu0 %1315
      %vm1317 = vcmask 359424
      %v1318 = vsel %vm1317, %v1312, %v1314
      %v1319 = vsel %vm1317, %v1314, %v1316
      %v1321 = vsel %vm191, %v1310, 0
      %v1324 = vand.u32 %v1318, %v198
      %v1327 = vand.u32 %v1319, %v198
      %1329 = vmatpush.bf16.msra.mxu0 0
      %1330 = vmatpush.bf16.msra.mxu0 0
      %1331 = vmatpush.bf16.msra.mxu0 0
      %1332 = vmatpush.bf16.msra.mxu0 0
      %1333 = vmatpush.bf16.msra.mxu0 0
      %1334 = vmatpush.bf16.msra.mxu0 0
      %1335 = vmatpush.bf16.msra.mxu0 0
      %1336 = vmatpush.bf16.msra.mxu0 %v1324
      %1337 = vmatmul.bf16.gmra.mxu0 %v1321
      %v1338 = vpop.f32.mrf.mxu0
      %v1339 = vadd.f32 0.0, %v1338
      %v1340 = vpop.f32.mrf.mxu0
      %1341 = vdwg.mxu0
      %1342 = vmatpush.bf16.msra.mxu0 0
      %1343 = vmatpush.bf16.msra.mxu0 0
      %1344 = vmatpush.bf16.msra.mxu0 0
      %1345 = vmatpush.bf16.msra.mxu0 0
      %1346 = vmatpush.bf16.msra.mxu0 0
      %1347 = vmatpush.bf16.msra.mxu0 0
      %1348 = vmatpush.bf16.msra.mxu0 0
      %1349 = vmatpush.bf16.msra.mxu0 %v1327
      %1350 = vmatmul.bf16.gmra.mxu0 %v1321
      %v1351 = vpop.f32.mrf.mxu0
      %v1352 = vadd.f32 0.0, %v1351
      %v1353 = vpop.f32.mrf.mxu0
      %1354 = vdwg.mxu0
      %v1355 = vadd.f32 %v1307, %v1339
      %v1356 = vadd.f32 %v1308, %v1352
      %s1357 = scalar_lea.vmem %s0, 100
      %v1358 = vld [vmem:[%s1357] sm:$0xf]
      %1359 = vrot.lane.b32.xlu0 %v732, 43
      %v1360 = vpop.permute.xlu0 %1359
      %1361 = vrot.lane.b32.xlu0 %v733, 43
      %v1362 = vpop.permute.xlu0 %1361
      %1363 = vrot.lane.b32.xlu0 %v734, 43
      %v1364 = vpop.permute.xlu0 %1363
      %vm1365 = vcmask 351232
      %v1366 = vsel %vm1365, %v1360, %v1362
      %v1367 = vsel %vm1365, %v1362, %v1364
      %v1369 = vsel %vm191, %v1358, 0
      %v1372 = vand.u32 %v1366, %v198
      %v1375 = vand.u32 %v1367, %v198
      %1377 = vmatpush.bf16.msra.mxu0 0
      %1378 = vmatpush.bf16.msra.mxu0 0
      %1379 = vmatpush.bf16.msra.mxu0 0
      %1380 = vmatpush.bf16.msra.mxu0 0
      %1381 = vmatpush.bf16.msra.mxu0 0
      %1382 = vmatpush.bf16.msra.mxu0 0
      %1383 = vmatpush.bf16.msra.mxu0 0
      %1384 = vmatpush.bf16.msra.mxu0 %v1372
      %1385 = vmatmul.bf16.gmra.mxu0 %v1369
      %v1386 = vpop.f32.mrf.mxu0
      %v1387 = vadd.f32 0.0, %v1386
      %v1388 = vpop.f32.mrf.mxu0
      %1389 = vdwg.mxu0
      %1390 = vmatpush.bf16.msra.mxu0 0
      %1391 = vmatpush.bf16.msra.mxu0 0
      %1392 = vmatpush.bf16.msra.mxu0 0
      %1393 = vmatpush.bf16.msra.mxu0 0
      %1394 = vmatpush.bf16.msra.mxu0 0
      %1395 = vmatpush.bf16.msra.mxu0 0
      %1396 = vmatpush.bf16.msra.mxu0 0
      %1397 = vmatpush.bf16.msra.mxu0 %v1375
      %1398 = vmatmul.bf16.gmra.mxu0 %v1369
      %v1399 = vpop.f32.mrf.mxu0
      %v1400 = vadd.f32 0.0, %v1399
      %v1401 = vpop.f32.mrf.mxu0
      %1402 = vdwg.mxu0
      %v1403 = vadd.f32 %v1355, %v1387
      %v1404 = vadd.f32 %v1356, %v1400
      %s1405 = scalar_lea.vmem %s0, 104
      %v1406 = vld [vmem:[%s1405] sm:$0xf]
      %1407 = vrot.lane.b32.xlu0 %v732, 42
      %v1408 = vpop.permute.xlu0 %1407
      %1409 = vrot.lane.b32.xlu0 %v733, 42
      %v1410 = vpop.permute.xlu0 %1409
      %1411 = vrot.lane.b32.xlu0 %v734, 42
      %v1412 = vpop.permute.xlu0 %1411
      %vm1413 = vcmask 343040
      %v1414 = vsel %vm1413, %v1408, %v1410
      %v1415 = vsel %vm1413, %v1410, %v1412
      %v1417 = vsel %vm191, %v1406, 0
      %v1420 = vand.u32 %v1414, %v198
      %v1423 = vand.u32 %v1415, %v198
      %1425 = vmatpush.bf16.msra.mxu0 0
      %1426 = vmatpush.bf16.msra.mxu0 0
      %1427 = vmatpush.bf16.msra.mxu0 0
      %1428 = vmatpush.bf16.msra.mxu0 0
      %1429 = vmatpush.bf16.msra.mxu0 0
      %1430 = vmatpush.bf16.msra.mxu0 0
      %1431 = vmatpush.bf16.msra.mxu0 0
      %1432 = vmatpush.bf16.msra.mxu0 %v1420
      %1433 = vmatmul.bf16.gmra.mxu0 %v1417
      %v1434 = vpop.f32.mrf.mxu0
      %v1435 = vadd.f32 0.0, %v1434
      %v1436 = vpop.f32.mrf.mxu0
      %1437 = vdwg.mxu0
      %1438 = vmatpush.bf16.msra.mxu0 0
      %1439 = vmatpush.bf16.msra.mxu0 0
      %1440 = vmatpush.bf16.msra.mxu0 0
      %1441 = vmatpush.bf16.msra.mxu0 0
      %1442 = vmatpush.bf16.msra.mxu0 0
      %1443 = vmatpush.bf16.msra.mxu0 0
      %1444 = vmatpush.bf16.msra.mxu0 0
      %1445 = vmatpush.bf16.msra.mxu0 %v1423
      %1446 = vmatmul.bf16.gmra.mxu0 %v1417
      %v1447 = vpop.f32.mrf.mxu0
      %v1448 = vadd.f32 0.0, %v1447
      %v1449 = vpop.f32.mrf.mxu0
      %1450 = vdwg.mxu0
      %v1451 = vadd.f32 %v1403, %v1435
      %v1452 = vadd.f32 %v1404, %v1448
      %v1453 = vld [vmem:[%s1] sm:$0xff]
      %1455 = vset.pattern.permute.xlu0 0
      %1456 = vperm.xlu0 %1455, %v1453
      %v1457 = vpop.permute.xlu0 %1456
      %v1459 = vadd.f32 %v1451, %v1457
      %v1460 = vadd.f32 %v1452, %v1457
      %vm1461 = vcmp.gt.f32.partialorder %v1459, 0.0
      %vm1462 = vcmp.gt.f32.partialorder %v1460, 0.0
      %v1463 = vmul.f32 %v1459, 0.1
      %v1464 = vmul.f32 %v1460, 0.1
      %v1465 = vsel %vm1461, %v1459, %v1463
      %v1466 = vsel %vm1462, %v1460, %v1464
      %v1467 = vpack.c.bf16 %v1466, %v1465
      %vm1468 = vcmask 719876
      %vm1469 = vmor %vm1468, %vm195
      %1470 = vst.msk [vmem:[%s170] sm:$0xff] %vm1469, %v1467
      %p1471 = scmp.lt.s32.totalorder %s14, 1
      %s1472 = scalar_select %p1471, %s14, 1
      %s1473 = smul.addr %s1472, 2
      %s1474 = smul.addr %s1473, 4
      %s1475 = scalar_lea.vmem %s3, %s1474
      // Predicated region
      $region33: #{_lambda_.5} parent=31 // pred_check
        %p1476 = pneg %p100
      $region34: #{_lambda_.5} parent=31 // pred_check_branch
        %1478 = sbr.rel (%p1476) target = $region36
      $region35: #{_lambda_.5} parent=31 // pred_region
        _
      $region36: #{_lambda_.5} parent=31 // pred_fallthru
        _
    $region32: #{_lambda_.5} parent=5 // pred_fallthru
      _
    %p1479 = scmp.le.s32.totalorder 2, %s9
    // Predicated region
    $region37: #{_lambda_.5} parent=5 // pred_check
      %p1480 = pneg %p1479
    $region38: #{_lambda_.5} parent=5 // pred_check_branch
      %1482 = sbr.rel (%p1480) target = $region40
    $region39: #{_lambda_.5} parent=5 // pred_region
      %s1483 = ssub.s32 %s9, 2
      // Predicated region
      $region41: #{_lambda_.5} parent=39 // pred_check
        %p1484 = pneg %p106
      $region42: #{_lambda_.5} parent=39 // pred_check_branch
        %1486 = sbr.rel (%p1484) target = $region44
      $region43: #{_lambda_.5} parent=39 // pred_region
        %p1487 = scmp.lt.s32.totalorder %s15, 1
        %s1488 = scalar_select %p1487, %s15, 1
        %s1489 = smul.addr %s1488, 2
        %s1490 = smul.addr %s1489, 4
        %s1491 = scalar_lea.vmem %s3, %s1490
      $region44: #{_lambda_.5} parent=39 // pred_fallthru
        _
    $region40: #{_lambda_.5} parent=5 // pred_fallthru
      _
  $region6: #{_lambda_.5} parent=0 // loop_footer
    %s13 = sadd.s32 1, %s9
  $region7: #{_lambda_.5} parent=0 // loop_footer_branch
    %8 = sbr.rel target = $region3
  $region8: #{_lambda_.5} parent=0 // loop_exit
    _

// kernel: _lambda_.6
$region0: #{_lambda_.6}
  #allocation0 [shape = 'u32[]', space=smem, size = 0x4, offset = 0x4, fixed_abs, tag = 'smem constant byte address 0x4 - core index']
  #allocation1 [shape = 'u32[72,128]{1,0:T(1,128)}', space=vmem, size = 0x9000, scoped, tag = 'internal scratch']
  %s0 = inlined_call_operand.vmem [shape: bf16[27,8,8], index: 0, kind: input, shape index: {}]
  %s1 = inlined_call_operand.vmem [shape: f32[8,1], index: 1, kind: input, shape index: {}]
  %s2 = inlined_call_operand.vmem [shape: bf16[2,8,302], index: 2, kind: input, shape index: {}]
  %s3 = inlined_call_operand.vmem [shape: bf16[2,8,216], index: 3, kind: output, shape index: {}]
  %s4 = sld [smem:[#allocation0]]
  $region45: #{_lambda_.6} parent=0
    _
  %s6 = ssub.s32 1, %s4
  %s7 = scalar_select 0, %s6, %s4
  loop: start=0, step=1, limit=4
  $region2: #{_lambda_.6} parent=0 // loop_pre_header
    _
  $region3: #{_lambda_.6} parent=0 // loop_header
    %s9 = sphi 0, %s13
    %p10 = scmp.ge.s32.totalorder %s9, 4
    %s17 = sphi 0, %s17
    %s19 = sphi 0, %s17
    %s20 = sphi 0, %s19
    %s34 = sphi 0, %s20
    %s38 = sphi 0, %s38
    %s40 = sphi 0, %s38
    %s41 = sphi 0, %s40
    %s55 = sphi 0, %s41
    %s61 = sphi 0, %s63
    %s64 = sphi 0, %s61
    %s65 = sphi 0, %s64
    %s81 = sphi 0, %s65
    %s87 = sphi 0, %s89
    %s90 = sphi 0, %s87
    %s91 = sphi 0, %s90
    %s107 = sphi 0, %s91
  $region4: #{_lambda_.6} parent=0 // loop_header_branch
    %12 = sbr.rel (%p10) target = $region8
  $region5: #{_lambda_.6} parent=0 // loop_body
    %s14 = ssub.s32 %s9, 1
    %s15 = ssub.s32 %s9, 2
    %s16 = sadd.s32 %s9, 1
    %s18 = sadd.s32 %s17, 1
    %p21 = scmp.eq.s32.totalorder %s9, 1
    %p22 = scmp.ne.s32.totalorder %s17, %s19
    %p23 = scmp.eq.s32.totalorder %s9, 0
    %p24 = por %p22, %p23
    %p25 = scmp.ne.s32.totalorder %s17, %s19
    %p26 = scmp.eq.s32.totalorder %s14, 1
    %p27 = por %p25, %p26
    %p28 = scmp.ne.s32.totalorder %s19, %s20
    %p29 = scmp.eq.s32.totalorder %s14, 0
    %p30 = por %p28, %p29
    %p31 = scmp.ne.s32.totalorder %s19, %s20
    %p32 = scmp.eq.s32.totalorder %s15, 1
    %p33 = por %p31, %p32
    %p35 = scmp.ne.s32.totalorder %s20, %s34
    %p36 = scmp.eq.s32.totalorder %s15, 0
    %p37 = por %p35, %p36
    %s39 = sadd.s32 %s38, 1
    %p42 = scmp.eq.s32.totalorder %s9, 1
    %p43 = scmp.ne.s32.totalorder %s38, %s40
    %p44 = scmp.eq.s32.totalorder %s9, 0
    %p45 = por %p43, %p44
    %p46 = scmp.ne.s32.totalorder %s38, %s40
    %p47 = scmp.eq.s32.totalorder %s14, 1
    %p48 = por %p46, %p47
    %p49 = scmp.ne.s32.totalorder %s40, %s41
    %p50 = scmp.eq.s32.totalorder %s14, 0
    %p51 = por %p49, %p50
    %p52 = scmp.ne.s32.totalorder %s40, %s41
    %p53 = scmp.eq.s32.totalorder %s15, 1
    %p54 = por %p52, %p53
    %p56 = scmp.ne.s32.totalorder %s41, %s55
    %p57 = scmp.eq.s32.totalorder %s15, 0
    %p58 = por %p56, %p57
    %s59 = ssub.s32 %s9, %s16
    %p60 = scmp.eq.s32.totalorder %s59, 0
    %s62 = sadd.s32 %s61, 1
    %s63 = scalar_select %p60, %s61, %s62
    %p66 = pneg %p60
    %p67 = scmp.eq.s32.totalorder %s9, 1
    %p68 = por %p66, %p67
    %p69 = scmp.ne.s32.totalorder %s61, %s64
    %p70 = scmp.eq.s32.totalorder %s9, 0
    %p71 = por %p69, %p70
    %p72 = scmp.ne.s32.totalorder %s61, %s64
    %p73 = scmp.eq.s32.totalorder %s14, 1
    %p74 = por %p72, %p73
    %p75 = scmp.ne.s32.totalorder %s64, %s65
    %p76 = scmp.eq.s32.totalorder %s14, 0
    %p77 = por %p75, %p76
    %p78 = scmp.ne.s32.totalorder %s64, %s65
    %p79 = scmp.eq.s32.totalorder %s15, 1
    %p80 = por %p78, %p79
    %p82 = scmp.ne.s32.totalorder %s65, %s81
    %p83 = scmp.eq.s32.totalorder %s15, 0
    %p84 = por %p82, %p83
    %s85 = ssub.s32 %s9, %s16
    %p86 = scmp.eq.s32.totalorder %s85, 0
    %s88 = sadd.s32 %s87, 1
    %s89 = scalar_select %p86, %s87, %s88
    %p92 = pneg %p86
    %p93 = scmp.eq.s32.totalorder %s9, 1
    %p94 = por %p92, %p93
    %p95 = scmp.ne.s32.totalorder %s87, %s90
    %p96 = scmp.eq.s32.totalorder %s9, 0
    %p97 = por %p95, %p96
    %p98 = scmp.ne.s32.totalorder %s87, %s90
    %p99 = scmp.eq.s32.totalorder %s14, 1
    %p100 = por %p98, %p99
    %p101 = scmp.ne.s32.totalorder %s90, %s91
    %p102 = scmp.eq.s32.totalorder %s14, 0
    %p103 = por %p101, %p102
    %p104 = scmp.ne.s32.totalorder %s90, %s91
    %p105 = scmp.eq.s32.totalorder %s15, 1
    %p106 = por %p104, %p105
    %p108 = scmp.ne.s32.totalorder %s91, %s107
    %p109 = scmp.eq.s32.totalorder %s15, 0
    %p110 = por %p108, %p109
    %p111 = scmp.le.s32.totalorder 1, %s9
    %p112 = scmp.lt.s32.totalorder %s9, 3
    %p113 = pnand %p111, %p112
    %p114 = pneg %p113
    // Predicated region
    $region9: #{_lambda_.6} parent=5 // pred_check
      _
    $region10: #{_lambda_.6} parent=5 // pred_check_branch
      %116 = sbr.rel (%p113) target = $region12
    $region11: #{_lambda_.6} parent=5 // pred_region
      %s117 = ssub.s32 %s9, 1
      // Predicated region
      $region13: #{_lambda_.6} parent=11 // pred_check
        %p118 = pneg %p30
      $region14: #{_lambda_.6} parent=11 // pred_check_branch
        %120 = sbr.rel (%p118) target = $region16
      $region15: #{_lambda_.6} parent=11 // pred_region
        _
      $region16: #{_lambda_.6} parent=11 // pred_fallthru
        _
      // Predicated region
      $region17: #{_lambda_.6} parent=11 // pred_check
        %p121 = pneg %p51
      $region18: #{_lambda_.6} parent=11 // pred_check_branch
        %123 = sbr.rel (%p121) target = $region20
      $region19: #{_lambda_.6} parent=11 // pred_region
        _
      $region20: #{_lambda_.6} parent=11 // pred_fallthru
        _
    $region12: #{_lambda_.6} parent=5 // pred_fallthru
      _
    %p124 = scmp.lt.s32.totalorder %s9, 2
    // Predicated region
    $region21: #{_lambda_.6} parent=5 // pred_check
      %p125 = pneg %p124
    $region22: #{_lambda_.6} parent=5 // pred_check_branch
      %127 = sbr.rel (%p125) target = $region24
    $region23: #{_lambda_.6} parent=5 // pred_region
      // Predicated region
      $region25: #{_lambda_.6} parent=23 // pred_check
        %p128 = pneg %p71
      $region26: #{_lambda_.6} parent=23 // pred_check_branch
        %130 = sbr.rel (%p128) target = $region28
      $region27: #{_lambda_.6} parent=23 // pred_region
        %p131 = scmp.lt.s32.totalorder %s9, 1
        %s132 = scalar_select %p131, %s9, 1
        %s133 = smul.addr %s132, 3
        %s134 = smul.addr %s133, 4
        %s135 = scalar_lea.vmem %s2, %s134
      $region28: #{_lambda_.6} parent=23 // pred_fallthru
        _
    $region24: #{_lambda_.6} parent=5 // pred_fallthru
      _
    %p136 = scmp.le.s32.totalorder 1, %s9
    %p137 = scmp.lt.s32.totalorder %s9, 3
    %p138 = pnand %p136, %p137
    %p139 = pneg %p138
    // Predicated region
    $region29: #{_lambda_.6} parent=5 // pred_check
      _
    $region30: #{_lambda_.6} parent=5 // pred_check_branch
      %141 = sbr.rel (%p138) target = $region32
    $region31: #{_lambda_.6} parent=5 // pred_region
      %s142 = ssub.s32 %s9, 1
      %p143 = pneg %p30
      %p144 = pneg %p27
      %p145 = pneg %p51
      %p146 = pneg %p48
      %p147 = scmp.lt.s32.totalorder %s14, 1
      %s148 = scalar_select %p147, %s14, 1
      %s149 = smul.addr %s148, 3
      %s150 = smul.addr %s149, 4
      %s151 = scalar_lea.vmem %s2, %s150
      %p152 = pneg %p77
      %p153 = pneg %p74
      %p154 = pneg %p103
      %p155 = pneg %p100
      %p156 = scmp.lt.s32.totalorder %s14, 1
      %s157 = scalar_select %p156, %s14, 1
      %s158 = smul.addr %s157, 2
      %s159 = smul.addr %s158, 4
      %s160 = scalar_lea.vmem %s3, %s159
      %p161 = scmp.lt.s32.totalorder %s14, 1
      %s162 = scalar_select %p161, %s14, 1
      %s163 = smul.addr %s162, 3
      %s164 = smul.addr %s163, 4
      %s165 = scalar_lea.vmem %s2, %s164
      %p166 = scmp.lt.s32.totalorder %s14, 1
      %s167 = scalar_select %p166, %s14, 1
      %s168 = smul.addr %s167, 2
      %s169 = smul.addr %s168, 4
      %s170 = scalar_lea.vmem %s3, %s169
      %v172 = vld [vmem:[%s165] sm:$0xff]
      %v173 = vld [vmem:[%s0] sm:$0xf]
      %s174 = scalar_lea.vmem %s0, 4
      %v175 = vld [vmem:[%s174] sm:$0xf]
      %v177 = vunpack.c.l.b16 %v172
      %v178 = vunpack.c.h.b16 %v172
      %v179 = vpack.c.b16 %v177, %v177
      %v180 = vpack.c.b16 %v178, %v178
      %181 = vrot.lane.b32.xlu0 %v179, 127
      %v182 = vpop.permute.xlu0 %181
      %183 = vrot.lane.b32.xlu0 %v180, 127
      %v184 = vpop.permute.xlu0 %183
      %vm185 = vcmask 1039360
      %v186 = vsel %vm185, %v182, %v184
      %vm187 = vcmask 64512
      %v189 = vsel %vm187, %v175, 0
      %vm191 = vcmask 1043456
      %v193 = vsel %vm191, %v186, 0
      %v196 = vsel %vm191, %v184, 0
      %198 = vmatpush.bf16.msra.mxu0 0
      %199 = vmatpush.bf16.msra.mxu0 0
      %200 = vmatpush.bf16.msra.mxu0 0
      %201 = vmatpush.bf16.msra.mxu0 0
      %202 = vmatpush.bf16.msra.mxu0 0
      %203 = vmatpush.bf16.msra.mxu0 0
      %204 = vmatpush.bf16.msra.mxu0 0
      %205 = vmatpush.bf16.msra.mxu0 %v193
      %206 = vmatmul.bf16.gmra.mxu0 %v189
      %v207 = vpop.f32.mrf.mxu0
      %v208 = vadd.f32 0.0, %v207
      %v209 = vpop.f32.mrf.mxu0
      %210 = vdwg.mxu0
      %211 = vmatpush.bf16.msra.mxu0 0
      %212 = vmatpush.bf16.msra.mxu0 0
      %213 = vmatpush.bf16.msra.mxu0 0
      %214 = vmatpush.bf16.msra.mxu0 0
      %215 = vmatpush.bf16.msra.mxu0 0
      %216 = vmatpush.bf16.msra.mxu0 0
      %217 = vmatpush.bf16.msra.mxu0 0
      %218 = vmatpush.bf16.msra.mxu0 %v196
      %219 = vmatmul.bf16.gmra.mxu0 %v189
      %v220 = vpop.f32.mrf.mxu0
      %v221 = vadd.f32 0.0, %v220
      %v222 = vpop.f32.mrf.mxu0
      %223 = vdwg.mxu0
      %v225 = vsel %vm187, %v173, 0
      %v228 = vsel %vm191, %v179, 0
      %v231 = vsel %vm191, %v180, 0
      %233 = vmatpush.bf16.msra.mxu0 0
      %234 = vmatpush.bf16.msra.mxu0 0
      %235 = vmatpush.bf16.msra.mxu0 0
      %236 = vmatpush.bf16.msra.mxu0 0
      %237 = vmatpush.bf16.msra.mxu0 0
      %238 = vmatpush.bf16.msra.mxu0 0
      %239 = vmatpush.bf16.msra.mxu0 0
      %240 = vmatpush.bf16.msra.mxu0 %v228
      %241 = vmatmul.bf16.gmra.mxu0 %v225
      %v242 = vpop.f32.mrf.mxu0
      %v243 = vadd.f32 %v208, %v242
      %v244 = vpop.f32.mrf.mxu0
      %245 = vdwg.mxu0
      %246 = vmatpush.bf16.msra.mxu0 0
      %247 = vmatpush.bf16.msra.mxu0 0
      %248 = vmatpush.bf16.msra.mxu0 0
      %249 = vmatpush.bf16.msra.mxu0 0
      %250 = vmatpush.bf16.msra.mxu0 0
      %251 = vmatpush.bf16.msra.mxu0 0
      %252 = vmatpush.bf16.msra.mxu0 0
      %253 = vmatpush.bf16.msra.mxu0 %v231
      %254 = vmatmul.bf16.gmra.mxu0 %v225
      %v255 = vpop.f32.mrf.mxu0
      %v256 = vadd.f32 %v221, %v255
      %v257 = vpop.f32.mrf.mxu0
      %258 = vdwg.mxu0
      %s259 = scalar_lea.vmem %s0, 8
      %v260 = vld [vmem:[%s259] sm:$0xf]
      %261 = vrot.lane.b32.xlu0 %v179, 126
      %v262 = vpop.permute.xlu0 %261
      %263 = vrot.lane.b32.xlu0 %v180, 126
      %v264 = vpop.permute.xlu0 %263
      %vm265 = vcmask 1031168
      %v266 = vsel %vm265, %v262, %v264
      %v268 = vsel %vm187, %v260, 0
      %v271 = vsel %vm191, %v266, 0
      %v274 = vsel %vm191, %v264, 0
      %276 = vmatpush.bf16.msra.mxu0 0
      %277 = vmatpush.bf16.msra.mxu0 0
      %278 = vmatpush.bf16.msra.mxu0 0
      %279 = vmatpush.bf16.msra.mxu0 0
      %280 = vmatpush.bf16.msra.mxu0 0
      %281 = vmatpush.bf16.msra.mxu0 0
      %282 = vmatpush.bf16.msra.mxu0 0
      %283 = vmatpush.bf16.msra.mxu0 %v271
      %284 = vmatmul.bf16.gmra.mxu0 %v268
      %v285 = vpop.f32.mrf.mxu0
      %v286 = vadd.f32 0.0, %v285
      %v287 = vpop.f32.mrf.mxu0
      %288 = vdwg.mxu0
      %289 = vmatpush.bf16.msra.mxu0 0
      %290 = vmatpush.bf16.msra.mxu0 0
      %291 = vmatpush.bf16.msra.mxu0 0
      %292 = vmatpush.bf16.msra.mxu0 0
      %293 = vmatpush.bf16.msra.mxu0 0
      %294 = vmatpush.bf16.msra.mxu0 0
      %295 = vmatpush.bf16.msra.mxu0 0
      %296 = vmatpush.bf16.msra.mxu0 %v274
      %297 = vmatmul.bf16.gmra.mxu0 %v268
      %v298 = vpop.f32.mrf.mxu0
      %v299 = vadd.f32 0.0, %v298
      %v300 = vpop.f32.mrf.mxu0
      %301 = vdwg.mxu0
      %v302 = vadd.f32 %v243, %v286
      %v303 = vadd.f32 %v256, %v299
      %s304 = scalar_lea.vmem %s0, 12
      %v305 = vld [vmem:[%s304] sm:$0xf]
      %306 = vrot.lane.b32.xlu0 %v179, 122
      %v307 = vpop.permute.xlu0 %306
      %308 = vrot.lane.b32.xlu0 %v180, 122
      %v309 = vpop.permute.xlu0 %308
      %vm310 = vcmask 998400
      %v311 = vsel %vm310, %v307, %v309
      %v313 = vsel %vm187, %v305, 0
      %v316 = vsel %vm191, %v311, 0
      %v319 = vsel %vm191, %v309, 0
      %321 = vmatpush.bf16.msra.mxu0 0
      %322 = vmatpush.bf16.msra.mxu0 0
      %323 = vmatpush.bf16.msra.mxu0 0
      %324 = vmatpush.bf16.msra.mxu0 0
      %325 = vmatpush.bf16.msra.mxu0 0
      %326 = vmatpush.bf16.msra.mxu0 0
      %327 = vmatpush.bf16.msra.mxu0 0
      %328 = vmatpush.bf16.msra.mxu0 %v316
      %329 = vmatmul.bf16.gmra.mxu0 %v313
      %v330 = vpop.f32.mrf.mxu0
      %v331 = vadd.f32 0.0, %v330
      %v332 = vpop.f32.mrf.mxu0
      %333 = vdwg.mxu0
      %334 = vmatpush.bf16.msra.mxu0 0
      %335 = vmatpush.bf16.msra.mxu0 0
      %336 = vmatpush.bf16.msra.mxu0 0
      %337 = vmatpush.bf16.msra.mxu0 0
      %338 = vmatpush.bf16.msra.mxu0 0
      %339 = vmatpush.bf16.msra.mxu0 0
      %340 = vmatpush.bf16.msra.mxu0 0
      %341 = vmatpush.bf16.msra.mxu0 %v319
      %342 = vmatmul.bf16.gmra.mxu0 %v313
      %v343 = vpop.f32.mrf.mxu0
      %v344 = vadd.f32 0.0, %v343
      %v345 = vpop.f32.mrf.mxu0
      %346 = vdwg.mxu0
      %v347 = vadd.f32 %v302, %v331
      %v348 = vadd.f32 %v303, %v344
      %s349 = scalar_lea.vmem %s0, 16
      %v350 = vld [vmem:[%s349] sm:$0xf]
      %351 = vrot.lane.b32.xlu0 %v179, 121
      %v352 = vpop.permute.xlu0 %351
      %353 = vrot.lane.b32.xlu0 %v180, 121
      %v354 = vpop.permute.xlu0 %353
      %vm355 = vcmask 990208
      %v356 = vsel %vm355, %v352, %v354
      %v358 = vsel %vm187, %v350, 0
      %v361 = vsel %vm191, %v356, 0
      %v364 = vsel %vm191, %v354, 0
      %366 = vmatpush.bf16.msra.mxu0 0
      %367 = vmatpush.bf16.msra.mxu0 0
      %368 = vmatpush.bf16.msra.mxu0 0
      %369 = vmatpush.bf16.msra.mxu0 0
      %370 = vmatpush.bf16.msra.mxu0 0
      %371 = vmatpush.bf16.msra.mxu0 0
      %372 = vmatpush.bf16.msra.mxu0 0
      %373 = vmatpush.bf16.msra.mxu0 %v361
      %374 = vmatmul.bf16.gmra.mxu0 %v358
      %v375 = vpop.f32.mrf.mxu0
      %v376 = vadd.f32 0.0, %v375
      %v377 = vpop.f32.mrf.mxu0
      %378 = vdwg.mxu0
      %379 = vmatpush.bf16.msra.mxu0 0
      %380 = vmatpush.bf16.msra.mxu0 0
      %381 = vmatpush.bf16.msra.mxu0 0
      %382 = vmatpush.bf16.msra.mxu0 0
      %383 = vmatpush.bf16.msra.mxu0 0
      %384 = vmatpush.bf16.msra.mxu0 0
      %385 = vmatpush.bf16.msra.mxu0 0
      %386 = vmatpush.bf16.msra.mxu0 %v364
      %387 = vmatmul.bf16.gmra.mxu0 %v358
      %v388 = vpop.f32.mrf.mxu0
      %v389 = vadd.f32 0.0, %v388
      %v390 = vpop.f32.mrf.mxu0
      %391 = vdwg.mxu0
      %v392 = vadd.f32 %v347, %v376
      %v393 = vadd.f32 %v348, %v389
      %s394 = scalar_lea.vmem %s0, 20
      %v395 = vld [vmem:[%s394] sm:$0xf]
      %396 = vrot.lane.b32.xlu0 %v179, 120
      %v397 = vpop.permute.xlu0 %396
      %398 = vrot.lane.b32.xlu0 %v180, 120
      %v399 = vpop.permute.xlu0 %398
      %vm400 = vcmask 982016
      %v401 = vsel %vm400, %v397, %v399
      %v403 = vsel %vm187, %v395, 0
      %v406 = vsel %vm191, %v401, 0
      %v409 = vsel %vm191, %v399, 0
      %411 = vmatpush.bf16.msra.mxu0 0
      %412 = vmatpush.bf16.msra.mxu0 0
      %413 = vmatpush.bf16.msra.mxu0 0
      %414 = vmatpush.bf16.msra.mxu0 0
      %415 = vmatpush.bf16.msra.mxu0 0
      %416 = vmatpush.bf16.msra.mxu0 0
      %417 = vmatpush.bf16.msra.mxu0 0
      %418 = vmatpush.bf16.msra.mxu0 %v406
      %419 = vmatmul.bf16.gmra.mxu0 %v403
      %v420 = vpop.f32.mrf.mxu0
      %v421 = vadd.f32 0.0, %v420
      %v422 = vpop.f32.mrf.mxu0
      %423 = vdwg.mxu0
      %424 = vmatpush.bf16.msra.mxu0 0
      %425 = vmatpush.bf16.msra.mxu0 0
      %426 = vmatpush.bf16.msra.mxu0 0
      %427 = vmatpush.bf16.msra.mxu0 0
      %428 = vmatpush.bf16.msra.mxu0 0
      %429 = vmatpush.bf16.msra.mxu0 0
      %430 = vmatpush.bf16.msra.mxu0 0
      %431 = vmatpush.bf16.msra.mxu0 %v409
      %432 = vmatmul.bf16.gmra.mxu0 %v403
      %v433 = vpop.f32.mrf.mxu0
      %v434 = vadd.f32 0.0, %v433
      %v435 = vpop.f32.mrf.mxu0
      %436 = vdwg.mxu0
      %v437 = vadd.f32 %v392, %v421
      %v438 = vadd.f32 %v393, %v434
      %s439 = scalar_lea.vmem %s0, 24
      %v440 = vld [vmem:[%s439] sm:$0xf]
      %441 = vrot.lane.b32.xlu0 %v179, 116
      %v442 = vpop.permute.xlu0 %441
      %443 = vrot.lane.b32.xlu0 %v180, 116
      %v444 = vpop.permute.xlu0 %443
      %vm445 = vcmask 949248
      %v446 = vsel %vm445, %v442, %v444
      %v448 = vsel %vm187, %v440, 0
      %v451 = vsel %vm191, %v446, 0
      %v454 = vsel %vm191, %v444, 0
      %456 = vmatpush.bf16.msra.mxu0 0
      %457 = vmatpush.bf16.msra.mxu0 0
      %458 = vmatpush.bf16.msra.mxu0 0
      %459 = vmatpush.bf16.msra.mxu0 0
      %460 = vmatpush.bf16.msra.mxu0 0
      %461 = vmatpush.bf16.msra.mxu0 0
      %462 = vmatpush.bf16.msra.mxu0 0
      %463 = vmatpush.bf16.msra.mxu0 %v451
      %464 = vmatmul.bf16.gmra.mxu0 %v448
      %v465 = vpop.f32.mrf.mxu0
      %v466 = vadd.f32 0.0, %v465
      %v467 = vpop.f32.mrf.mxu0
      %468 = vdwg.mxu0
      %469 = vmatpush.bf16.msra.mxu0 0
      %470 = vmatpush.bf16.msra.mxu0 0
      %471 = vmatpush.bf16.msra.mxu0 0
      %472 = vmatpush.bf16.msra.mxu0 0
      %473 = vmatpush.bf16.msra.mxu0 0
      %474 = vmatpush.bf16.msra.mxu0 0
      %475 = vmatpush.bf16.msra.mxu0 0
      %476 = vmatpush.bf16.msra.mxu0 %v454
      %477 = vmatmul.bf16.gmra.mxu0 %v448
      %v478 = vpop.f32.mrf.mxu0
      %v479 = vadd.f32 0.0, %v478
      %v480 = vpop.f32.mrf.mxu0
      %481 = vdwg.mxu0
      %v482 = vadd.f32 %v437, %v466
      %v483 = vadd.f32 %v438, %v479
      %s484 = scalar_lea.vmem %s0, 28
      %v485 = vld [vmem:[%s484] sm:$0xf]
      %486 = vrot.lane.b32.xlu0 %v179, 115
      %v487 = vpop.permute.xlu0 %486
      %488 = vrot.lane.b32.xlu0 %v180, 115
      %v489 = vpop.permute.xlu0 %488
      %vm490 = vcmask 941056
      %v491 = vsel %vm490, %v487, %v489
      %v493 = vsel %vm187, %v485, 0
      %v496 = vsel %vm191, %v491, 0
      %v499 = vsel %vm191, %v489, 0
      %501 = vmatpush.bf16.msra.mxu0 0
      %502 = vmatpush.bf16.msra.mxu0 0
      %503 = vmatpush.bf16.msra.mxu0 0
      %504 = vmatpush.bf16.msra.mxu0 0
      %505 = vmatpush.bf16.msra.mxu0 0
      %506 = vmatpush.bf16.msra.mxu0 0
      %507 = vmatpush.bf16.msra.mxu0 0
      %508 = vmatpush.bf16.msra.mxu0 %v496
      %509 = vmatmul.bf16.gmra.mxu0 %v493
      %v510 = vpop.f32.mrf.mxu0
      %v511 = vadd.f32 0.0, %v510
      %v512 = vpop.f32.mrf.mxu0
      %513 = vdwg.mxu0
      %514 = vmatpush.bf16.msra.mxu0 0
      %515 = vmatpush.bf16.msra.mxu0 0
      %516 = vmatpush.bf16.msra.mxu0 0
      %517 = vmatpush.bf16.msra.mxu0 0
      %518 = vmatpush.bf16.msra.mxu0 0
      %519 = vmatpush.bf16.msra.mxu0 0
      %520 = vmatpush.bf16.msra.mxu0 0
      %521 = vmatpush.bf16.msra.mxu0 %v499
      %522 = vmatmul.bf16.gmra.mxu0 %v493
      %v523 = vpop.f32.mrf.mxu0
      %v524 = vadd.f32 0.0, %v523
      %v525 = vpop.f32.mrf.mxu0
      %526 = vdwg.mxu0
      %v527 = vadd.f32 %v482, %v511
      %v528 = vadd.f32 %v483, %v524
      %s529 = scalar_lea.vmem %s0, 32
      %v530 = vld [vmem:[%s529] sm:$0xf]
      %531 = vrot.lane.b32.xlu0 %v179, 114
      %v532 = vpop.permute.xlu0 %531
      %533 = vrot.lane.b32.xlu0 %v180, 114
      %v534 = vpop.permute.xlu0 %533
      %vm535 = vcmask 932864
      %v536 = vsel %vm535, %v532, %v534
      %v538 = vsel %vm187, %v530, 0
      %v541 = vsel %vm191, %v536, 0
      %v544 = vsel %vm191, %v534, 0
      %546 = vmatpush.bf16.msra.mxu0 0
      %547 = vmatpush.bf16.msra.mxu0 0
      %548 = vmatpush.bf16.msra.mxu0 0
      %549 = vmatpush.bf16.msra.mxu0 0
      %550 = vmatpush.bf16.msra.mxu0 0
      %551 = vmatpush.bf16.msra.mxu0 0
      %552 = vmatpush.bf16.msra.mxu0 0
      %553 = vmatpush.bf16.msra.mxu0 %v541
      %554 = vmatmul.bf16.gmra.mxu0 %v538
      %v555 = vpop.f32.mrf.mxu0
      %v556 = vadd.f32 0.0, %v555
      %v557 = vpop.f32.mrf.mxu0
      %558 = vdwg.mxu0
      %559 = vmatpush.bf16.msra.mxu0 0
      %560 = vmatpush.bf16.msra.mxu0 0
      %561 = vmatpush.bf16.msra.mxu0 0
      %562 = vmatpush.bf16.msra.mxu0 0
      %563 = vmatpush.bf16.msra.mxu0 0
      %564 = vmatpush.bf16.msra.mxu0 0
      %565 = vmatpush.bf16.msra.mxu0 0
      %566 = vmatpush.bf16.msra.mxu0 %v544
      %567 = vmatmul.bf16.gmra.mxu0 %v538
      %v568 = vpop.f32.mrf.mxu0
      %v569 = vadd.f32 0.0, %v568
      %v570 = vpop.f32.mrf.mxu0
      %571 = vdwg.mxu0
      %v572 = vadd.f32 %v527, %v556
      %v573 = vadd.f32 %v528, %v569
      %s574 = scalar_lea.vmem %s0, 36
      %v575 = vld [vmem:[%s574] sm:$0xf]
      %576 = vrot.lane.b32.xlu0 %v179, 92
      %v577 = vpop.permute.xlu0 %576
      %578 = vrot.lane.b32.xlu0 %v180, 92
      %v579 = vpop.permute.xlu0 %578
      %vm580 = vcmask 752640
      %v581 = vsel %vm580, %v577, %v579
      %v583 = vsel %vm187, %v575, 0
      %v586 = vsel %vm191, %v581, 0
      %v589 = vsel %vm191, %v579, 0
      %591 = vmatpush.bf16.msra.mxu0 0
      %592 = vmatpush.bf16.msra.mxu0 0
      %593 = vmatpush.bf16.msra.mxu0 0
      %594 = vmatpush.bf16.msra.mxu0 0
      %595 = vmatpush.bf16.msra.mxu0 0
      %596 = vmatpush.bf16.msra.mxu0 0
      %597 = vmatpush.bf16.msra.mxu0 0
      %598 = vmatpush.bf16.msra.mxu0 %v586
      %599 = vmatmul.bf16.gmra.mxu0 %v583
      %v600 = vpop.f32.mrf.mxu0
      %v601 = vadd.f32 0.0, %v600
      %v602 = vpop.f32.mrf.mxu0
      %603 = vdwg.mxu0
      %604 = vmatpush.bf16.msra.mxu0 0
      %605 = vmatpush.bf16.msra.mxu0 0
      %606 = vmatpush.bf16.msra.mxu0 0
      %607 = vmatpush.bf16.msra.mxu0 0
      %608 = vmatpush.bf16.msra.mxu0 0
      %609 = vmatpush.bf16.msra.mxu0 0
      %610 = vmatpush.bf16.msra.mxu0 0
      %611 = vmatpush.bf16.msra.mxu0 %v589
      %612 = vmatmul.bf16.gmra.mxu0 %v583
      %v613 = vpop.f32.mrf.mxu0
      %v614 = vadd.f32 0.0, %v613
      %v615 = vpop.f32.mrf.mxu0
      %616 = vdwg.mxu0
      %v617 = vadd.f32 %v572, %v601
      %v618 = vadd.f32 %v573, %v614
      %s619 = scalar_lea.vmem %s0, 40
      %v620 = vld [vmem:[%s619] sm:$0xf]
      %621 = vrot.lane.b32.xlu0 %v179, 91
      %v622 = vpop.permute.xlu0 %621
      %623 = vrot.lane.b32.xlu0 %v180, 91
      %v624 = vpop.permute.xlu0 %623
      %vm625 = vcmask 744448
      %v626 = vsel %vm625, %v622, %v624
      %v628 = vsel %vm187, %v620, 0
      %v631 = vsel %vm191, %v626, 0
      %v634 = vsel %vm191, %v624, 0
      %636 = vmatpush.bf16.msra.mxu0 0
      %637 = vmatpush.bf16.msra.mxu0 0
      %638 = vmatpush.bf16.msra.mxu0 0
      %639 = vmatpush.bf16.msra.mxu0 0
      %640 = vmatpush.bf16.msra.mxu0 0
      %641 = vmatpush.bf16.msra.mxu0 0
      %642 = vmatpush.bf16.msra.mxu0 0
      %643 = vmatpush.bf16.msra.mxu0 %v631
      %644 = vmatmul.bf16.gmra.mxu0 %v628
      %v645 = vpop.f32.mrf.mxu0
      %v646 = vadd.f32 0.0, %v645
      %v647 = vpop.f32.mrf.mxu0
      %648 = vdwg.mxu0
      %649 = vmatpush.bf16.msra.mxu0 0
      %650 = vmatpush.bf16.msra.mxu0 0
      %651 = vmatpush.bf16.msra.mxu0 0
      %652 = vmatpush.bf16.msra.mxu0 0
      %653 = vmatpush.bf16.msra.mxu0 0
      %654 = vmatpush.bf16.msra.mxu0 0
      %655 = vmatpush.bf16.msra.mxu0 0
      %656 = vmatpush.bf16.msra.mxu0 %v634
      %657 = vmatmul.bf16.gmra.mxu0 %v628
      %v658 = vpop.f32.mrf.mxu0
      %v659 = vadd.f32 0.0, %v658
      %v660 = vpop.f32.mrf.mxu0
      %661 = vdwg.mxu0
      %v662 = vadd.f32 %v617, %v646
      %v663 = vadd.f32 %v618, %v659
      %s664 = scalar_lea.vmem %s0, 44
      %v665 = vld [vmem:[%s664] sm:$0xf]
      %666 = vrot.lane.b32.xlu0 %v179, 90
      %v667 = vpop.permute.xlu0 %666
      %668 = vrot.lane.b32.xlu0 %v180, 90
      %v669 = vpop.permute.xlu0 %668
      %vm670 = vcmask 736256
      %v671 = vsel %vm670, %v667, %v669
      %v673 = vsel %vm187, %v665, 0
      %v676 = vsel %vm191, %v671, 0
      %v679 = vsel %vm191, %v669, 0
      %681 = vmatpush.bf16.msra.mxu0 0
      %682 = vmatpush.bf16.msra.mxu0 0
      %683 = vmatpush.bf16.msra.mxu0 0
      %684 = vmatpush.bf16.msra.mxu0 0
      %685 = vmatpush.bf16.msra.mxu0 0
      %686 = vmatpush.bf16.msra.mxu0 0
      %687 = vmatpush.bf16.msra.mxu0 0
      %688 = vmatpush.bf16.msra.mxu0 %v676
      %689 = vmatmul.bf16.gmra.mxu0 %v673
      %v690 = vpop.f32.mrf.mxu0
      %v691 = vadd.f32 0.0, %v690
      %v692 = vpop.f32.mrf.mxu0
      %693 = vdwg.mxu0
      %694 = vmatpush.bf16.msra.mxu0 0
      %695 = vmatpush.bf16.msra.mxu0 0
      %696 = vmatpush.bf16.msra.mxu0 0
      %697 = vmatpush.bf16.msra.mxu0 0
      %698 = vmatpush.bf16.msra.mxu0 0
      %699 = vmatpush.bf16.msra.mxu0 0
      %700 = vmatpush.bf16.msra.mxu0 0
      %701 = vmatpush.bf16.msra.mxu0 %v679
      %702 = vmatmul.bf16.gmra.mxu0 %v673
      %v703 = vpop.f32.mrf.mxu0
      %v704 = vadd.f32 0.0, %v703
      %v705 = vpop.f32.mrf.mxu0
      %706 = vdwg.mxu0
      %v707 = vadd.f32 %v662, %v691
      %v708 = vadd.f32 %v663, %v704
      %v709 = vld [vmem:[%s165] sm:$0xff]
      %v710 = vld [vmem:[%s165 + $0x8] sm:$0xf]
      %s711 = scalar_lea.vmem %s0, 48
      %v712 = vld [vmem:[%s711] sm:$0xf]
      %v715 = vunpack.c.l.b16 %v709
      %v716 = vunpack.c.h.b16 %v709
      %v717 = vunpack.c.l.b16 %v710
      %v718 = vpack.c.b16 %v715, %v715
      %v719 = vpack.c.b16 %v716, %v716
      %v720 = vpack.c.b16 %v717, %v717
      %721 = vrot.lane.b32.xlu0 %v718, 86
      %v722 = vpop.permute.xlu0 %721
      %723 = vrot.lane.b32.xlu0 %v719, 86
      %v724 = vpop.permute.xlu0 %723
      %725 = vrot.lane.b32.xlu0 %v720, 86
      %v726 = vpop.permute.xlu0 %725
      %vm727 = vcmask 703488
      %v728 = vsel %vm727, %v722, %v724
      %v729 = vsel %vm727, %v724, %v726
      %v731 = vsel %vm187, %v712, 0
      %v734 = vsel %vm191, %v728, 0
      %v737 = vsel %vm191, %v729, 0
      %739 = vmatpush.bf16.msra.mxu0 0
      %740 = vmatpush.bf16.msra.mxu0 0
      %741 = vmatpush.bf16.msra.mxu0 0
      %742 = vmatpush.bf16.msra.mxu0 0
      %743 = vmatpush.bf16.msra.mxu0 0
      %744 = vmatpush.bf16.msra.mxu0 0
      %745 = vmatpush.bf16.msra.mxu0 0
      %746 = vmatpush.bf16.msra.mxu0 %v734
      %747 = vmatmul.bf16.gmra.mxu0 %v731
      %v748 = vpop.f32.mrf.mxu0
      %v749 = vadd.f32 0.0, %v748
      %v750 = vpop.f32.mrf.mxu0
      %751 = vdwg.mxu0
      %752 = vmatpush.bf16.msra.mxu0 0
      %753 = vmatpush.bf16.msra.mxu0 0
      %754 = vmatpush.bf16.msra.mxu0 0
      %755 = vmatpush.bf16.msra.mxu0 0
      %756 = vmatpush.bf16.msra.mxu0 0
      %757 = vmatpush.bf16.msra.mxu0 0
      %758 = vmatpush.bf16.msra.mxu0 0
      %759 = vmatpush.bf16.msra.mxu0 %v737
      %760 = vmatmul.bf16.gmra.mxu0 %v731
      %v761 = vpop.f32.mrf.mxu0
      %v762 = vadd.f32 0.0, %v761
      %v763 = vpop.f32.mrf.mxu0
      %764 = vdwg.mxu0
      %v765 = vadd.f32 %v707, %v749
      %v766 = vadd.f32 %v708, %v762
      %s767 = scalar_lea.vmem %s0, 52
      %v768 = vld [vmem:[%s767] sm:$0xf]
      %769 = vrot.lane.b32.xlu0 %v718, 85
      %v770 = vpop.permute.xlu0 %769
      %771 = vrot.lane.b32.xlu0 %v719, 85
      %v772 = vpop.permute.xlu0 %771
      %773 = vrot.lane.b32.xlu0 %v720, 85
      %v774 = vpop.permute.xlu0 %773
      %vm775 = vcmask 695296
      %v776 = vsel %vm775, %v770, %v772
      %v777 = vsel %vm775, %v772, %v774
      %v779 = vsel %vm187, %v768, 0
      %v782 = vsel %vm191, %v776, 0
      %v785 = vsel %vm191, %v777, 0
      %787 = vmatpush.bf16.msra.mxu0 0
      %788 = vmatpush.bf16.msra.mxu0 0
      %789 = vmatpush.bf16.msra.mxu0 0
      %790 = vmatpush.bf16.msra.mxu0 0
      %791 = vmatpush.bf16.msra.mxu0 0
      %792 = vmatpush.bf16.msra.mxu0 0
      %793 = vmatpush.bf16.msra.mxu0 0
      %794 = vmatpush.bf16.msra.mxu0 %v782
      %795 = vmatmul.bf16.gmra.mxu0 %v779
      %v796 = vpop.f32.mrf.mxu0
      %v797 = vadd.f32 0.0, %v796
      %v798 = vpop.f32.mrf.mxu0
      %799 = vdwg.mxu0
      %800 = vmatpush.bf16.msra.mxu0 0
      %801 = vmatpush.bf16.msra.mxu0 0
      %802 = vmatpush.bf16.msra.mxu0 0
      %803 = vmatpush.bf16.msra.mxu0 0
      %804 = vmatpush.bf16.msra.mxu0 0
      %805 = vmatpush.bf16.msra.mxu0 0
      %806 = vmatpush.bf16.msra.mxu0 0
      %807 = vmatpush.bf16.msra.mxu0 %v785
      %808 = vmatmul.bf16.gmra.mxu0 %v779
      %v809 = vpop.f32.mrf.mxu0
      %v810 = vadd.f32 0.0, %v809
      %v811 = vpop.f32.mrf.mxu0
      %812 = vdwg.mxu0
      %v813 = vadd.f32 %v765, %v797
      %v814 = vadd.f32 %v766, %v810
      %s815 = scalar_lea.vmem %s0, 56
      %v816 = vld [vmem:[%s815] sm:$0xf]
      %817 = vrot.lane.b32.xlu0 %v718, 84
      %v818 = vpop.permute.xlu0 %817
      %819 = vrot.lane.b32.xlu0 %v719, 84
      %v820 = vpop.permute.xlu0 %819
      %821 = vrot.lane.b32.xlu0 %v720, 84
      %v822 = vpop.permute.xlu0 %821
      %vm823 = vcmask 687104
      %v824 = vsel %vm823, %v818, %v820
      %v825 = vsel %vm823, %v820, %v822
      %v827 = vsel %vm187, %v816, 0
      %v830 = vsel %vm191, %v824, 0
      %v833 = vsel %vm191, %v825, 0
      %835 = vmatpush.bf16.msra.mxu0 0
      %836 = vmatpush.bf16.msra.mxu0 0
      %837 = vmatpush.bf16.msra.mxu0 0
      %838 = vmatpush.bf16.msra.mxu0 0
      %839 = vmatpush.bf16.msra.mxu0 0
      %840 = vmatpush.bf16.msra.mxu0 0
      %841 = vmatpush.bf16.msra.mxu0 0
      %842 = vmatpush.bf16.msra.mxu0 %v830
      %843 = vmatmul.bf16.gmra.mxu0 %v827
      %v844 = vpop.f32.mrf.mxu0
      %v845 = vadd.f32 0.0, %v844
      %v846 = vpop.f32.mrf.mxu0
      %847 = vdwg.mxu0
      %848 = vmatpush.bf16.msra.mxu0 0
      %849 = vmatpush.bf16.msra.mxu0 0
      %850 = vmatpush.bf16.msra.mxu0 0
      %851 = vmatpush.bf16.msra.mxu0 0
      %852 = vmatpush.bf16.msra.mxu0 0
      %853 = vmatpush.bf16.msra.mxu0 0
      %854 = vmatpush.bf16.msra.mxu0 0
      %855 = vmatpush.bf16.msra.mxu0 %v833
      %856 = vmatmul.bf16.gmra.mxu0 %v827
      %v857 = vpop.f32.mrf.mxu0
      %v858 = vadd.f32 0.0, %v857
      %v859 = vpop.f32.mrf.mxu0
      %860 = vdwg.mxu0
      %v861 = vadd.f32 %v813, %v845
      %v862 = vadd.f32 %v814, %v858
      %s863 = scalar_lea.vmem %s0, 60
      %v864 = vld [vmem:[%s863] sm:$0xf]
      %865 = vrot.lane.b32.xlu0 %v718, 80
      %v866 = vpop.permute.xlu0 %865
      %867 = vrot.lane.b32.xlu0 %v719, 80
      %v868 = vpop.permute.xlu0 %867
      %869 = vrot.lane.b32.xlu0 %v720, 80
      %v870 = vpop.permute.xlu0 %869
      %vm871 = vcmask 654336
      %v872 = vsel %vm871, %v866, %v868
      %v873 = vsel %vm871, %v868, %v870
      %v875 = vsel %vm187, %v864, 0
      %v878 = vsel %vm191, %v872, 0
      %v881 = vsel %vm191, %v873, 0
      %883 = vmatpush.bf16.msra.mxu0 0
      %884 = vmatpush.bf16.msra.mxu0 0
      %885 = vmatpush.bf16.msra.mxu0 0
      %886 = vmatpush.bf16.msra.mxu0 0
      %887 = vmatpush.bf16.msra.mxu0 0
      %888 = vmatpush.bf16.msra.mxu0 0
      %889 = vmatpush.bf16.msra.mxu0 0
      %890 = vmatpush.bf16.msra.mxu0 %v878
      %891 = vmatmul.bf16.gmra.mxu0 %v875
      %v892 = vpop.f32.mrf.mxu0
      %v893 = vadd.f32 0.0, %v892
      %v894 = vpop.f32.mrf.mxu0
      %895 = vdwg.mxu0
      %896 = vmatpush.bf16.msra.mxu0 0
      %897 = vmatpush.bf16.msra.mxu0 0
      %898 = vmatpush.bf16.msra.mxu0 0
      %899 = vmatpush.bf16.msra.mxu0 0
      %900 = vmatpush.bf16.msra.mxu0 0
      %901 = vmatpush.bf16.msra.mxu0 0
      %902 = vmatpush.bf16.msra.mxu0 0
      %903 = vmatpush.bf16.msra.mxu0 %v881
      %904 = vmatmul.bf16.gmra.mxu0 %v875
      %v905 = vpop.f32.mrf.mxu0
      %v906 = vadd.f32 0.0, %v905
      %v907 = vpop.f32.mrf.mxu0
      %908 = vdwg.mxu0
      %v909 = vadd.f32 %v861, %v893
      %v910 = vadd.f32 %v862, %v906
      %s911 = scalar_lea.vmem %s0, 64
      %v912 = vld [vmem:[%s911] sm:$0xf]
      %913 = vrot.lane.b32.xlu0 %v718, 79
      %v914 = vpop.permute.xlu0 %913
      %915 = vrot.lane.b32.xlu0 %v719, 79
      %v916 = vpop.permute.xlu0 %915
      %917 = vrot.lane.b32.xlu0 %v720, 79
      %v918 = vpop.permute.xlu0 %917
      %vm919 = vcmask 646144
      %v920 = vsel %vm919, %v914, %v916
      %v921 = vsel %vm919, %v916, %v918
      %v923 = vsel %vm187, %v912, 0
      %v926 = vsel %vm191, %v920, 0
      %v929 = vsel %vm191, %v921, 0
      %931 = vmatpush.bf16.msra.mxu0 0
      %932 = vmatpush.bf16.msra.mxu0 0
      %933 = vmatpush.bf16.msra.mxu0 0
      %934 = vmatpush.bf16.msra.mxu0 0
      %935 = vmatpush.bf16.msra.mxu0 0
      %936 = vmatpush.bf16.msra.mxu0 0
      %937 = vmatpush.bf16.msra.mxu0 0
      %938 = vmatpush.bf16.msra.mxu0 %v926
      %939 = vmatmul.bf16.gmra.mxu0 %v923
      %v940 = vpop.f32.mrf.mxu0
      %v941 = vadd.f32 0.0, %v940
      %v942 = vpop.f32.mrf.mxu0
      %943 = vdwg.mxu0
      %944 = vmatpush.bf16.msra.mxu0 0
      %945 = vmatpush.bf16.msra.mxu0 0
      %946 = vmatpush.bf16.msra.mxu0 0
      %947 = vmatpush.bf16.msra.mxu0 0
      %948 = vmatpush.bf16.msra.mxu0 0
      %949 = vmatpush.bf16.msra.mxu0 0
      %950 = vmatpush.bf16.msra.mxu0 0
      %951 = vmatpush.bf16.msra.mxu0 %v929
      %952 = vmatmul.bf16.gmra.mxu0 %v923
      %v953 = vpop.f32.mrf.mxu0
      %v954 = vadd.f32 0.0, %v953
      %v955 = vpop.f32.mrf.mxu0
      %956 = vdwg.mxu0
      %v957 = vadd.f32 %v909, %v941
      %v958 = vadd.f32 %v910, %v954
      %s959 = scalar_lea.vmem %s0, 68
      %v960 = vld [vmem:[%s959] sm:$0xf]
      %961 = vrot.lane.b32.xlu0 %v718, 78
      %v962 = vpop.permute.xlu0 %961
      %963 = vrot.lane.b32.xlu0 %v719, 78
      %v964 = vpop.permute.xlu0 %963
      %965 = vrot.lane.b32.xlu0 %v720, 78
      %v966 = vpop.permute.xlu0 %965
      %vm967 = vcmask 637952
      %v968 = vsel %vm967, %v962, %v964
      %v969 = vsel %vm967, %v964, %v966
      %v971 = vsel %vm187, %v960, 0
      %v974 = vsel %vm191, %v968, 0
      %v977 = vsel %vm191, %v969, 0
      %979 = vmatpush.bf16.msra.mxu0 0
      %980 = vmatpush.bf16.msra.mxu0 0
      %981 = vmatpush.bf16.msra.mxu0 0
      %982 = vmatpush.bf16.msra.mxu0 0
      %983 = vmatpush.bf16.msra.mxu0 0
      %984 = vmatpush.bf16.msra.mxu0 0
      %985 = vmatpush.bf16.msra.mxu0 0
      %986 = vmatpush.bf16.msra.mxu0 %v974
      %987 = vmatmul.bf16.gmra.mxu0 %v971
      %v988 = vpop.f32.mrf.mxu0
      %v989 = vadd.f32 0.0, %v988
      %v990 = vpop.f32.mrf.mxu0
      %991 = vdwg.mxu0
      %992 = vmatpush.bf16.msra.mxu0 0
      %993 = vmatpush.bf16.msra.mxu0 0
      %994 = vmatpush.bf16.msra.mxu0 0
      %995 = vmatpush.bf16.msra.mxu0 0
      %996 = vmatpush.bf16.msra.mxu0 0
      %997 = vmatpush.bf16.msra.mxu0 0
      %998 = vmatpush.bf16.msra.mxu0 0
      %999 = vmatpush.bf16.msra.mxu0 %v977
      %1000 = vmatmul.bf16.gmra.mxu0 %v971
      %v1001 = vpop.f32.mrf.mxu0
      %v1002 = vadd.f32 0.0, %v1001
      %v1003 = vpop.f32.mrf.mxu0
      %1004 = vdwg.mxu0
      %v1005 = vadd.f32 %v957, %v989
      %v1006 = vadd.f32 %v958, %v1002
      %s1007 = scalar_lea.vmem %s0, 72
      %v1008 = vld [vmem:[%s1007] sm:$0xf]
      %1009 = vrot.lane.b32.xlu0 %v718, 56
      %v1010 = vpop.permute.xlu0 %1009
      %1011 = vrot.lane.b32.xlu0 %v719, 56
      %v1012 = vpop.permute.xlu0 %1011
      %1013 = vrot.lane.b32.xlu0 %v720, 56
      %v1014 = vpop.permute.xlu0 %1013
      %vm1015 = vcmask 457728
      %v1016 = vsel %vm1015, %v1010, %v1012
      %v1017 = vsel %vm1015, %v1012, %v1014
      %v1019 = vsel %vm187, %v1008, 0
      %v1022 = vsel %vm191, %v1016, 0
      %v1025 = vsel %vm191, %v1017, 0
      %1027 = vmatpush.bf16.msra.mxu0 0
      %1028 = vmatpush.bf16.msra.mxu0 0
      %1029 = vmatpush.bf16.msra.mxu0 0
      %1030 = vmatpush.bf16.msra.mxu0 0
      %1031 = vmatpush.bf16.msra.mxu0 0
      %1032 = vmatpush.bf16.msra.mxu0 0
      %1033 = vmatpush.bf16.msra.mxu0 0
      %1034 = vmatpush.bf16.msra.mxu0 %v1022
      %1035 = vmatmul.bf16.gmra.mxu0 %v1019
      %v1036 = vpop.f32.mrf.mxu0
      %v1037 = vadd.f32 0.0, %v1036
      %v1038 = vpop.f32.mrf.mxu0
      %1039 = vdwg.mxu0
      %1040 = vmatpush.bf16.msra.mxu0 0
      %1041 = vmatpush.bf16.msra.mxu0 0
      %1042 = vmatpush.bf16.msra.mxu0 0
      %1043 = vmatpush.bf16.msra.mxu0 0
      %1044 = vmatpush.bf16.msra.mxu0 0
      %1045 = vmatpush.bf16.msra.mxu0 0
      %1046 = vmatpush.bf16.msra.mxu0 0
      %1047 = vmatpush.bf16.msra.mxu0 %v1025
      %1048 = vmatmul.bf16.gmra.mxu0 %v1019
      %v1049 = vpop.f32.mrf.mxu0
      %v1050 = vadd.f32 0.0, %v1049
      %v1051 = vpop.f32.mrf.mxu0
      %1052 = vdwg.mxu0
      %v1053 = vadd.f32 %v1005, %v1037
      %v1054 = vadd.f32 %v1006, %v1050
      %s1055 = scalar_lea.vmem %s0, 76
      %v1056 = vld [vmem:[%s1055] sm:$0xf]
      %1057 = vrot.lane.b32.xlu0 %v718, 55
      %v1058 = vpop.permute.xlu0 %1057
      %1059 = vrot.lane.b32.xlu0 %v719, 55
      %v1060 = vpop.permute.xlu0 %1059
      %1061 = vrot.lane.b32.xlu0 %v720, 55
      %v1062 = vpop.permute.xlu0 %1061
      %vm1063 = vcmask 449536
      %v1064 = vsel %vm1063, %v1058, %v1060
      %v1065 = vsel %vm1063, %v1060, %v1062
      %v1067 = vsel %vm187, %v1056, 0
      %v1070 = vsel %vm191, %v1064, 0
      %v1073 = vsel %vm191, %v1065, 0
      %1075 = vmatpush.bf16.msra.mxu0 0
      %1076 = vmatpush.bf16.msra.mxu0 0
      %1077 = vmatpush.bf16.msra.mxu0 0
      %1078 = vmatpush.bf16.msra.mxu0 0
      %1079 = vmatpush.bf16.msra.mxu0 0
      %1080 = vmatpush.bf16.msra.mxu0 0
      %1081 = vmatpush.bf16.msra.mxu0 0
      %1082 = vmatpush.bf16.msra.mxu0 %v1070
      %1083 = vmatmul.bf16.gmra.mxu0 %v1067
      %v1084 = vpop.f32.mrf.mxu0
      %v1085 = vadd.f32 0.0, %v1084
      %v1086 = vpop.f32.mrf.mxu0
      %1087 = vdwg.mxu0
      %1088 = vmatpush.bf16.msra.mxu0 0
      %1089 = vmatpush.bf16.msra.mxu0 0
      %1090 = vmatpush.bf16.msra.mxu0 0
      %1091 = vmatpush.bf16.msra.mxu0 0
      %1092 = vmatpush.bf16.msra.mxu0 0
      %1093 = vmatpush.bf16.msra.mxu0 0
      %1094 = vmatpush.bf16.msra.mxu0 0
      %1095 = vmatpush.bf16.msra.mxu0 %v1073
      %1096 = vmatmul.bf16.gmra.mxu0 %v1067
      %v1097 = vpop.f32.mrf.mxu0
      %v1098 = vadd.f32 0.0, %v1097
      %v1099 = vpop.f32.mrf.mxu0
      %1100 = vdwg.mxu0
      %v1101 = vadd.f32 %v1053, %v1085
      %v1102 = vadd.f32 %v1054, %v1098
      %s1103 = scalar_lea.vmem %s0, 80
      %v1104 = vld [vmem:[%s1103] sm:$0xf]
      %1105 = vrot.lane.b32.xlu0 %v718, 54
      %v1106 = vpop.permute.xlu0 %1105
      %1107 = vrot.lane.b32.xlu0 %v719, 54
      %v1108 = vpop.permute.xlu0 %1107
      %1109 = vrot.lane.b32.xlu0 %v720, 54
      %v1110 = vpop.permute.xlu0 %1109
      %vm1111 = vcmask 441344
      %v1112 = vsel %vm1111, %v1106, %v1108
      %v1113 = vsel %vm1111, %v1108, %v1110
      %v1115 = vsel %vm187, %v1104, 0
      %v1118 = vsel %vm191, %v1112, 0
      %v1121 = vsel %vm191, %v1113, 0
      %1123 = vmatpush.bf16.msra.mxu0 0
      %1124 = vmatpush.bf16.msra.mxu0 0
      %1125 = vmatpush.bf16.msra.mxu0 0
      %1126 = vmatpush.bf16.msra.mxu0 0
      %1127 = vmatpush.bf16.msra.mxu0 0
      %1128 = vmatpush.bf16.msra.mxu0 0
      %1129 = vmatpush.bf16.msra.mxu0 0
      %1130 = vmatpush.bf16.msra.mxu0 %v1118
      %1131 = vmatmul.bf16.gmra.mxu0 %v1115
      %v1132 = vpop.f32.mrf.mxu0
      %v1133 = vadd.f32 0.0, %v1132
      %v1134 = vpop.f32.mrf.mxu0
      %1135 = vdwg.mxu0
      %1136 = vmatpush.bf16.msra.mxu0 0
      %1137 = vmatpush.bf16.msra.mxu0 0
      %1138 = vmatpush.bf16.msra.mxu0 0
      %1139 = vmatpush.bf16.msra.mxu0 0
      %1140 = vmatpush.bf16.msra.mxu0 0
      %1141 = vmatpush.bf16.msra.mxu0 0
      %1142 = vmatpush.bf16.msra.mxu0 0
      %1143 = vmatpush.bf16.msra.mxu0 %v1121
      %1144 = vmatmul.bf16.gmra.mxu0 %v1115
      %v1145 = vpop.f32.mrf.mxu0
      %v1146 = vadd.f32 0.0, %v1145
      %v1147 = vpop.f32.mrf.mxu0
      %1148 = vdwg.mxu0
      %v1149 = vadd.f32 %v1101, %v1133
      %v1150 = vadd.f32 %v1102, %v1146
      %s1151 = scalar_lea.vmem %s0, 84
      %v1152 = vld [vmem:[%s1151] sm:$0xf]
      %1153 = vrot.lane.b32.xlu0 %v718, 50
      %v1154 = vpop.permute.xlu0 %1153
      %1155 = vrot.lane.b32.xlu0 %v719, 50
      %v1156 = vpop.permute.xlu0 %1155
      %1157 = vrot.lane.b32.xlu0 %v720, 50
      %v1158 = vpop.permute.xlu0 %1157
      %vm1159 = vcmask 408576
      %v1160 = vsel %vm1159, %v1154, %v1156
      %v1161 = vsel %vm1159, %v1156, %v1158
      %v1163 = vsel %vm187, %v1152, 0
      %v1166 = vsel %vm191, %v1160, 0
      %v1169 = vsel %vm191, %v1161, 0
      %1171 = vmatpush.bf16.msra.mxu0 0
      %1172 = vmatpush.bf16.msra.mxu0 0
      %1173 = vmatpush.bf16.msra.mxu0 0
      %1174 = vmatpush.bf16.msra.mxu0 0
      %1175 = vmatpush.bf16.msra.mxu0 0
      %1176 = vmatpush.bf16.msra.mxu0 0
      %1177 = vmatpush.bf16.msra.mxu0 0
      %1178 = vmatpush.bf16.msra.mxu0 %v1166
      %1179 = vmatmul.bf16.gmra.mxu0 %v1163
      %v1180 = vpop.f32.mrf.mxu0
      %v1181 = vadd.f32 0.0, %v1180
      %v1182 = vpop.f32.mrf.mxu0
      %1183 = vdwg.mxu0
      %1184 = vmatpush.bf16.msra.mxu0 0
      %1185 = vmatpush.bf16.msra.mxu0 0
      %1186 = vmatpush.bf16.msra.mxu0 0
      %1187 = vmatpush.bf16.msra.mxu0 0
      %1188 = vmatpush.bf16.msra.mxu0 0
      %1189 = vmatpush.bf16.msra.mxu0 0
      %1190 = vmatpush.bf16.msra.mxu0 0
      %1191 = vmatpush.bf16.msra.mxu0 %v1169
      %1192 = vmatmul.bf16.gmra.mxu0 %v1163
      %v1193 = vpop.f32.mrf.mxu0
      %v1194 = vadd.f32 0.0, %v1193
      %v1195 = vpop.f32.mrf.mxu0
      %1196 = vdwg.mxu0
      %v1197 = vadd.f32 %v1149, %v1181
      %v1198 = vadd.f32 %v1150, %v1194
      %s1199 = scalar_lea.vmem %s0, 88
      %v1200 = vld [vmem:[%s1199] sm:$0xf]
      %1201 = vrot.lane.b32.xlu0 %v718, 49
      %v1202 = vpop.permute.xlu0 %1201
      %1203 = vrot.lane.b32.xlu0 %v719, 49
      %v1204 = vpop.permute.xlu0 %1203
      %1205 = vrot.lane.b32.xlu0 %v720, 49
      %v1206 = vpop.permute.xlu0 %1205
      %vm1207 = vcmask 400384
      %v1208 = vsel %vm1207, %v1202, %v1204
      %v1209 = vsel %vm1207, %v1204, %v1206
      %v1211 = vsel %vm187, %v1200, 0
      %v1214 = vsel %vm191, %v1208, 0
      %v1217 = vsel %vm191, %v1209, 0
      %1219 = vmatpush.bf16.msra.mxu0 0
      %1220 = vmatpush.bf16.msra.mxu0 0
      %1221 = vmatpush.bf16.msra.mxu0 0
      %1222 = vmatpush.bf16.msra.mxu0 0
      %1223 = vmatpush.bf16.msra.mxu0 0
      %1224 = vmatpush.bf16.msra.mxu0 0
      %1225 = vmatpush.bf16.msra.mxu0 0
      %1226 = vmatpush.bf16.msra.mxu0 %v1214
      %1227 = vmatmul.bf16.gmra.mxu0 %v1211
      %v1228 = vpop.f32.mrf.mxu0
      %v1229 = vadd.f32 0.0, %v1228
      %v1230 = vpop.f32.mrf.mxu0
      %1231 = vdwg.mxu0
      %1232 = vmatpush.bf16.msra.mxu0 0
      %1233 = vmatpush.bf16.msra.mxu0 0
      %1234 = vmatpush.bf16.msra.mxu0 0
      %1235 = vmatpush.bf16.msra.mxu0 0
      %1236 = vmatpush.bf16.msra.mxu0 0
      %1237 = vmatpush.bf16.msra.mxu0 0
      %1238 = vmatpush.bf16.msra.mxu0 0
      %1239 = vmatpush.bf16.msra.mxu0 %v1217
      %1240 = vmatmul.bf16.gmra.mxu0 %v1211
      %v1241 = vpop.f32.mrf.mxu0
      %v1242 = vadd.f32 0.0, %v1241
      %v1243 = vpop.f32.mrf.mxu0
      %1244 = vdwg.mxu0
      %v1245 = vadd.f32 %v1197, %v1229
      %v1246 = vadd.f32 %v1198, %v1242
      %s1247 = scalar_lea.vmem %s0, 92
      %v1248 = vld [vmem:[%s1247] sm:$0xf]
      %1249 = vrot.lane.b32.xlu0 %v718, 48
      %v1250 = vpop.permute.xlu0 %1249
      %1251 = vrot.lane.b32.xlu0 %v719, 48
      %v1252 = vpop.permute.xlu0 %1251
      %1253 = vrot.lane.b32.xlu0 %v720, 48
      %v1254 = vpop.permute.xlu0 %1253
      %vm1255 = vcmask 392192
      %v1256 = vsel %vm1255, %v1250, %v1252
      %v1257 = vsel %vm1255, %v1252, %v1254
      %v1259 = vsel %vm187, %v1248, 0
      %v1262 = vsel %vm191, %v1256, 0
      %v1265 = vsel %vm191, %v1257, 0
      %1267 = vmatpush.bf16.msra.mxu0 0
      %1268 = vmatpush.bf16.msra.mxu0 0
      %1269 = vmatpush.bf16.msra.mxu0 0
      %1270 = vmatpush.bf16.msra.mxu0 0
      %1271 = vmatpush.bf16.msra.mxu0 0
      %1272 = vmatpush.bf16.msra.mxu0 0
      %1273 = vmatpush.bf16.msra.mxu0 0
      %1274 = vmatpush.bf16.msra.mxu0 %v1262
      %1275 = vmatmul.bf16.gmra.mxu0 %v1259
      %v1276 = vpop.f32.mrf.mxu0
      %v1277 = vadd.f32 0.0, %v1276
      %v1278 = vpop.f32.mrf.mxu0
      %1279 = vdwg.mxu0
      %1280 = vmatpush.bf16.msra.mxu0 0
      %1281 = vmatpush.bf16.msra.mxu0 0
      %1282 = vmatpush.bf16.msra.mxu0 0
      %1283 = vmatpush.bf16.msra.mxu0 0
      %1284 = vmatpush.bf16.msra.mxu0 0
      %1285 = vmatpush.bf16.msra.mxu0 0
      %1286 = vmatpush.bf16.msra.mxu0 0
      %1287 = vmatpush.bf16.msra.mxu0 %v1265
      %1288 = vmatmul.bf16.gmra.mxu0 %v1259
      %v1289 = vpop.f32.mrf.mxu0
      %v1290 = vadd.f32 0.0, %v1289
      %v1291 = vpop.f32.mrf.mxu0
      %1292 = vdwg.mxu0
      %v1293 = vadd.f32 %v1245, %v1277
      %v1294 = vadd.f32 %v1246, %v1290
      %s1295 = scalar_lea.vmem %s0, 96
      %v1296 = vld [vmem:[%s1295] sm:$0xf]
      %1297 = vrot.lane.b32.xlu0 %v718, 44
      %v1298 = vpop.permute.xlu0 %1297
      %1299 = vrot.lane.b32.xlu0 %v719, 44
      %v1300 = vpop.permute.xlu0 %1299
      %1301 = vrot.lane.b32.xlu0 %v720, 44
      %v1302 = vpop.permute.xlu0 %1301
      %vm1303 = vcmask 359424
      %v1304 = vsel %vm1303, %v1298, %v1300
      %v1305 = vsel %vm1303, %v1300, %v1302
      %v1307 = vsel %vm187, %v1296, 0
      %v1310 = vsel %vm191, %v1304, 0
      %v1313 = vsel %vm191, %v1305, 0
      %1315 = vmatpush.bf16.msra.mxu0 0
      %1316 = vmatpush.bf16.msra.mxu0 0
      %1317 = vmatpush.bf16.msra.mxu0 0
      %1318 = vmatpush.bf16.msra.mxu0 0
      %1319 = vmatpush.bf16.msra.mxu0 0
      %1320 = vmatpush.bf16.msra.mxu0 0
      %1321 = vmatpush.bf16.msra.mxu0 0
      %1322 = vmatpush.bf16.msra.mxu0 %v1310
      %1323 = vmatmul.bf16.gmra.mxu0 %v1307
      %v1324 = vpop.f32.mrf.mxu0
      %v1325 = vadd.f32 0.0, %v1324
      %v1326 = vpop.f32.mrf.mxu0
      %1327 = vdwg.mxu0
      %1328 = vmatpush.bf16.msra.mxu0 0
      %1329 = vmatpush.bf16.msra.mxu0 0
      %1330 = vmatpush.bf16.msra.mxu0 0
      %1331 = vmatpush.bf16.msra.mxu0 0
      %1332 = vmatpush.bf16.msra.mxu0 0
      %1333 = vmatpush.bf16.msra.mxu0 0
      %1334 = vmatpush.bf16.msra.mxu0 0
      %1335 = vmatpush.bf16.msra.mxu0 %v1313
      %1336 = vmatmul.bf16.gmra.mxu0 %v1307
      %v1337 = vpop.f32.mrf.mxu0
      %v1338 = vadd.f32 0.0, %v1337
      %v1339 = vpop.f32.mrf.mxu0
      %1340 = vdwg.mxu0
      %v1341 = vadd.f32 %v1293, %v1325
      %v1342 = vadd.f32 %v1294, %v1338
      %s1343 = scalar_lea.vmem %s0, 100
      %v1344 = vld [vmem:[%s1343] sm:$0xf]
      %1345 = vrot.lane.b32.xlu0 %v718, 43
      %v1346 = vpop.permute.xlu0 %1345
      %1347 = vrot.lane.b32.xlu0 %v719, 43
      %v1348 = vpop.permute.xlu0 %1347
      %1349 = vrot.lane.b32.xlu0 %v720, 43
      %v1350 = vpop.permute.xlu0 %1349
      %vm1351 = vcmask 351232
      %v1352 = vsel %vm1351, %v1346, %v1348
      %v1353 = vsel %vm1351, %v1348, %v1350
      %v1355 = vsel %vm187, %v1344, 0
      %v1358 = vsel %vm191, %v1352, 0
      %v1361 = vsel %vm191, %v1353, 0
      %1363 = vmatpush.bf16.msra.mxu0 0
      %1364 = vmatpush.bf16.msra.mxu0 0
      %1365 = vmatpush.bf16.msra.mxu0 0
      %1366 = vmatpush.bf16.msra.mxu0 0
      %1367 = vmatpush.bf16.msra.mxu0 0
      %1368 = vmatpush.bf16.msra.mxu0 0
      %1369 = vmatpush.bf16.msra.mxu0 0
      %1370 = vmatpush.bf16.msra.mxu0 %v1358
      %1371 = vmatmul.bf16.gmra.mxu0 %v1355
      %v1372 = vpop.f32.mrf.mxu0
      %v1373 = vadd.f32 0.0, %v1372
      %v1374 = vpop.f32.mrf.mxu0
      %1375 = vdwg.mxu0
      %1376 = vmatpush.bf16.msra.mxu0 0
      %1377 = vmatpush.bf16.msra.mxu0 0
      %1378 = vmatpush.bf16.msra.mxu0 0
      %1379 = vmatpush.bf16.msra.mxu0 0
      %1380 = vmatpush.bf16.msra.mxu0 0
      %1381 = vmatpush.bf16.msra.mxu0 0
      %1382 = vmatpush.bf16.msra.mxu0 0
      %1383 = vmatpush.bf16.msra.mxu0 %v1361
      %1384 = vmatmul.bf16.gmra.mxu0 %v1355
      %v1385 = vpop.f32.mrf.mxu0
      %v1386 = vadd.f32 0.0, %v1385
      %v1387 = vpop.f32.mrf.mxu0
      %1388 = vdwg.mxu0
      %v1389 = vadd.f32 %v1341, %v1373
      %v1390 = vadd.f32 %v1342, %v1386
      %s1391 = scalar_lea.vmem %s0, 104
      %v1392 = vld [vmem:[%s1391] sm:$0xf]
      %1393 = vrot.lane.b32.xlu0 %v718, 42
      %v1394 = vpop.permute.xlu0 %1393
      %1395 = vrot.lane.b32.xlu0 %v719, 42
      %v1396 = vpop.permute.xlu0 %1395
      %1397 = vrot.lane.b32.xlu0 %v720, 42
      %v1398 = vpop.permute.xlu0 %1397
      %vm1399 = vcmask 343040
      %v1400 = vsel %vm1399, %v1394, %v1396
      %v1401 = vsel %vm1399, %v1396, %v1398
      %v1403 = vsel %vm187, %v1392, 0
      %v1406 = vsel %vm191, %v1400, 0
      %v1409 = vsel %vm191, %v1401, 0
      %1411 = vmatpush.bf16.msra.mxu0 0
      %1412 = vmatpush.bf16.msra.mxu0 0
      %1413 = vmatpush.bf16.msra.mxu0 0
      %1414 = vmatpush.bf16.msra.mxu0 0
      %1415 = vmatpush.bf16.msra.mxu0 0
      %1416 = vmatpush.bf16.msra.mxu0 0
      %1417 = vmatpush.bf16.msra.mxu0 0
      %1418 = vmatpush.bf16.msra.mxu0 %v1406
      %1419 = vmatmul.bf16.gmra.mxu0 %v1403
      %v1420 = vpop.f32.mrf.mxu0
      %v1421 = vadd.f32 0.0, %v1420
      %v1422 = vpop.f32.mrf.mxu0
      %1423 = vdwg.mxu0
      %1424 = vmatpush.bf16.msra.mxu0 0
      %1425 = vmatpush.bf16.msra.mxu0 0
      %1426 = vmatpush.bf16.msra.mxu0 0
      %1427 = vmatpush.bf16.msra.mxu0 0
      %1428 = vmatpush.bf16.msra.mxu0 0
      %1429 = vmatpush.bf16.msra.mxu0 0
      %1430 = vmatpush.bf16.msra.mxu0 0
      %1431 = vmatpush.bf16.msra.mxu0 %v1409
      %1432 = vmatmul.bf16.gmra.mxu0 %v1403
      %v1433 = vpop.f32.mrf.mxu0
      %v1434 = vadd.f32 0.0, %v1433
      %v1435 = vpop.f32.mrf.mxu0
      %1436 = vdwg.mxu0
      %v1437 = vadd.f32 %v1389, %v1421
      %v1438 = vadd.f32 %v1390, %v1434
      %v1439 = vld [vmem:[%s1] sm:$0xff]
      %1441 = vset.pattern.permute.xlu0 0
      %1442 = vperm.xlu0 %1441, %v1439
      %v1443 = vpop.permute.xlu0 %1442
      %v1445 = vadd.f32 %v1437, %v1443
      %v1446 = vadd.f32 %v1438, %v1443
      %vm1447 = vcmp.gt.f32.partialorder %v1445, 0.0
      %vm1448 = vcmp.gt.f32.partialorder %v1446, 0.0
      %v1449 = vmul.f32 %v1445, 0.1
      %v1450 = vmul.f32 %v1446, 0.1
      %v1451 = vsel %vm1447, %v1445, %v1449
      %v1452 = vsel %vm1448, %v1446, %v1450
      %v1453 = vpack.c.bf16 %v1452, %v1451
      %vm1454 = vcmask 719876
      %vm1455 = vmor %vm1454, %vm191
      %1456 = vst.msk [vmem:[%s170] sm:$0xff] %vm1455, %v1453
      %p1457 = scmp.lt.s32.totalorder %s14, 1
      %s1458 = scalar_select %p1457, %s14, 1
      %s1459 = smul.addr %s1458, 2
      %s1460 = smul.addr %s1459, 4
      %s1461 = scalar_lea.vmem %s3, %s1460
      // Predicated region
      $region33: #{_lambda_.6} parent=31 // pred_check
        %p1462 = pneg %p100
      $region34: #{_lambda_.6} parent=31 // pred_check_branch
        %1464 = sbr.rel (%p1462) target = $region36
      $region35: #{_lambda_.6} parent=31 // pred_region
        _
      $region36: #{_lambda_.6} parent=31 // pred_fallthru
        _
    $region32: #{_lambda_.6} parent=5 // pred_fallthru
      _
    %p1465 = scmp.le.s32.totalorder 2, %s9
    // Predicated region
    $region37: #{_lambda_.6} parent=5 // pred_check
      %p1466 = pneg %p1465
    $region38: #{_lambda_.6} parent=5 // pred_check_branch
      %1468 = sbr.rel (%p1466) target = $region40
    $region39: #{_lambda_.6} parent=5 // pred_region
      %s1469 = ssub.s32 %s9, 2
      // Predicated region
      $region41: #{_lambda_.6} parent=39 // pred_check
        %p1470 = pneg %p106
      $region42: #{_lambda_.6} parent=39 // pred_check_branch
        %1472 = sbr.rel (%p1470) target = $region44
      $region43: #{_lambda_.6} parent=39 // pred_region
        %p1473 = scmp.lt.s32.totalorder %s15, 1
        %s1474 = scalar_select %p1473, %s15, 1
        %s1475 = smul.addr %s1474, 2
        %s1476 = smul.addr %s1475, 4
        %s1477 = scalar_lea.vmem %s3, %s1476
      $region44: #{_lambda_.6} parent=39 // pred_fallthru
        _
    $region40: #{_lambda_.6} parent=5 // pred_fallthru
      _
  $region6: #{_lambda_.6} parent=0 // loop_footer
    %s13 = sadd.s32 1, %s9
  $region7: #{_lambda_.6} parent=0 // loop_footer_branch
    %8 = sbr.rel target = $region3
  $region8: #{_lambda_.6} parent=0 // loop_exit
    _

// kernel: _lambda_.8
$region0: #{_lambda_.8}
  #allocation0 [shape = 'u32[]', space=smem, size = 0x4, offset = 0x4, fixed_abs, tag = 'smem constant byte address 0x4 - core index']
  #allocation1 [shape = 'u32[72,128]{1,0:T(1,128)}', space=vmem, size = 0x9000, scoped, tag = 'internal scratch']
  %s0 = inlined_call_operand.vmem [shape: bf16[8,11], index: 0, kind: input, shape index: {}]
  %s1 = inlined_call_operand.vmem [shape: f32[8,1], index: 1, kind: input, shape index: {}]
  %s2 = inlined_call_operand.vmem [shape: bf16[16,8], index: 2, kind: input, shape index: {}]
  %s3 = inlined_call_operand.vmem [shape: f32[16,1], index: 3, kind: input, shape index: {}]
  %s4 = inlined_call_operand.vmem [shape: bf16[2,11,128], index: 4, kind: input, shape index: {}]
  %s5 = inlined_call_operand.vmem [shape: bf16[2,16,16], index: 5, kind: output, shape index: {}]
  %s6 = sld [smem:[#allocation0]]
  $region53: #{_lambda_.8} parent=0
    _
  %s8 = ssub.s32 1, %s6
  %s9 = scalar_select 0, %s8, %s6
  loop: start=0, step=1, limit=4
  $region2: #{_lambda_.8} parent=0 // loop_pre_header
    _
  $region3: #{_lambda_.8} parent=0 // loop_header
    %s11 = sphi 0, %s15
    %p12 = scmp.ge.s32.totalorder %s11, 4
    %s19 = sphi 0, %s19
    %s21 = sphi 0, %s19
    %s22 = sphi 0, %s21
    %s36 = sphi 0, %s22
    %s40 = sphi 0, %s40
    %s42 = sphi 0, %s40
    %s43 = sphi 0, %s42
    %s57 = sphi 0, %s43
    %s61 = sphi 0, %s61
    %s63 = sphi 0, %s61
    %s64 = sphi 0, %s63
    %s78 = sphi 0, %s64
    %s82 = sphi 0, %s82
    %s84 = sphi 0, %s82
    %s85 = sphi 0, %s84
    %s99 = sphi 0, %s85
    %s105 = sphi 0, %s107
    %s108 = sphi 0, %s105
    %s109 = sphi 0, %s108
    %s125 = sphi 0, %s109
    %s131 = sphi 0, %s133
    %s134 = sphi 0, %s131
    %s135 = sphi 0, %s134
    %s151 = sphi 0, %s135
  $region4: #{_lambda_.8} parent=0 // loop_header_branch
    %14 = sbr.rel (%p12) target = $region8
  $region5: #{_lambda_.8} parent=0 // loop_body
    %s16 = ssub.s32 %s11, 1
    %s17 = ssub.s32 %s11, 2
    %s18 = sadd.s32 %s11, 1
    %s20 = sadd.s32 %s19, 1
    %p23 = scmp.eq.s32.totalorder %s11, 1
    %p24 = scmp.ne.s32.totalorder %s19, %s21
    %p25 = scmp.eq.s32.totalorder %s11, 0
    %p26 = por %p24, %p25
    %p27 = scmp.ne.s32.totalorder %s19, %s21
    %p28 = scmp.eq.s32.totalorder %s16, 1
    %p29 = por %p27, %p28
    %p30 = scmp.ne.s32.totalorder %s21, %s22
    %p31 = scmp.eq.s32.totalorder %s16, 0
    %p32 = por %p30, %p31
    %p33 = scmp.ne.s32.totalorder %s21, %s22
    %p34 = scmp.eq.s32.totalorder %s17, 1
    %p35 = por %p33, %p34
    %p37 = scmp.ne.s32.totalorder %s22, %s36
    %p38 = scmp.eq.s32.totalorder %s17, 0
    %p39 = por %p37, %p38
    %s41 = sadd.s32 %s40, 1
    %p44 = scmp.eq.s32.totalorder %s11, 1
    %p45 = scmp.ne.s32.totalorder %s40, %s42
    %p46 = scmp.eq.s32.totalorder %s11, 0
    %p47 = por %p45, %p46
    %p48 = scmp.ne.s32.totalorder %s40, %s42
    %p49 = scmp.eq.s32.totalorder %s16, 1
    %p50 = por %p48, %p49
    %p51 = scmp.ne.s32.totalorder %s42, %s43
    %p52 = scmp.eq.s32.totalorder %s16, 0
    %p53 = por %p51, %p52
    %p54 = scmp.ne.s32.totalorder %s42, %s43
    %p55 = scmp.eq.s32.totalorder %s17, 1
    %p56 = por %p54, %p55
    %p58 = scmp.ne.s32.totalorder %s43, %s57
    %p59 = scmp.eq.s32.totalorder %s17, 0
    %p60 = por %p58, %p59
    %s62 = sadd.s32 %s61, 1
    %p65 = scmp.eq.s32.totalorder %s11, 1
    %p66 = scmp.ne.s32.totalorder %s61, %s63
    %p67 = scmp.eq.s32.totalorder %s11, 0
    %p68 = por %p66, %p67
    %p69 = scmp.ne.s32.totalorder %s61, %s63
    %p70 = scmp.eq.s32.totalorder %s16, 1
    %p71 = por %p69, %p70
    %p72 = scmp.ne.s32.totalorder %s63, %s64
    %p73 = scmp.eq.s32.totalorder %s16, 0
    %p74 = por %p72, %p73
    %p75 = scmp.ne.s32.totalorder %s63, %s64
    %p76 = scmp.eq.s32.totalorder %s17, 1
    %p77 = por %p75, %p76
    %p79 = scmp.ne.s32.totalorder %s64, %s78
    %p80 = scmp.eq.s32.totalorder %s17, 0
    %p81 = por %p79, %p80
    %s83 = sadd.s32 %s82, 1
    %p86 = scmp.eq.s32.totalorder %s11, 1
    %p87 = scmp.ne.s32.totalorder %s82, %s84
    %p88 = scmp.eq.s32.totalorder %s11, 0
    %p89 = por %p87, %p88
    %p90 = scmp.ne.s32.totalorder %s82, %s84
    %p91 = scmp.eq.s32.totalorder %s16, 1
    %p92 = por %p90, %p91
    %p93 = scmp.ne.s32.totalorder %s84, %s85
    %p94 = scmp.eq.s32.totalorder %s16, 0
    %p95 = por %p93, %p94
    %p96 = scmp.ne.s32.totalorder %s84, %s85
    %p97 = scmp.eq.s32.totalorder %s17, 1
    %p98 = por %p96, %p97
    %p100 = scmp.ne.s32.totalorder %s85, %s99
    %p101 = scmp.eq.s32.totalorder %s17, 0
    %p102 = por %p100, %p101
    %s103 = ssub.s32 %s11, %s18
    %p104 = scmp.eq.s32.totalorder %s103, 0
    %s106 = sadd.s32 %s105, 1
    %s107 = scalar_select %p104, %s105, %s106
    %p110 = pneg %p104
    %p111 = scmp.eq.s32.totalorder %s11, 1
    %p112 = por %p110, %p111
    %p113 = scmp.ne.s32.totalorder %s105, %s108
    %p114 = scmp.eq.s32.totalorder %s11, 0
    %p115 = por %p113, %p114
    %p116 = scmp.ne.s32.totalorder %s105, %s108
    %p117 = scmp.eq.s32.totalorder %s16, 1
    %p118 = por %p116, %p117
    %p119 = scmp.ne.s32.totalorder %s108, %s109
    %p120 = scmp.eq.s32.totalorder %s16, 0
    %p121 = por %p119, %p120
    %p122 = scmp.ne.s32.totalorder %s108, %s109
    %p123 = scmp.eq.s32.totalorder %s17, 1
    %p124 = por %p122, %p123
    %p126 = scmp.ne.s32.totalorder %s109, %s125
    %p127 = scmp.eq.s32.totalorder %s17, 0
    %p128 = por %p126, %p127
    %s129 = ssub.s32 %s11, %s18
    %p130 = scmp.eq.s32.totalorder %s129, 0
    %s132 = sadd.s32 %s131, 1
    %s133 = scalar_select %p130, %s131, %s132
    %p136 = pneg %p130
    %p137 = scmp.eq.s32.totalorder %s11, 1
    %p138 = por %p136, %p137
    %p139 = scmp.ne.s32.totalorder %s131, %s134
    %p140 = scmp.eq.s32.totalorder %s11, 0
    %p141 = por %p139, %p140
    %p142 = scmp.ne.s32.totalorder %s131, %s134
    %p143 = scmp.eq.s32.totalorder %s16, 1
    %p144 = por %p142, %p143
    %p145 = scmp.ne.s32.totalorder %s134, %s135
    %p146 = scmp.eq.s32.totalorder %s16, 0
    %p147 = por %p145, %p146
    %p148 = scmp.ne.s32.totalorder %s134, %s135
    %p149 = scmp.eq.s32.totalorder %s17, 1
    %p150 = por %p148, %p149
    %p152 = scmp.ne.s32.totalorder %s135, %s151
    %p153 = scmp.eq.s32.totalorder %s17, 0
    %p154 = por %p152, %p153
    %p155 = scmp.le.s32.totalorder 1, %s11
    %p156 = scmp.lt.s32.totalorder %s11, 3
    %p157 = pnand %p155, %p156
    %p158 = pneg %p157
    // Predicated region
    $region9: #{_lambda_.8} parent=5 // pred_check
      _
    $region10: #{_lambda_.8} parent=5 // pred_check_branch
      %160 = sbr.rel (%p157) target = $region12
    $region11: #{_lambda_.8} parent=5 // pred_region
      %s161 = ssub.s32 %s11, 1
      // Predicated region
      $region13: #{_lambda_.8} parent=11 // pred_check
        %p162 = pneg %p32
      $region14: #{_lambda_.8} parent=11 // pred_check_branch
        %164 = sbr.rel (%p162) target = $region16
      $region15: #{_lambda_.8} parent=11 // pred_region
        _
      $region16: #{_lambda_.8} parent=11 // pred_fallthru
        _
      // Predicated region
      $region17: #{_lambda_.8} parent=11 // pred_check
        %p165 = pneg %p53
      $region18: #{_lambda_.8} parent=11 // pred_check_branch
        %167 = sbr.rel (%p165) target = $region20
      $region19: #{_lambda_.8} parent=11 // pred_region
        _
      $region20: #{_lambda_.8} parent=11 // pred_fallthru
        _
      // Predicated region
      $region21: #{_lambda_.8} parent=11 // pred_check
        %p168 = pneg %p74
      $region22: #{_lambda_.8} parent=11 // pred_check_branch
        %170 = sbr.rel (%p168) target = $region24
      $region23: #{_lambda_.8} parent=11 // pred_region
        _
      $region24: #{_lambda_.8} parent=11 // pred_fallthru
        _
      // Predicated region
      $region25: #{_lambda_.8} parent=11 // pred_check
        %p171 = pneg %p95
      $region26: #{_lambda_.8} parent=11 // pred_check_branch
        %173 = sbr.rel (%p171) target = $region28
      $region27: #{_lambda_.8} parent=11 // pred_region
        _
      $region28: #{_lambda_.8} parent=11 // pred_fallthru
        _
    $region12: #{_lambda_.8} parent=5 // pred_fallthru
      _
    %p174 = scmp.lt.s32.totalorder %s11, 2
    // Predicated region
    $region29: #{_lambda_.8} parent=5 // pred_check
      %p175 = pneg %p174
    $region30: #{_lambda_.8} parent=5 // pred_check_branch
      %177 = sbr.rel (%p175) target = $region32
    $region31: #{_lambda_.8} parent=5 // pred_region
      // Predicated region
      $region33: #{_lambda_.8} parent=31 // pred_check
        %p178 = pneg %p115
      $region34: #{_lambda_.8} parent=31 // pred_check_branch
        %180 = sbr.rel (%p178) target = $region36
      $region35: #{_lambda_.8} parent=31 // pred_region
        %p181 = scmp.lt.s32.totalorder %s11, 1
        %s182 = scalar_select %p181, %s11, 1
        %s183 = smul.addr %s182, 2
        %s184 = smul.addr %s183, 4
        %s185 = scalar_lea.vmem %s4, %s184
      $region36: #{_lambda_.8} parent=31 // pred_fallthru
        _
    $region32: #{_lambda_.8} parent=5 // pred_fallthru
      _
    %p186 = scmp.le.s32.totalorder 1, %s11
    %p187 = scmp.lt.s32.totalorder %s11, 3
    %p188 = pnand %p186, %p187
    %p189 = pneg %p188
    // Predicated region
    $region37: #{_lambda_.8} parent=5 // pred_check
      _
    $region38: #{_lambda_.8} parent=5 // pred_check_branch
      %191 = sbr.rel (%p188) target = $region40
    $region39: #{_lambda_.8} parent=5 // pred_region
      %s192 = ssub.s32 %s11, 1
      %p193 = pneg %p32
      %p194 = pneg %p29
      %p195 = pneg %p53
      %p196 = pneg %p50
      %p197 = pneg %p74
      %p198 = pneg %p71
      %p199 = pneg %p95
      %p200 = pneg %p92
      %p201 = scmp.lt.s32.totalorder %s16, 1
      %s202 = scalar_select %p201, %s16, 1
      %s203 = smul.addr %s202, 2
      %s204 = smul.addr %s203, 4
      %s205 = scalar_lea.vmem %s4, %s204
      %p206 = pneg %p121
      %p207 = pneg %p118
      %p208 = pneg %p147
      %p209 = pneg %p144
      %p210 = scmp.lt.s32.totalorder %s16, 1
      %s211 = scalar_select %p210, %s16, 1
      %s212 = smul.addr %s211, 2
      %s213 = smul.addr %s212, 4
      %s214 = scalar_lea.vmem %s5, %s213
      %p215 = scmp.lt.s32.totalorder %s16, 1
      %s216 = scalar_select %p215, %s16, 1
      %s217 = smul.addr %s216, 2
      %s218 = smul.addr %s217, 4
      %s219 = scalar_lea.vmem %s4, %s218
      %p220 = scmp.lt.s32.totalorder %s16, 1
      %s221 = scalar_select %p220, %s16, 1
      %s222 = smul.addr %s221, 2
      %s223 = smul.addr %s222, 4
      %s224 = scalar_lea.vmem %s5, %s223
      %v226 = vld [vmem:[%s219] sm:$0xf]
      %v227 = vld [vmem:[%s219 + $0x4] sm:$0x3]
      %v228 = vld [vmem:[%s0] sm:$0xf]
      %v229 = vld [vmem:[%s1] sm:$0xff]
      %231 = vset.pattern.permute.xlu0 0
      %232 = vperm.xlu0 %231, %v229
      %v233 = vpop.permute.xlu0 %232
      %v237 = vunpack.c.l.b16 %v226
      %v238 = vunpack.c.l.b16 %v227
      %v239 = vpack.c.b16 %v238, %v237
      %vm240 = vcmask 89088
      %v242 = vsel %vm240, %v228, 0
      %vm244 = vcmask 1044480
      %vm245 = vcmask 1045504
      %v246 = vsel %vm244, 4294967295, 65535
      %v247 = vsel %vm245, %v246, 0
      %v249 = vand.u32 %v239, %v247
      %251 = vmatpush.bf16.msra.mxu0 0
      %252 = vmatpush.bf16.msra.mxu0 0
      %253 = vmatpush.bf16.msra.mxu0 0
      %254 = vmatpush.bf16.msra.mxu0 0
      %255 = vmatpush.bf16.msra.mxu0 0
      %256 = vmatpush.bf16.msra.mxu0 0
      %257 = vmatpush.bf16.msra.mxu0 0
      %258 = vmatpush.bf16.msra.mxu0 %v249
      %259 = vmatmul.bf16.gmra.mxu0 %v242
      %v260 = vpop.f32.mrf.mxu0
      %v261 = vadd.f32 %v233, %v260
      %v262 = vpop.f32.mrf.mxu0
      %263 = vdwg.mxu0
      %v264 = vmax.f32 %v261, 0.0
      %v265 = vpack.c.bf16 %v264, %v264
      %v266 = vld [vmem:[%s2] sm:$0xf]
      %v267 = vld [vmem:[%s2 + $0x4] sm:$0xf]
      %v268 = vld [vmem:[%s3] sm:$0xff]
      %v269 = vld [vmem:[%s3 + $0x8] sm:$0xff]
      %271 = vset.pattern.permute.xlu0 0
      %272 = vperm.xlu0 %271, %v268
      %v273 = vpop.permute.xlu0 %272
      %276 = vset.pattern.permute.xlu0 0
      %277 = vperm.xlu0 %276, %v269
      %v278 = vpop.permute.xlu0 %277
      %v282 = vunpack.c.l.b16 %v266
      %v283 = vunpack.c.l.b16 %v267
      %v284 = vpack.c.b16 %v283, %v282
      %vm285 = vcmask 64512
      %v287 = vsel %vm285, %v284, 0
      %vm289 = vcmask 1043456
      %v291 = vsel %vm289, %v265, 0
      %293 = vmatpush.bf16.msra.mxu0 0
      %294 = vmatpush.bf16.msra.mxu0 0
      %295 = vmatpush.bf16.msra.mxu0 0
      %296 = vmatpush.bf16.msra.mxu0 0
      %297 = vmatpush.bf16.msra.mxu0 0
      %298 = vmatpush.bf16.msra.mxu0 0
      %299 = vmatpush.bf16.msra.mxu0 0
      %300 = vmatpush.bf16.msra.mxu0 %v291
      %301 = vmatmul.bf16.gmra.mxu0 %v287
      %v302 = vpop.f32.mrf.mxu0
      %v303 = vadd.f32 %v273, %v302
      %v304 = vpop.f32.mrf.mxu0
      %v305 = vadd.f32 %v278, %v304
      %306 = vdwg.mxu0
      %v307 = vmax.f32 %v303, 0.0
      %v308 = vmax.f32 %v305, 0.0
      %311 = vrot.lane.b32.xlu0 %v307, 112
      %v312 = vpop.permute.xlu0 %311
      %313 = vrot.lane.b32.xlu0 %v308, 112
      %v314 = vpop.permute.xlu0 %313
      %v317 = vmax.f32 %v307, %v312
      %v318 = vmax.f32 %v308, %v314
      %319 = vrot.lane.b32.xlu0 %v307, 96
      %v320 = vpop.permute.xlu0 %319
      %321 = vrot.lane.b32.xlu0 %v308, 96
      %v322 = vpop.permute.xlu0 %321
      %v325 = vmax.f32 %v317, %v320
      %v326 = vmax.f32 %v318, %v322
      %327 = vrot.lane.b32.xlu0 %v307, 80
      %v328 = vpop.permute.xlu0 %327
      %329 = vrot.lane.b32.xlu0 %v308, 80
      %v330 = vpop.permute.xlu0 %329
      %v333 = vmax.f32 %v325, %v328
      %v334 = vmax.f32 %v326, %v330
      %335 = vrot.lane.b32.xlu0 %v307, 64
      %v336 = vpop.permute.xlu0 %335
      %337 = vrot.lane.b32.xlu0 %v308, 64
      %v338 = vpop.permute.xlu0 %337
      %v341 = vmax.f32 %v333, %v336
      %v342 = vmax.f32 %v334, %v338
      %343 = vrot.lane.b32.xlu0 %v307, 48
      %v344 = vpop.permute.xlu0 %343
      %345 = vrot.lane.b32.xlu0 %v308, 48
      %v346 = vpop.permute.xlu0 %345
      %v349 = vmax.f32 %v341, %v344
      %v350 = vmax.f32 %v342, %v346
      %351 = vrot.lane.b32.xlu0 %v307, 32
      %v352 = vpop.permute.xlu0 %351
      %353 = vrot.lane.b32.xlu0 %v308, 32
      %v354 = vpop.permute.xlu0 %353
      %v357 = vmax.f32 %v349, %v352
      %v358 = vmax.f32 %v350, %v354
      %359 = vrot.lane.b32.xlu0 %v307, 16
      %v360 = vpop.permute.xlu0 %359
      %361 = vrot.lane.b32.xlu0 %v308, 16
      %v362 = vpop.permute.xlu0 %361
      %v365 = vmax.f32 %v357, %v360
      %v366 = vmax.f32 %v358, %v362
      %v367 = vpack.c.bf16 %v365, %v365
      %v368 = vpack.c.bf16 %v366, %v366
      %vm369 = vcmask 125952
      %370 = vst.msk [vmem:[%s224] sm:$0xf] %vm369, %v367
      %371 = vst.msk [vmem:[%s224 + $0x4] sm:$0xf] %vm369, %v368
      %p372 = scmp.lt.s32.totalorder %s16, 1
      %s373 = scalar_select %p372, %s16, 1
      %s374 = smul.addr %s373, 2
      %s375 = smul.addr %s374, 4
      %s376 = scalar_lea.vmem %s5, %s375
      // Predicated region
      $region41: #{_lambda_.8} parent=39 // pred_check
        %p377 = pneg %p144
      $region42: #{_lambda_.8} parent=39 // pred_check_branch
        %379 = sbr.rel (%p377) target = $region44
      $region43: #{_lambda_.8} parent=39 // pred_region
        _
      $region44: #{_lambda_.8} parent=39 // pred_fallthru
        _
    $region40: #{_lambda_.8} parent=5 // pred_fallthru
      _
    %p380 = scmp.le.s32.totalorder 2, %s11
    // Predicated region
    $region45: #{_lambda_.8} parent=5 // pred_check
      %p381 = pneg %p380
    $region46: #{_lambda_.8} parent=5 // pred_check_branch
      %383 = sbr.rel (%p381) target = $region48
    $region47: #{_lambda_.8} parent=5 // pred_region
      %s384 = ssub.s32 %s11, 2
      // Predicated region
      $region49: #{_lambda_.8} parent=47 // pred_check
        %p385 = pneg %p150
      $region50: #{_lambda_.8} parent=47 // pred_check_branch
        %387 = sbr.rel (%p385) target = $region52
      $region51: #{_lambda_.8} parent=47 // pred_region
        %p388 = scmp.lt.s32.totalorder %s17, 1
        %s389 = scalar_select %p388, %s17, 1
        %s390 = smul.addr %s389, 2
        %s391 = smul.addr %s390, 4
        %s392 = scalar_lea.vmem %s5, %s391
      $region52: #{_lambda_.8} parent=47 // pred_fallthru
        _
    $region48: #{_lambda_.8} parent=5 // pred_fallthru
      _
  $region6: #{_lambda_.8} parent=0 // loop_footer
    %s15 = sadd.s32 1, %s11
  $region7: #{_lambda_.8} parent=0 // loop_footer_branch
    %10 = sbr.rel target = $region3
  $region8: #{_lambda_.8} parent=0 // loop_exit
    _

// kernel: _lambda_.9
$region0: #{_lambda_.9}
  #allocation0 [shape = 'u32[]', space=smem, size = 0x4, offset = 0x4, fixed_abs, tag = 'smem constant byte address 0x4 - core index']
  #allocation1 [shape = 'u32[72,128]{1,0:T(1,128)}', space=vmem, size = 0x9000, scoped, tag = 'internal scratch']
  %s0 = inlined_call_operand.vmem [shape: bf16[16,19], index: 0, kind: input, shape index: {}]
  %s1 = inlined_call_operand.vmem [shape: f32[16,1], index: 1, kind: input, shape index: {}]
  %s2 = inlined_call_operand.vmem [shape: bf16[32,16], index: 2, kind: input, shape index: {}]
  %s3 = inlined_call_operand.vmem [shape: f32[32,1], index: 3, kind: input, shape index: {}]
  %s4 = inlined_call_operand.vmem [shape: bf16[2,19,32], index: 4, kind: input, shape index: {}]
  %s5 = inlined_call_operand.vmem [shape: bf16[2,32,4], index: 5, kind: output, shape index: {}]
  %s6 = sld [smem:[#allocation0]]
  $region53: #{_lambda_.9} parent=0
    _
  %s8 = ssub.s32 1, %s6
  %s9 = scalar_select 0, %s8, %s6
  loop: start=0, step=1, limit=4
  $region2: #{_lambda_.9} parent=0 // loop_pre_header
    _
  $region3: #{_lambda_.9} parent=0 // loop_header
    %s11 = sphi 0, %s15
    %p12 = scmp.ge.s32.totalorder %s11, 4
    %s19 = sphi 0, %s19
    %s21 = sphi 0, %s19
    %s22 = sphi 0, %s21
    %s36 = sphi 0, %s22
    %s40 = sphi 0, %s40
    %s42 = sphi 0, %s40
    %s43 = sphi 0, %s42
    %s57 = sphi 0, %s43
    %s61 = sphi 0, %s61
    %s63 = sphi 0, %s61
    %s64 = sphi 0, %s63
    %s78 = sphi 0, %s64
    %s82 = sphi 0, %s82
    %s84 = sphi 0, %s82
    %s85 = sphi 0, %s84
    %s99 = sphi 0, %s85
    %s105 = sphi 0, %s107
    %s108 = sphi 0, %s105
    %s109 = sphi 0, %s108
    %s125 = sphi 0, %s109
    %s131 = sphi 0, %s133
    %s134 = sphi 0, %s131
    %s135 = sphi 0, %s134
    %s151 = sphi 0, %s135
  $region4: #{_lambda_.9} parent=0 // loop_header_branch
    %14 = sbr.rel (%p12) target = $region8
  $region5: #{_lambda_.9} parent=0 // loop_body
    %s16 = ssub.s32 %s11, 1
    %s17 = ssub.s32 %s11, 2
    %s18 = sadd.s32 %s11, 1
    %s20 = sadd.s32 %s19, 1
    %p23 = scmp.eq.s32.totalorder %s11, 1
    %p24 = scmp.ne.s32.totalorder %s19, %s21
    %p25 = scmp.eq.s32.totalorder %s11, 0
    %p26 = por %p24, %p25
    %p27 = scmp.ne.s32.totalorder %s19, %s21
    %p28 = scmp.eq.s32.totalorder %s16, 1
    %p29 = por %p27, %p28
    %p30 = scmp.ne.s32.totalorder %s21, %s22
    %p31 = scmp.eq.s32.totalorder %s16, 0
    %p32 = por %p30, %p31
    %p33 = scmp.ne.s32.totalorder %s21, %s22
    %p34 = scmp.eq.s32.totalorder %s17, 1
    %p35 = por %p33, %p34
    %p37 = scmp.ne.s32.totalorder %s22, %s36
    %p38 = scmp.eq.s32.totalorder %s17, 0
    %p39 = por %p37, %p38
    %s41 = sadd.s32 %s40, 1
    %p44 = scmp.eq.s32.totalorder %s11, 1
    %p45 = scmp.ne.s32.totalorder %s40, %s42
    %p46 = scmp.eq.s32.totalorder %s11, 0
    %p47 = por %p45, %p46
    %p48 = scmp.ne.s32.totalorder %s40, %s42
    %p49 = scmp.eq.s32.totalorder %s16, 1
    %p50 = por %p48, %p49
    %p51 = scmp.ne.s32.totalorder %s42, %s43
    %p52 = scmp.eq.s32.totalorder %s16, 0
    %p53 = por %p51, %p52
    %p54 = scmp.ne.s32.totalorder %s42, %s43
    %p55 = scmp.eq.s32.totalorder %s17, 1
    %p56 = por %p54, %p55
    %p58 = scmp.ne.s32.totalorder %s43, %s57
    %p59 = scmp.eq.s32.totalorder %s17, 0
    %p60 = por %p58, %p59
    %s62 = sadd.s32 %s61, 1
    %p65 = scmp.eq.s32.totalorder %s11, 1
    %p66 = scmp.ne.s32.totalorder %s61, %s63
    %p67 = scmp.eq.s32.totalorder %s11, 0
    %p68 = por %p66, %p67
    %p69 = scmp.ne.s32.totalorder %s61, %s63
    %p70 = scmp.eq.s32.totalorder %s16, 1
    %p71 = por %p69, %p70
    %p72 = scmp.ne.s32.totalorder %s63, %s64
    %p73 = scmp.eq.s32.totalorder %s16, 0
    %p74 = por %p72, %p73
    %p75 = scmp.ne.s32.totalorder %s63, %s64
    %p76 = scmp.eq.s32.totalorder %s17, 1
    %p77 = por %p75, %p76
    %p79 = scmp.ne.s32.totalorder %s64, %s78
    %p80 = scmp.eq.s32.totalorder %s17, 0
    %p81 = por %p79, %p80
    %s83 = sadd.s32 %s82, 1
    %p86 = scmp.eq.s32.totalorder %s11, 1
    %p87 = scmp.ne.s32.totalorder %s82, %s84
    %p88 = scmp.eq.s32.totalorder %s11, 0
    %p89 = por %p87, %p88
    %p90 = scmp.ne.s32.totalorder %s82, %s84
    %p91 = scmp.eq.s32.totalorder %s16, 1
    %p92 = por %p90, %p91
    %p93 = scmp.ne.s32.totalorder %s84, %s85
    %p94 = scmp.eq.s32.totalorder %s16, 0
    %p95 = por %p93, %p94
    %p96 = scmp.ne.s32.totalorder %s84, %s85
    %p97 = scmp.eq.s32.totalorder %s17, 1
    %p98 = por %p96, %p97
    %p100 = scmp.ne.s32.totalorder %s85, %s99
    %p101 = scmp.eq.s32.totalorder %s17, 0
    %p102 = por %p100, %p101
    %s103 = ssub.s32 %s11, %s18
    %p104 = scmp.eq.s32.totalorder %s103, 0
    %s106 = sadd.s32 %s105, 1
    %s107 = scalar_select %p104, %s105, %s106
    %p110 = pneg %p104
    %p111 = scmp.eq.s32.totalorder %s11, 1
    %p112 = por %p110, %p111
    %p113 = scmp.ne.s32.totalorder %s105, %s108
    %p114 = scmp.eq.s32.totalorder %s11, 0
    %p115 = por %p113, %p114
    %p116 = scmp.ne.s32.totalorder %s105, %s108
    %p117 = scmp.eq.s32.totalorder %s16, 1
    %p118 = por %p116, %p117
    %p119 = scmp.ne.s32.totalorder %s108, %s109
    %p120 = scmp.eq.s32.totalorder %s16, 0
    %p121 = por %p119, %p120
    %p122 = scmp.ne.s32.totalorder %s108, %s109
    %p123 = scmp.eq.s32.totalorder %s17, 1
    %p124 = por %p122, %p123
    %p126 = scmp.ne.s32.totalorder %s109, %s125
    %p127 = scmp.eq.s32.totalorder %s17, 0
    %p128 = por %p126, %p127
    %s129 = ssub.s32 %s11, %s18
    %p130 = scmp.eq.s32.totalorder %s129, 0
    %s132 = sadd.s32 %s131, 1
    %s133 = scalar_select %p130, %s131, %s132
    %p136 = pneg %p130
    %p137 = scmp.eq.s32.totalorder %s11, 1
    %p138 = por %p136, %p137
    %p139 = scmp.ne.s32.totalorder %s131, %s134
    %p140 = scmp.eq.s32.totalorder %s11, 0
    %p141 = por %p139, %p140
    %p142 = scmp.ne.s32.totalorder %s131, %s134
    %p143 = scmp.eq.s32.totalorder %s16, 1
    %p144 = por %p142, %p143
    %p145 = scmp.ne.s32.totalorder %s134, %s135
    %p146 = scmp.eq.s32.totalorder %s16, 0
    %p147 = por %p145, %p146
    %p148 = scmp.ne.s32.totalorder %s134, %s135
    %p149 = scmp.eq.s32.totalorder %s17, 1
    %p150 = por %p148, %p149
    %p152 = scmp.ne.s32.totalorder %s135, %s151
    %p153 = scmp.eq.s32.totalorder %s17, 0
    %p154 = por %p152, %p153
    %p155 = scmp.le.s32.totalorder 1, %s11
    %p156 = scmp.lt.s32.totalorder %s11, 3
    %p157 = pnand %p155, %p156
    %p158 = pneg %p157
    // Predicated region
    $region9: #{_lambda_.9} parent=5 // pred_check
      _
    $region10: #{_lambda_.9} parent=5 // pred_check_branch
      %160 = sbr.rel (%p157) target = $region12
    $region11: #{_lambda_.9} parent=5 // pred_region
      %s161 = ssub.s32 %s11, 1
      // Predicated region
      $region13: #{_lambda_.9} parent=11 // pred_check
        %p162 = pneg %p32
      $region14: #{_lambda_.9} parent=11 // pred_check_branch
        %164 = sbr.rel (%p162) target = $region16
      $region15: #{_lambda_.9} parent=11 // pred_region
        _
      $region16: #{_lambda_.9} parent=11 // pred_fallthru
        _
      // Predicated region
      $region17: #{_lambda_.9} parent=11 // pred_check
        %p165 = pneg %p53
      $region18: #{_lambda_.9} parent=11 // pred_check_branch
        %167 = sbr.rel (%p165) target = $region20
      $region19: #{_lambda_.9} parent=11 // pred_region
        _
      $region20: #{_lambda_.9} parent=11 // pred_fallthru
        _
      // Predicated region
      $region21: #{_lambda_.9} parent=11 // pred_check
        %p168 = pneg %p74
      $region22: #{_lambda_.9} parent=11 // pred_check_branch
        %170 = sbr.rel (%p168) target = $region24
      $region23: #{_lambda_.9} parent=11 // pred_region
        _
      $region24: #{_lambda_.9} parent=11 // pred_fallthru
        _
      // Predicated region
      $region25: #{_lambda_.9} parent=11 // pred_check
        %p171 = pneg %p95
      $region26: #{_lambda_.9} parent=11 // pred_check_branch
        %173 = sbr.rel (%p171) target = $region28
      $region27: #{_lambda_.9} parent=11 // pred_region
        _
      $region28: #{_lambda_.9} parent=11 // pred_fallthru
        _
    $region12: #{_lambda_.9} parent=5 // pred_fallthru
      _
    %p174 = scmp.lt.s32.totalorder %s11, 2
    // Predicated region
    $region29: #{_lambda_.9} parent=5 // pred_check
      %p175 = pneg %p174
    $region30: #{_lambda_.9} parent=5 // pred_check_branch
      %177 = sbr.rel (%p175) target = $region32
    $region31: #{_lambda_.9} parent=5 // pred_region
      // Predicated region
      $region33: #{_lambda_.9} parent=31 // pred_check
        %p178 = pneg %p115
      $region34: #{_lambda_.9} parent=31 // pred_check_branch
        %180 = sbr.rel (%p178) target = $region36
      $region35: #{_lambda_.9} parent=31 // pred_region
        %p181 = scmp.lt.s32.totalorder %s11, 1
        %s182 = scalar_select %p181, %s11, 1
        %s183 = smul.addr %s182, 3
        %s184 = smul.addr %s183, 4
        %s185 = scalar_lea.vmem %s4, %s184
      $region36: #{_lambda_.9} parent=31 // pred_fallthru
        _
    $region32: #{_lambda_.9} parent=5 // pred_fallthru
      _
    %p186 = scmp.le.s32.totalorder 1, %s11
    %p187 = scmp.lt.s32.totalorder %s11, 3
    %p188 = pnand %p186, %p187
    %p189 = pneg %p188
    // Predicated region
    $region37: #{_lambda_.9} parent=5 // pred_check
      _
    $region38: #{_lambda_.9} parent=5 // pred_check_branch
      %191 = sbr.rel (%p188) target = $region40
    $region39: #{_lambda_.9} parent=5 // pred_region
      %s192 = ssub.s32 %s11, 1
      %p193 = pneg %p32
      %p194 = pneg %p29
      %p195 = pneg %p53
      %p196 = pneg %p50
      %p197 = pneg %p74
      %p198 = pneg %p71
      %p199 = pneg %p95
      %p200 = pneg %p92
      %p201 = scmp.lt.s32.totalorder %s16, 1
      %s202 = scalar_select %p201, %s16, 1
      %s203 = smul.addr %s202, 3
      %s204 = smul.addr %s203, 4
      %s205 = scalar_lea.vmem %s4, %s204
      %p206 = pneg %p121
      %p207 = pneg %p118
      %p208 = pneg %p147
      %p209 = pneg %p144
      %p210 = scmp.lt.s32.totalorder %s16, 1
      %s211 = scalar_select %p210, %s16, 1
      %s212 = smul.addr %s211, 4
      %s213 = smul.addr %s212, 4
      %s214 = scalar_lea.vmem %s5, %s213
      %p215 = scmp.lt.s32.totalorder %s16, 1
      %s216 = scalar_select %p215, %s16, 1
      %s217 = smul.addr %s216, 3
      %s218 = smul.addr %s217, 4
      %s219 = scalar_lea.vmem %s4, %s218
      %p220 = scmp.lt.s32.totalorder %s16, 1
      %s221 = scalar_select %p220, %s16, 1
      %s222 = smul.addr %s221, 4
      %s223 = smul.addr %s222, 4
      %s224 = scalar_lea.vmem %s5, %s223
      %v226 = vld [vmem:[%s219] sm:$0xf]
      %v227 = vld [vmem:[%s219 + $0x4] sm:$0xf]
      %v228 = vld [vmem:[%s219 + $0x8] sm:$0x3]
      %v229 = vld [vmem:[%s0] sm:$0xf]
      %v230 = vld [vmem:[%s0 + $0x4] sm:$0xf]
      %v231 = vld [vmem:[%s1] sm:$0xff]
      %v232 = vld [vmem:[%s1 + $0x8] sm:$0xff]
      %234 = vset.pattern.permute.xlu0 0
      %235 = vperm.xlu0 %234, %v231
      %v236 = vpop.permute.xlu0 %235
      %239 = vset.pattern.permute.xlu0 0
      %240 = vperm.xlu0 %239, %v232
      %v241 = vpop.permute.xlu0 %240
      %v245 = vunpack.c.l.b16 %v229
      %v246 = vunpack.c.l.b16 %v230
      %v247 = vpack.c.b16 %v246, %v245
      %v251 = vunpack.c.l.b16 %v226
      %v252 = vunpack.c.l.b16 %v227
      %v253 = vunpack.c.l.b16 %v228
      %v254 = vpack.c.b16 %v252, %v251
      %v255 = vpack.c.b16 %v253, %v253
      %vm257 = vcmask 154624
      %v259 = vsel %vm257, %v247, 0
      %vm261 = vcmask 1040384
      %vm262 = vcmask 1041408
      %v263 = vsel %vm261, 4294967295, 65535
      %v264 = vsel %vm262, %v263, 0
      %v266 = vand.u32 %v255, %v264
      %268 = vmatpush.bf16.msra.mxu0 0
      %269 = vmatpush.bf16.msra.mxu0 0
      %270 = vmatpush.bf16.msra.mxu0 0
      %271 = vmatpush.bf16.msra.mxu0 0
      %272 = vmatpush.bf16.msra.mxu0 0
      %273 = vmatpush.bf16.msra.mxu0 0
      %274 = vmatpush.bf16.msra.mxu0 %v266
      %275 = vmatpush.bf16.msra.mxu0 %v254
      %276 = vmatmul.bf16.gmra.mxu0 %v259
      %v277 = vpop.f32.mrf.mxu0
      %v278 = vadd.f32 %v236, %v277
      %v279 = vpop.f32.mrf.mxu0
      %v280 = vadd.f32 %v241, %v279
      %281 = vdwg.mxu0
      %v282 = vmax.f32 %v278, 0.0
      %v283 = vmax.f32 %v280, 0.0
      %v284 = vpack.c.bf16 %v283, %v282
      %v285 = vld [vmem:[%s2] sm:$0xf]
      %v286 = vld [vmem:[%s2 + $0x4] sm:$0xf]
      %v287 = vld [vmem:[%s2 + $0x8] sm:$0xf]
      %v288 = vld [vmem:[%s2 + $0xc] sm:$0xf]
      %v289 = vld [vmem:[%s3] sm:$0xff]
      %v290 = vld [vmem:[%s3 + $0x8] sm:$0xff]
      %v291 = vld [vmem:[%s3 + $0x10] sm:$0xff]
      %v292 = vld [vmem:[%s3 + $0x18] sm:$0xff]
      %294 = vset.pattern.permute.xlu0 0
      %295 = vperm.xlu0 %294, %v289
      %v296 = vpop.permute.xlu0 %295
      %299 = vset.pattern.permute.xlu0 0
      %300 = vperm.xlu0 %299, %v290
      %v301 = vpop.permute.xlu0 %300
      %304 = vset.pattern.permute.xlu0 0
      %305 = vperm.xlu0 %304, %v291
      %v306 = vpop.permute.xlu0 %305
      %309 = vset.pattern.permute.xlu0 0
      %310 = vperm.xlu0 %309, %v292
      %v311 = vpop.permute.xlu0 %310
      %v317 = vunpack.c.l.b16 %v285
      %v318 = vunpack.c.l.b16 %v286
      %v319 = vunpack.c.l.b16 %v287
      %v320 = vunpack.c.l.b16 %v288
      %v321 = vpack.c.b16 %v318, %v317
      %v322 = vpack.c.b16 %v320, %v319
      %vm323 = vcmask 130048
      %v325 = vsel %vm323, %v321, 0
      %v328 = vsel %vm323, %v322, 0
      %330 = vmatpush.bf16.msra.mxu0 0
      %331 = vmatpush.bf16.msra.mxu0 0
      %332 = vmatpush.bf16.msra.mxu0 0
      %333 = vmatpush.bf16.msra.mxu0 0
      %334 = vmatpush.bf16.msra.mxu0 0
      %335 = vmatpush.bf16.msra.mxu0 0
      %336 = vmatpush.bf16.msra.mxu0 0
      %337 = vmatpush.bf16.msra.mxu0 %v284
      %338 = vmatmul.bf16.gmra.mxu0 %v325
      %v339 = vpop.f32.mrf.mxu0
      %v340 = vadd.f32 %v296, %v339
      %v341 = vpop.f32.mrf.mxu0
      %v342 = vadd.f32 %v301, %v341
      %343 = vmatmul.bf16.gmra.mxu0 %v328
      %v344 = vpop.f32.mrf.mxu0
      %v345 = vadd.f32 %v306, %v344
      %v346 = vpop.f32.mrf.mxu0
      %v347 = vadd.f32 %v311, %v346
      %348 = vdwg.mxu0
      %v349 = vmax.f32 %v340, 0.0
      %v350 = vmax.f32 %v342, 0.0
      %v351 = vmax.f32 %v345, 0.0
      %v352 = vmax.f32 %v347, 0.0
      %357 = vrot.lane.b32.xlu0 %v349, 124
      %v358 = vpop.permute.xlu0 %357
      %359 = vrot.lane.b32.xlu0 %v350, 124
      %v360 = vpop.permute.xlu0 %359
      %361 = vrot.lane.b32.xlu0 %v351, 124
      %v362 = vpop.permute.xlu0 %361
      %363 = vrot.lane.b32.xlu0 %v352, 124
      %v364 = vpop.permute.xlu0 %363
      %v369 = vmax.f32 %v349, %v358
      %v370 = vmax.f32 %v350, %v360
      %v371 = vmax.f32 %v351, %v362
      %v372 = vmax.f32 %v352, %v364
      %373 = vrot.lane.b32.xlu0 %v349, 120
      %v374 = vpop.permute.xlu0 %373
      %375 = vrot.lane.b32.xlu0 %v350, 120
      %v376 = vpop.permute.xlu0 %375
      %377 = vrot.lane.b32.xlu0 %v351, 120
      %v378 = vpop.permute.xlu0 %377
      %379 = vrot.lane.b32.xlu0 %v352, 120
      %v380 = vpop.permute.xlu0 %379
      %v385 = vmax.f32 %v369, %v374
      %v386 = vmax.f32 %v370, %v376
      %v387 = vmax.f32 %v371, %v378
      %v388 = vmax.f32 %v372, %v380
      %389 = vrot.lane.b32.xlu0 %v349, 116
      %v390 = vpop.permute.xlu0 %389
      %391 = vrot.lane.b32.xlu0 %v350, 116
      %v392 = vpop.permute.xlu0 %391
      %393 = vrot.lane.b32.xlu0 %v351, 116
      %v394 = vpop.permute.xlu0 %393
      %395 = vrot.lane.b32.xlu0 %v352, 116
      %v396 = vpop.permute.xlu0 %395
      %v401 = vmax.f32 %v385, %v390
      %v402 = vmax.f32 %v386, %v392
      %v403 = vmax.f32 %v387, %v394
      %v404 = vmax.f32 %v388, %v396
      %405 = vrot.lane.b32.xlu0 %v349, 112
      %v406 = vpop.permute.xlu0 %405
      %407 = vrot.lane.b32.xlu0 %v350, 112
      %v408 = vpop.permute.xlu0 %407
      %409 = vrot.lane.b32.xlu0 %v351, 112
      %v410 = vpop.permute.xlu0 %409
      %411 = vrot.lane.b32.xlu0 %v352, 112
      %v412 = vpop.permute.xlu0 %411
      %v417 = vmax.f32 %v401, %v406
      %v418 = vmax.f32 %v402, %v408
      %v419 = vmax.f32 %v403, %v410
      %v420 = vmax.f32 %v404, %v412
      %421 = vrot.lane.b32.xlu0 %v349, 108
      %v422 = vpop.permute.xlu0 %421
      %423 = vrot.lane.b32.xlu0 %v350, 108
      %v424 = vpop.permute.xlu0 %423
      %425 = vrot.lane.b32.xlu0 %v351, 108
      %v426 = vpop.permute.xlu0 %425
      %427 = vrot.lane.b32.xlu0 %v352, 108
      %v428 = vpop.permute.xlu0 %427
      %v433 = vmax.f32 %v417, %v422
      %v434 = vmax.f32 %v418, %v424
      %v435 = vmax.f32 %v419, %v426
      %v436 = vmax.f32 %v420, %v428
      %437 = vrot.lane.b32.xlu0 %v349, 104
      %v438 = vpop.permute.xlu0 %437
      %439 = vrot.lane.b32.xlu0 %v350, 104
      %v440 = vpop.permute.xlu0 %439
      %441 = vrot.lane.b32.xlu0 %v351, 104
      %v442 = vpop.permute.xlu0 %441
      %443 = vrot.lane.b32.xlu0 %v352, 104
      %v444 = vpop.permute.xlu0 %443
      %v449 = vmax.f32 %v433, %v438
      %v450 = vmax.f32 %v434, %v440
      %v451 = vmax.f32 %v435, %v442
      %v452 = vmax.f32 %v436, %v444
      %453 = vrot.lane.b32.xlu0 %v349, 100
      %v454 = vpop.permute.xlu0 %453
      %455 = vrot.lane.b32.xlu0 %v350, 100
      %v456 = vpop.permute.xlu0 %455
      %457 = vrot.lane.b32.xlu0 %v351, 100
      %v458 = vpop.permute.xlu0 %457
      %459 = vrot.lane.b32.xlu0 %v352, 100
      %v460 = vpop.permute.xlu0 %459
      %v465 = vmax.f32 %v449, %v454
      %v466 = vmax.f32 %v450, %v456
      %v467 = vmax.f32 %v451, %v458
      %v468 = vmax.f32 %v452, %v460
      %v469 = vpack.c.bf16 %v465, %v465
      %v470 = vpack.c.bf16 %v466, %v466
      %v471 = vpack.c.bf16 %v467, %v467
      %v472 = vpack.c.bf16 %v468, %v468
      %vm473 = vcmask 27648
      %474 = vst.msk [vmem:[%s224] sm:$0xf] %vm473, %v469
      %475 = vst.msk [vmem:[%s224 + $0x4] sm:$0xf] %vm473, %v470
      %476 = vst.msk [vmem:[%s224 + $0x8] sm:$0xf] %vm473, %v471
      %477 = vst.msk [vmem:[%s224 + $0xc] sm:$0xf] %vm473, %v472
      %p478 = scmp.lt.s32.totalorder %s16, 1
      %s479 = scalar_select %p478, %s16, 1
      %s480 = smul.addr %s479, 4
      %s481 = smul.addr %s480, 4
      %s482 = scalar_lea.vmem %s5, %s481
      // Predicated region
      $region41: #{_lambda_.9} parent=39 // pred_check
        %p483 = pneg %p144
      $region42: #{_lambda_.9} parent=39 // pred_check_branch
        %485 = sbr.rel (%p483) target = $region44
      $region43: #{_lambda_.9} parent=39 // pred_region
        _
      $region44: #{_lambda_.9} parent=39 // pred_fallthru
        _
    $region40: #{_lambda_.9} parent=5 // pred_fallthru
      _
    %p486 = scmp.le.s32.totalorder 2, %s11
    // Predicated region
    $region45: #{_lambda_.9} parent=5 // pred_check
      %p487 = pneg %p486
    $region46: #{_lambda_.9} parent=5 // pred_check_branch
      %489 = sbr.rel (%p487) target = $region48
    $region47: #{_lambda_.9} parent=5 // pred_region
      %s490 = ssub.s32 %s11, 2
      // Predicated region
      $region49: #{_lambda_.9} parent=47 // pred_check
        %p491 = pneg %p150
      $region50: #{_lambda_.9} parent=47 // pred_check_branch
        %493 = sbr.rel (%p491) target = $region52
      $region51: #{_lambda_.9} parent=47 // pred_region
        %p494 = scmp.lt.s32.totalorder %s17, 1
        %s495 = scalar_select %p494, %s17, 1
        %s496 = smul.addr %s495, 4
        %s497 = smul.addr %s496, 4
        %s498 = scalar_lea.vmem %s5, %s497
      $region52: #{_lambda_.9} parent=47 // pred_fallthru
        _
    $region48: #{_lambda_.9} parent=5 // pred_fallthru
      _
  $region6: #{_lambda_.9} parent=0 // loop_footer
    %s15 = sadd.s32 1, %s11
  $region7: #{_lambda_.9} parent=0 // loop_footer_branch
    %10 = sbr.rel target = $region3
  $region8: #{_lambda_.9} parent=0 // loop_exit
    _

</llo_original>
